<compile_context>
chip_gen: v7x
topology: tpu7x:2x2x1
jax: 0.10.0
libtpu: 0.0.40
codegen_flags: <defaults>
</compile_context>

<pallas_src>
import functools
import math

import jax
import jax.numpy as jnp
from jax.experimental import pallas as pl
from jax.experimental.pallas import tpu as pltpu

LRELU_SLOPE = 0.1
KSIZE = 5
STRIDE = 3
PAD = 2                           # get_padding(5, 1)
CH = (1, 16, 32, 64, 128)

_TARGET_ROWS = 8192               # desired layer-1 slot rows per grid step
_VMEM_BLOCK_BUDGET = 20 * (1 << 20)   # budget for blocks+scratch (128-lane padding counted)
_VMEM_LIMIT_CAP = 56 * (1 << 20)      # never ask the compiler for more scoped VMEM than this
_TAIL = 8                         # spare scratch rows so strided tap reads stay in bounds
# Slot offsets with D_l = 3 * D_{l+1} + PAD  =>  tap k of output-slot row r reads row 3*r + k.
_D1, _D2, _D3, _D4 = 26, 8, 2, 0


def _conv_out_len(h):
    # torch Conv2d H_out for kernel 5, stride 3, pad 2
    return (h + 2 * PAD - KSIZE) // STRIDE + 1


def _make_kernel(tb, slots, hs):
    """Fused 4-layer conv+LeakyReLU kernel for a block of `tb` sequences."""
    s1, s2, s3, s4 = slots
    h1, h2, h3 = hs

    def lrelu(a):
        return jnp.where(a > 0, a, LRELU_SLOPE * a)

    def mask_rows(acc, s, d, h):
        # Zero every row whose index-within-slot falls outside [d, d+h): those rows are
        # the zero padding the next layer's taps rely on.  Row-in-slot is computed with
        # a float mod (iota, 1 mul, floor, mul, sub) -- tb-independent and exact here:
        # rows < 2^24 and the accumulated error is far below 1/s for our block sizes.
        rows = jax.lax.broadcasted_iota(jnp.int32, acc.shape, 0).astype(jnp.float32)
        if tb > 1:
            rows = rows - float(s) * jnp.floor(rows * (1.0 / float(s)))
        valid = (rows >= float(d)) & (rows < float(d + h))
        return jnp.where(valid, acc, 0.0)

    def conv_block(src_ref, w_ref, b_ref, rout, cout):
        # Conv(k=5, stride=3, pad=2) over the slot layout: tap k of output-slot row r
        # is src row 3*r + k  ->  5 strided row reads + 5 MXU matmuls, bias-initialized
        # f32 accumulator, LeakyReLU epilogue in f32.
        acc = jnp.broadcast_to(b_ref[...], (rout, cout)).astype(jnp.float32)
        for k in range(KSIZE):
            xk = src_ref[pl.ds(k, rout, stride=STRIDE), :]
            acc = acc + jnp.dot(xk, w_ref[k], preferred_element_type=jnp.float32)
        return lrelu(acc)

    def kernel(x1_ref, w1_ref, b1_ref, w2_ref, b2_ref, w3_ref, b3_ref,
               w4_ref, b4_ref, o_ref, a1, a2, a3):
        # Keep the (never otherwise written) tail rows zero.  Done every step (cheap)
        # so the kernel stays step-independent and safe under megacore sharding.
        a1[pl.ds(tb * s1, _TAIL), :] = jnp.zeros((_TAIL, CH[1]), a1.dtype)
        a2[pl.ds(tb * s2, _TAIL), :] = jnp.zeros((_TAIL, CH[2]), a2.dtype)
        a3[pl.ds(tb * s3, _TAIL), :] = jnp.zeros((_TAIL, CH[3]), a3.dtype)

        # ---- layer 1: host-im2col'd input, single (R1, 5) @ (5, 16) matmul ----
        acc = jnp.dot(x1_ref[...], w1_ref[...], preferred_element_type=jnp.float32)
        acc = lrelu(acc + b1_ref[...].astype(jnp.float32))
        a1[pl.ds(0, tb * s1), :] = mask_rows(acc, s1, _D1, h1).astype(a1.dtype)

        # ---- layers 2..4: intermediates never leave VMEM ----
        a2[pl.ds(0, tb * s2), :] = mask_rows(
            conv_block(a1, w2_ref, b2_ref, tb * s2, CH[2]), s2, _D2, h2).astype(a2.dtype)
        a3[pl.ds(0, tb * s3), :] = mask_rows(
            conv_block(a2, w3_ref, b3_ref, tb * s3, CH[3]), s3, _D3, h3).astype(a3.dtype)
        # final layer: 128 lanes, written straight to HBM (lane-dense out_spec)
        o_ref[...] = conv_block(a3, w4_ref, b4_ref, tb * s4, CH[4]).astype(o_ref.dtype)

    return kernel


def _pick_tb(n_seq, s1, s2, s3, s4, in_isz, out_isz):
    """Sequences per grid step: big blocks, bounded by a lane-padding-aware VMEM budget,
    >= 2 blocks kept for v7x's two TensorCores, output rows 8-aligned when possible."""
    # per-sequence VMEM bytes with 128-lane padding; x1 + out are double-buffered,
    # a1/a2/a3 scratch is f32 and single-buffered.
    per_seq = 128 * (2 * s1 * in_isz + (s1 + s2 + s3) * 4 + 2 * s4 * out_isz)
    tb = max(1, min(n_seq,
                    _VMEM_BLOCK_BUDGET // per_seq,
                    max(1, _TARGET_ROWS // s1)))
    if n_seq >= 2:                                   # keep >= 2 blocks (megacore on v7x)
        tb = min(tb, -(-n_seq // 2))
    align = 8 // math.gcd(s4, 8)                     # make tb*s4 a multiple of 8 if we can
    if tb >= align:
        tb = (tb // align) * align
    return max(1, tb)


@functools.partial(jax.jit, static_argnums=(2, 3))
def discriminator_p_pallas(x, layer_params, period, storage_dtype=jnp.bfloat16):
    """x: (b, 1, t) float32 -> (b, 128, H4 * period), matching DiscriminatorP.forward.
    Output dtype follows storage_dtype (f32 path is bit-faithful to the conv reference)."""
    b, c, t = x.shape
    assert c == 1
    if t % period != 0:
        n_pad = period - t % period
        assert n_pad <= t - 1, "signal too short for reflect padding"
        x = jnp.pad(x, ((0, 0), (0, 0), (0, n_pad)), mode="reflect")
        t = t + n_pad
    h0 = t // period
    n_seq = b * period
    seqs = x.reshape(b, h0, period).transpose(0, 2, 1).reshape(n_seq, h0)

    h1 = _conv_out_len(h0)
    h2 = _conv_out_len(h1)
    h3 = _conv_out_len(h2)
    h4 = _conv_out_len(h3)
    s4 = h4 + 1
    s3, s2, s1 = 3 * s4, 9 * s4, 27 * s4

    out_dtype = storage_dtype
    in_isz = jnp.dtype(storage_dtype).itemsize
    out_isz = jnp.dtype(out_dtype).itemsize
    tb = _pick_tb(n_seq, s1, s2, s3, s4, in_isz, out_isz)
    nb = -(-n_seq // tb)                            # number of grid steps
    np_seq = nb * tb
    r1, r2, r3, r4 = tb * s1, tb * s2, tb * s3, tb * s4

    # ---- host-side layer-1 im2col, laid out into the per-sequence slot format ----
    xp = jnp.pad(seqs, ((0, 0), (PAD, 3 * h1 - h0)))
    taps = jnp.stack([xp[:, k:k + 3 * h1:3] for k in range(KSIZE)], axis=-1)     # (n_seq, h1, 5)
    taps = jnp.pad(taps, ((0, np_seq - n_seq), (_D1, s1 - _D1 - h1), (0, 0)))    # (np_seq, s1, 5)
    x1 = taps.reshape(nb, r1, KSIZE).astype(storage_dtype)

    (w1, b1), (w2, b2), (w3, b3), (w4, b4) = layer_params
    sd = storage_dtype
    args = (x1,
            w1[:, 0, :].astype(sd), b1.reshape(1, -1).astype(sd),
            w2.astype(sd), b2.reshape(1, -1).astype(sd),
            w3.astype(sd), b3.reshape(1, -1).astype(sd),
            w4.astype(sd), b4.reshape(1, -1).astype(sd))

    def full_spec(shape):
        return pl.BlockSpec(shape, lambda i: (0,) * len(shape))

    kernel = _make_kernel(tb, (s1, s2, s3, s4), (h1, h2, h3))

    # Advisory cost estimate so XLA schedules sensibly around the custom call.
    flops = 2 * np_seq * KSIZE * (s1 * CH[0] * CH[1] + s2 * CH[1] * CH[2]
                                  + s3 * CH[2] * CH[3] + s4 * CH[3] * CH[4])
    bytes_accessed = (int(x1.size) * in_isz
                      + sum(int(a.size) * in_isz for a in args[1:])
                      + np_seq * s4 * CH[4] * out_isz)

    # Scoped VMEM request (accounts for 128-lane padding of narrow-channel buffers).
    pad8 = lambda r: -(-r // 8) * 8
    est = (128 * (2 * pad8(r1) * in_isz
                  + (pad8(r1 + _TAIL) + pad8(r2 + _TAIL) + pad8(r3 + _TAIL)) * 4
                  + 2 * pad8(r4) * out_isz)
           + 2 * in_isz * 128 * (8 + KSIZE * (CH[1] + CH[2] + CH[3]))
           + (2 << 20))
    vmem_limit = int(min(_VMEM_LIMIT_CAP, max(32 << 20, int(1.5 * est))))

    out = pl.pallas_call(
        kernel,
        out_shape=jax.ShapeDtypeStruct((nb, r4, CH[4]), out_dtype),
        grid=(nb,),
        in_specs=[
            pl.BlockSpec((None, r1, KSIZE), lambda i: (i, 0, 0)),
            full_spec((KSIZE, CH[1])), full_spec((1, CH[1])),
            full_spec((KSIZE, CH[1], CH[2])), full_spec((1, CH[2])),
            full_spec((KSIZE, CH[2], CH[3])), full_spec((1, CH[3])),
            full_spec((KSIZE, CH[3], CH[4])), full_spec((1, CH[4])),
        ],
        out_specs=pl.BlockSpec((None, r4, CH[4]), lambda i: (i, 0, 0)),
        scratch_shapes=[
            pltpu.VMEM((r1 + _TAIL, CH[1]), jnp.float32),
            pltpu.VMEM((r2 + _TAIL, CH[2]), jnp.float32),
            pltpu.VMEM((r3 + _TAIL, CH[3]), jnp.float32),
        ],
        compiler_params=pltpu.CompilerParams(
            dimension_semantics=("parallel",),
            vmem_limit_bytes=vmem_limit),
        cost_estimate=pl.CostEstimate(
            flops=flops, transcendentals=0, bytes_accessed=bytes_accessed),
    )(*args)

    # (nb, r4, 128) slot rows -> (b, 128, h4 * period)  (== torch.flatten(x, 2, -1))
    y = out.reshape(np_seq, s4, CH[4])[:n_seq, :h4, :]
    y = y.reshape(b, period, h4, CH[4])
    y = jnp.transpose(y, (0, 3, 2, 1)).reshape(b, CH[4], h4 * period)
    return y


@functools.partial(jax.jit, static_argnums=(2, 3))
def multi_period_discriminator(y, params_all, periods, storage_dtype=jnp.bfloat16):
    """Returns [DiscriminatorP(p)(y) for p in periods]; all three periods in one jit."""
    return [discriminator_p_pallas(y, p, per, storage_dtype)
            for p, per in zip(params_all, periods)]


# ---------------- pure-JAX reference (correctness check only) ----------------
def discriminator_p_ref(x, layer_params, period):
    b, c, t = x.shape
    if t % period != 0:
        n_pad = period - t % period
        x = jnp.pad(x, ((0, 0), (0, 0), (0, n_pad)), mode="reflect")
        t = t + n_pad
    x = x.reshape(b, c, t // period, period)                 # NCHW
    for (w, bias) in layer_params:
        wt = jnp.transpose(w, (2, 1, 0))[:, :, :, None]      # (Cout, Cin, K, 1) OIHW
        x = jax.lax.conv_general_dilated(
            x, wt, window_strides=(STRIDE, 1), padding=((PAD, PAD), (0, 0)),
            dimension_numbers=("NCHW", "OIHW", "NCHW"))
        x = x + bias.reshape(1, -1, 1, 1)
        x = jnp.where(x > 0, x, LRELU_SLOPE * x)
    return x.reshape(b, x.shape[1], -1)


if __name__ == "__main__":
    periods = (3, 5, 7)

    key = jax.random.PRNGKey(0)
    params_all = []
    for _ in periods:
        layers = []
        for i in range(4):
            key, kw, kb = jax.random.split(key, 3)
            w = 0.1 * jax.random.normal(kw, (KSIZE, CH[i], CH[i + 1]), jnp.float32)
            bias = 0.1 * jax.random.normal(kb, (CH[i + 1],), jnp.float32)
            layers.append((w, bias))
        params_all.append(layers)

    key, kx = jax.random.split(key)
    y = jax.random.normal(kx, (2, 1, 256), jnp.float32)      # (batch, channels=1, time)

    refs = [discriminator_p_ref(y, p, per) for p, per in zip(params_all, periods)]

    # f32 path: must match the XLA conv reference tightly
    outs = jax.block_until_ready(
        multi_period_discriminator(y, params_all, periods, jnp.float32))
    for o, r in zip(outs, refs):
        assert o.shape == r.shape, (o.shape, r.shape)
        err = float(jnp.max(jnp.abs(o - r)))
        assert jnp.allclose(o, r, rtol=1e-4, atol=1e-4), err

    # default bf16 HBM/DMA storage path (accumulation + epilogue stay f32 inside the kernel)
    outs_bf16 = jax.block_until_ready(
        multi_period_discriminator(y, params_all, periods, jnp.bfloat16))
    for o, r in zip(outs_bf16, refs):
        assert o.shape == r.shape, (o.shape, r.shape)
        of = o.astype(jnp.float32)
        err = float(jnp.max(jnp.abs(of - r)))
        assert jnp.allclose(of, r, rtol=5e-2, atol=5e-2), err

    print("KERNEL_OK")
</pallas_src>

<mosaic_0001>
module attributes {stable_mosaic.version = 11 : i64} {
  func.func @kernel(%arg0: i32, %arg1: memref<1x243x5xf32, #tpu.memory_space<vmem>>, %arg2: memref<5x16xf32, #tpu.memory_space<vmem>>, %arg3: memref<1x16xf32, #tpu.memory_space<vmem>>, %arg4: memref<5x16x32xf32, #tpu.memory_space<vmem>>, %arg5: memref<1x32xf32, #tpu.memory_space<vmem>>, %arg6: memref<5x32x64xf32, #tpu.memory_space<vmem>>, %arg7: memref<1x64xf32, #tpu.memory_space<vmem>>, %arg8: memref<5x64x128xf32, #tpu.memory_space<vmem>>, %arg9: memref<1x128xf32, #tpu.memory_space<vmem>>, %arg10: memref<1x9x128xf32, #tpu.memory_space<vmem>>, %arg11: memref<251x16xf32, #tpu.memory_space<vmem>>, %arg12: memref<89x32xf32, #tpu.memory_space<vmem>>, %arg13: memref<35x64xf32, #tpu.memory_space<vmem>>) attributes {dimension_semantics = [#tpu.dimension_semantics<parallel>], iteration_bounds = array<i64: 2>, scalar_prefetch = 0 : i64, scratch_operands = 3 : i64, tpu.core_type = #tpu.core_type<tc>, window_params = [{transform_indices = @transform_0, window_bounds = array<i64: 1, 243, 5>}, {pipeline_mode = #tpu.pipeline_mode<synchronous>, transform_indices = @transform_1, window_bounds = array<i64: 5, 16>}, {pipeline_mode = #tpu.pipeline_mode<synchronous>, transform_indices = @transform_2, window_bounds = array<i64: 1, 16>}, {pipeline_mode = #tpu.pipeline_mode<synchronous>, transform_indices = @transform_3, window_bounds = array<i64: 5, 16, 32>}, {pipeline_mode = #tpu.pipeline_mode<synchronous>, transform_indices = @transform_4, window_bounds = array<i64: 1, 32>}, {pipeline_mode = #tpu.pipeline_mode<synchronous>, transform_indices = @transform_5, window_bounds = array<i64: 5, 32, 64>}, {pipeline_mode = #tpu.pipeline_mode<synchronous>, transform_indices = @transform_6, window_bounds = array<i64: 1, 64>}, {pipeline_mode = #tpu.pipeline_mode<synchronous>, transform_indices = @transform_7, window_bounds = array<i64: 5, 64, 128>}, {pipeline_mode = #tpu.pipeline_mode<synchronous>, transform_indices = @transform_8, window_bounds = array<i64: 1, 128>}, {transform_indices = @transform_9, window_bounds = array<i64: 1, 9, 128>}]} {
    %cst = arith.constant 0.000000e+00 : f32
    %0 = vector.broadcast %cst : f32 to vector<8x16xf32>
    %c243 = arith.constant 243 : index
    %c0 = arith.constant 0 : index
    %1 = vector.load %arg11[%c243, %c0] : memref<251x16xf32, #tpu.memory_space<vmem>>, vector<8x16xf32>
    tpu.vector_store %arg11[%c243, %c0], %0 {strides = array<i32>} : memref<251x16xf32, #tpu.memory_space<vmem>>, vector<8x16xf32>,
    %cst_0 = arith.constant 0.000000e+00 : f32
    %2 = vector.broadcast %cst_0 : f32 to vector<8x32xf32>
    %c81 = arith.constant 81 : index
    %c0_1 = arith.constant 0 : index
    %3 = vector.load %arg12[%c81, %c0_1] : memref<89x32xf32, #tpu.memory_space<vmem>>, vector<8x32xf32>
    tpu.vector_store %arg12[%c81, %c0_1], %2 {strides = array<i32>} : memref<89x32xf32, #tpu.memory_space<vmem>>, vector<8x32xf32>,
    %cst_2 = arith.constant 0.000000e+00 : f32
    %4 = vector.broadcast %cst_2 : f32 to vector<8x64xf32>
    %c27 = arith.constant 27 : index
    %c0_3 = arith.constant 0 : index
    %5 = vector.load %arg13[%c27, %c0_3] : memref<35x64xf32, #tpu.memory_space<vmem>>, vector<8x64xf32>
    tpu.vector_store %arg13[%c27, %c0_3], %4 {strides = array<i32>} : memref<35x64xf32, #tpu.memory_space<vmem>>, vector<8x64xf32>,
    %c0_4 = arith.constant 0 : index
    %c0_5 = arith.constant 0 : index
    %c0_6 = arith.constant 0 : index
    %6 = vector.load %arg1[%c0_4, %c0_5, %c0_6] : memref<1x243x5xf32, #tpu.memory_space<vmem>>, vector<1x243x5xf32>
    %7 = vector.shape_cast %6 : vector<1x243x5xf32> to vector<243x5xf32>
    %c0_7 = arith.constant 0 : index
    %c0_8 = arith.constant 0 : index
    %8 = vector.load %arg2[%c0_7, %c0_8] : memref<5x16xf32, #tpu.memory_space<vmem>>, vector<5x16xf32>
    %cst_9 = arith.constant dense<0.000000e+00> : vector<243x16xf32>
    %9 = tpu.matmul %7, %8, %cst_9 {dimension_numbers = #tpu.dot_dimension_numbers<[1], [0], [0], [1], [0, 0, 1, 1], [], []>} : vector<243x5xf32>, vector<5x16xf32>, vector<243x16xf32> -> vector<243x16xf32>
    %c0_10 = arith.constant 0 : index
    %c0_11 = arith.constant 0 : index
    %10 = vector.load %arg3[%c0_10, %c0_11] : memref<1x16xf32, #tpu.memory_space<vmem>>, vector<1x16xf32>
    %11 = vector.broadcast %10 : vector<1x16xf32> to vector<243x16xf32>
    %12 = arith.addf %9, %11 : vector<243x16xf32>
    %cst_12 = arith.constant 0.000000e+00 : f32
    %13 = vector.broadcast %cst_12 : f32 to vector<243x16xf32>
    %14 = arith.cmpf ogt, %12, %13 : vector<243x16xf32>
    %cst_13 = arith.constant 1.000000e-01 : f32
    %15 = vector.broadcast %cst_13 : f32 to vector<243x16xf32>
    %16 = arith.mulf %15, %12 : vector<243x16xf32>
    %17 = arith.select %14, %12, %16 : vector<243x16xi1>, vector<243x16xf32>
    %18 = tpu.iota {dimensions = array<i32: 0>} : vector<243x16xi32>
    %19 = arith.sitofp %18 : vector<243x16xi32> to vector<243x16xf32>
    %cst_14 = arith.constant 0.0123456791 : f32
    %20 = vector.broadcast %cst_14 : f32 to vector<243x16xf32>
    %21 = arith.mulf %19, %20 : vector<243x16xf32>
    %22 = math.floor %21 : vector<243x16xf32>
    %cst_15 = arith.constant 8.100000e+01 : f32
    %23 = vector.broadcast %cst_15 : f32 to vector<243x16xf32>
    %24 = arith.mulf %23, %22 : vector<243x16xf32>
    %25 = arith.subf %19, %24 : vector<243x16xf32>
    %cst_16 = arith.constant 2.600000e+01 : f32
    %26 = vector.broadcast %cst_16 : f32 to vector<243x16xf32>
    %27 = arith.cmpf oge, %25, %26 : vector<243x16xf32>
    %cst_17 = arith.constant 5.500000e+01 : f32
    %28 = vector.broadcast %cst_17 : f32 to vector<243x16xf32>
    %29 = arith.cmpf olt, %25, %28 : vector<243x16xf32>
    %30 = arith.andi %27, %29 : vector<243x16xi1>
    %cst_18 = arith.constant 0.000000e+00 : f32
    %31 = vector.broadcast %cst_18 : f32 to vector<243x16xf32>
    %32 = arith.select %30, %17, %31 : vector<243x16xi1>, vector<243x16xf32>
    %c0_19 = arith.constant 0 : index
    %c0_20 = arith.constant 0 : index
    %33 = vector.load %arg11[%c0_19, %c0_20] : memref<251x16xf32, #tpu.memory_space<vmem>>, vector<243x16xf32>
    tpu.vector_store %arg11[%c0_19, %c0_20], %32 {strides = array<i32>} : memref<251x16xf32, #tpu.memory_space<vmem>>, vector<243x16xf32>,
    %c0_21 = arith.constant 0 : index
    %c0_22 = arith.constant 0 : index
    %34 = vector.load %arg5[%c0_21, %c0_22] : memref<1x32xf32, #tpu.memory_space<vmem>>, vector<1x32xf32>
    %35 = vector.shape_cast %34 : vector<1x32xf32> to vector<1x32xf32>
    %36 = vector.broadcast %35 : vector<1x32xf32> to vector<81x32xf32>
    %c0_23 = arith.constant 0 : index
    %c0_24 = arith.constant 0 : index
    %37 = tpu.strided_load %arg11[%c0_23, %c0_24] {strides = array<i32: 3, 1>} : memref<251x16xf32, #tpu.memory_space<vmem>>, vector<81x16xf32>
    %c0_25 = arith.constant 0 : index
    %c0_26 = arith.constant 0 : index
    %c0_27 = arith.constant 0 : index
    %38 = vector.load %arg4[%c0_25, %c0_26, %c0_27] : memref<5x16x32xf32, #tpu.memory_space<vmem>>, vector<1x16x32xf32>
    %39 = vector.shape_cast %38 : vector<1x16x32xf32> to vector<16x32xf32>
    %cst_28 = arith.constant dense<0.000000e+00> : vector<81x32xf32>
    %40 = tpu.matmul %37, %39, %cst_28 {dimension_numbers = #tpu.dot_dimension_numbers<[1], [0], [0], [1], [0, 0, 1, 1], [], []>} : vector<81x16xf32>, vector<16x32xf32>, vector<81x32xf32> -> vector<81x32xf32>
    %41 = arith.addf %36, %40 : vector<81x32xf32>
    %c1 = arith.constant 1 : index
    %c0_29 = arith.constant 0 : index
    %42 = tpu.strided_load %arg11[%c1, %c0_29] {strides = array<i32: 3, 1>} : memref<251x16xf32, #tpu.memory_space<vmem>>, vector<81x16xf32>
    %c1_30 = arith.constant 1 : index
    %c0_31 = arith.constant 0 : index
    %c0_32 = arith.constant 0 : index
    %43 = vector.load %arg4[%c1_30, %c0_31, %c0_32] : memref<5x16x32xf32, #tpu.memory_space<vmem>>, vector<1x16x32xf32>
    %44 = vector.shape_cast %43 : vector<1x16x32xf32> to vector<16x32xf32>
    %cst_33 = arith.constant dense<0.000000e+00> : vector<81x32xf32>
    %45 = tpu.matmul %42, %44, %cst_33 {dimension_numbers = #tpu.dot_dimension_numbers<[1], [0], [0], [1], [0, 0, 1, 1], [], []>} : vector<81x16xf32>, vector<16x32xf32>, vector<81x32xf32> -> vector<81x32xf32>
    %46 = arith.addf %41, %45 : vector<81x32xf32>
    %c2 = arith.constant 2 : index
    %c0_34 = arith.constant 0 : index
    %47 = tpu.strided_load %arg11[%c2, %c0_34] {strides = array<i32: 3, 1>} : memref<251x16xf32, #tpu.memory_space<vmem>>, vector<81x16xf32>
    %c2_35 = arith.constant 2 : index
    %c0_36 = arith.constant 0 : index
    %c0_37 = arith.constant 0 : index
    %48 = vector.load %arg4[%c2_35, %c0_36, %c0_37] : memref<5x16x32xf32, #tpu.memory_space<vmem>>, vector<1x16x32xf32>
    %49 = vector.shape_cast %48 : vector<1x16x32xf32> to vector<16x32xf32>
    %cst_38 = arith.constant dense<0.000000e+00> : vector<81x32xf32>
    %50 = tpu.matmul %47, %49, %cst_38 {dimension_numbers = #tpu.dot_dimension_numbers<[1], [0], [0], [1], [0, 0, 1, 1], [], []>} : vector<81x16xf32>, vector<16x32xf32>, vector<81x32xf32> -> vector<81x32xf32>
    %51 = arith.addf %46, %50 : vector<81x32xf32>
    %c3 = arith.constant 3 : index
    %c0_39 = arith.constant 0 : index
    %52 = tpu.strided_load %arg11[%c3, %c0_39] {strides = array<i32: 3, 1>} : memref<251x16xf32, #tpu.memory_space<vmem>>, vector<81x16xf32>
    %c3_40 = arith.constant 3 : index
    %c0_41 = arith.constant 0 : index
    %c0_42 = arith.constant 0 : index
    %53 = vector.load %arg4[%c3_40, %c0_41, %c0_42] : memref<5x16x32xf32, #tpu.memory_space<vmem>>, vector<1x16x32xf32>
    %54 = vector.shape_cast %53 : vector<1x16x32xf32> to vector<16x32xf32>
    %cst_43 = arith.constant dense<0.000000e+00> : vector<81x32xf32>
    %55 = tpu.matmul %52, %54, %cst_43 {dimension_numbers = #tpu.dot_dimension_numbers<[1], [0], [0], [1], [0, 0, 1, 1], [], []>} : vector<81x16xf32>, vector<16x32xf32>, vector<81x32xf32> -> vector<81x32xf32>
    %56 = arith.addf %51, %55 : vector<81x32xf32>
    %c4 = arith.constant 4 : index
    %c0_44 = arith.constant 0 : index
    %57 = tpu.strided_load %arg11[%c4, %c0_44] {strides = array<i32: 3, 1>} : memref<251x16xf32, #tpu.memory_space<vmem>>, vector<81x16xf32>
    %c4_45 = arith.constant 4 : index
    %c0_46 = arith.constant 0 : index
    %c0_47 = arith.constant 0 : index
    %58 = vector.load %arg4[%c4_45, %c0_46, %c0_47] : memref<5x16x32xf32, #tpu.memory_space<vmem>>, vector<1x16x32xf32>
    %59 = vector.shape_cast %58 : vector<1x16x32xf32> to vector<16x32xf32>
    %cst_48 = arith.constant dense<0.000000e+00> : vector<81x32xf32>
    %60 = tpu.matmul %57, %59, %cst_48 {dimension_numbers = #tpu.dot_dimension_numbers<[1], [0], [0], [1], [0, 0, 1, 1], [], []>} : vector<81x16xf32>, vector<16x32xf32>, vector<81x32xf32> -> vector<81x32xf32>
    %61 = arith.addf %56, %60 : vector<81x32xf32>
    %cst_49 = arith.constant 0.000000e+00 : f32
    %62 = vector.broadcast %cst_49 : f32 to vector<81x32xf32>
    %63 = arith.cmpf ogt, %61, %62 : vector<81x32xf32>
    %cst_50 = arith.constant 1.000000e-01 : f32
    %64 = vector.broadcast %cst_50 : f32 to vector<81x32xf32>
    %65 = arith.mulf %64, %61 : vector<81x32xf32>
    %66 = arith.select %63, %61, %65 : vector<81x32xi1>, vector<81x32xf32>
    %67 = tpu.iota {dimensions = array<i32: 0>} : vector<81x32xi32>
    %68 = arith.sitofp %67 : vector<81x32xi32> to vector<81x32xf32>
    %cst_51 = arith.constant 0.0370370373 : f32
    %69 = vector.broadcast %cst_51 : f32 to vector<81x32xf32>
    %70 = arith.mulf %68, %69 : vector<81x32xf32>
    %71 = math.floor %70 : vector<81x32xf32>
    %cst_52 = arith.constant 2.700000e+01 : f32
    %72 = vector.broadcast %cst_52 : f32 to vector<81x32xf32>
    %73 = arith.mulf %72, %71 : vector<81x32xf32>
    %74 = arith.subf %68, %73 : vector<81x32xf32>
    %cst_53 = arith.constant 8.000000e+00 : f32
    %75 = vector.broadcast %cst_53 : f32 to vector<81x32xf32>
    %76 = arith.cmpf oge, %74, %75 : vector<81x32xf32>
    %cst_54 = arith.constant 1.800000e+01 : f32
    %77 = vector.broadcast %cst_54 : f32 to vector<81x32xf32>
    %78 = arith.cmpf olt, %74, %77 : vector<81x32xf32>
    %79 = arith.andi %76, %78 : vector<81x32xi1>
    %cst_55 = arith.constant 0.000000e+00 : f32
    %80 = vector.broadcast %cst_55 : f32 to vector<81x32xf32>
    %81 = arith.select %79, %66, %80 : vector<81x32xi1>, vector<81x32xf32>
    %c0_56 = arith.constant 0 : index
    %c0_57 = arith.constant 0 : index
    %82 = vector.load %arg12[%c0_56, %c0_57] : memref<89x32xf32, #tpu.memory_space<vmem>>, vector<81x32xf32>
    tpu.vector_store %arg12[%c0_56, %c0_57], %81 {strides = array<i32>} : memref<89x32xf32, #tpu.memory_space<vmem>>, vector<81x32xf32>,
    %c0_58 = arith.constant 0 : index
    %c0_59 = arith.constant 0 : index
    %83 = vector.load %arg7[%c0_58, %c0_59] : memref<1x64xf32, #tpu.memory_space<vmem>>, vector<1x64xf32>
    %84 = vector.shape_cast %83 : vector<1x64xf32> to vector<1x64xf32>
    %85 = vector.broadcast %84 : vector<1x64xf32> to vector<27x64xf32>
    %c0_60 = arith.constant 0 : index
    %c0_61 = arith.constant 0 : index
    %86 = tpu.strided_load %arg12[%c0_60, %c0_61] {strides = array<i32: 3, 1>} : memref<89x32xf32, #tpu.memory_space<vmem>>, vector<27x32xf32>
    %c0_62 = arith.constant 0 : index
    %c0_63 = arith.constant 0 : index
    %c0_64 = arith.constant 0 : index
    %87 = vector.load %arg6[%c0_62, %c0_63, %c0_64] : memref<5x32x64xf32, #tpu.memory_space<vmem>>, vector<1x32x64xf32>
    %88 = vector.shape_cast %87 : vector<1x32x64xf32> to vector<32x64xf32>
    %cst_65 = arith.constant dense<0.000000e+00> : vector<27x64xf32>
    %89 = tpu.matmul %86, %88, %cst_65 {dimension_numbers = #tpu.dot_dimension_numbers<[1], [0], [0], [1], [0, 0, 1, 1], [], []>} : vector<27x32xf32>, vector<32x64xf32>, vector<27x64xf32> -> vector<27x64xf32>
    %90 = arith.addf %85, %89 : vector<27x64xf32>
    %c1_66 = arith.constant 1 : index
    %c0_67 = arith.constant 0 : index
    %91 = tpu.strided_load %arg12[%c1_66, %c0_67] {strides = array<i32: 3, 1>} : memref<89x32xf32, #tpu.memory_space<vmem>>, vector<27x32xf32>
    %c1_68 = arith.constant 1 : index
    %c0_69 = arith.constant 0 : index
    %c0_70 = arith.constant 0 : index
    %92 = vector.load %arg6[%c1_68, %c0_69, %c0_70] : memref<5x32x64xf32, #tpu.memory_space<vmem>>, vector<1x32x64xf32>
    %93 = vector.shape_cast %92 : vector<1x32x64xf32> to vector<32x64xf32>
    %cst_71 = arith.constant dense<0.000000e+00> : vector<27x64xf32>
    %94 = tpu.matmul %91, %93, %cst_71 {dimension_numbers = #tpu.dot_dimension_numbers<[1], [0], [0], [1], [0, 0, 1, 1], [], []>} : vector<27x32xf32>, vector<32x64xf32>, vector<27x64xf32> -> vector<27x64xf32>
    %95 = arith.addf %90, %94 : vector<27x64xf32>
    %c2_72 = arith.constant 2 : index
    %c0_73 = arith.constant 0 : index
    %96 = tpu.strided_load %arg12[%c2_72, %c0_73] {strides = array<i32: 3, 1>} : memref<89x32xf32, #tpu.memory_space<vmem>>, vector<27x32xf32>
    %c2_74 = arith.constant 2 : index
    %c0_75 = arith.constant 0 : index
    %c0_76 = arith.constant 0 : index
    %97 = vector.load %arg6[%c2_74, %c0_75, %c0_76] : memref<5x32x64xf32, #tpu.memory_space<vmem>>, vector<1x32x64xf32>
    %98 = vector.shape_cast %97 : vector<1x32x64xf32> to vector<32x64xf32>
    %cst_77 = arith.constant dense<0.000000e+00> : vector<27x64xf32>
    %99 = tpu.matmul %96, %98, %cst_77 {dimension_numbers = #tpu.dot_dimension_numbers<[1], [0], [0], [1], [0, 0, 1, 1], [], []>} : vector<27x32xf32>, vector<32x64xf32>, vector<27x64xf32> -> vector<27x64xf32>
    %100 = arith.addf %95, %99 : vector<27x64xf32>
    %c3_78 = arith.constant 3 : index
    %c0_79 = arith.constant 0 : index
    %101 = tpu.strided_load %arg12[%c3_78, %c0_79] {strides = array<i32: 3, 1>} : memref<89x32xf32, #tpu.memory_space<vmem>>, vector<27x32xf32>
    %c3_80 = arith.constant 3 : index
    %c0_81 = arith.constant 0 : index
    %c0_82 = arith.constant 0 : index
    %102 = vector.load %arg6[%c3_80, %c0_81, %c0_82] : memref<5x32x64xf32, #tpu.memory_space<vmem>>, vector<1x32x64xf32>
    %103 = vector.shape_cast %102 : vector<1x32x64xf32> to vector<32x64xf32>
    %cst_83 = arith.constant dense<0.000000e+00> : vector<27x64xf32>
    %104 = tpu.matmul %101, %103, %cst_83 {dimension_numbers = #tpu.dot_dimension_numbers<[1], [0], [0], [1], [0, 0, 1, 1], [], []>} : vector<27x32xf32>, vector<32x64xf32>, vector<27x64xf32> -> vector<27x64xf32>
    %105 = arith.addf %100, %104 : vector<27x64xf32>
    %c4_84 = arith.constant 4 : index
    %c0_85 = arith.constant 0 : index
    %106 = tpu.strided_load %arg12[%c4_84, %c0_85] {strides = array<i32: 3, 1>} : memref<89x32xf32, #tpu.memory_space<vmem>>, vector<27x32xf32>
    %c4_86 = arith.constant 4 : index
    %c0_87 = arith.constant 0 : index
    %c0_88 = arith.constant 0 : index
    %107 = vector.load %arg6[%c4_86, %c0_87, %c0_88] : memref<5x32x64xf32, #tpu.memory_space<vmem>>, vector<1x32x64xf32>
    %108 = vector.shape_cast %107 : vector<1x32x64xf32> to vector<32x64xf32>
    %cst_89 = arith.constant dense<0.000000e+00> : vector<27x64xf32>
    %109 = tpu.matmul %106, %108, %cst_89 {dimension_numbers = #tpu.dot_dimension_numbers<[1], [0], [0], [1], [0, 0, 1, 1], [], []>} : vector<27x32xf32>, vector<32x64xf32>, vector<27x64xf32> -> vector<27x64xf32>
    %110 = arith.addf %105, %109 : vector<27x64xf32>
    %cst_90 = arith.constant 0.000000e+00 : f32
    %111 = vector.broadcast %cst_90 : f32 to vector<27x64xf32>
    %112 = arith.cmpf ogt, %110, %111 : vector<27x64xf32>
    %cst_91 = arith.constant 1.000000e-01 : f32
    %113 = vector.broadcast %cst_91 : f32 to vector<27x64xf32>
    %114 = arith.mulf %113, %110 : vector<27x64xf32>
    %115 = arith.select %112, %110, %114 : vector<27x64xi1>, vector<27x64xf32>
    %116 = tpu.iota {dimensions = array<i32: 0>} : vector<27x64xi32>
    %117 = arith.sitofp %116 : vector<27x64xi32> to vector<27x64xf32>
    %cst_92 = arith.constant 0.111111112 : f32
    %118 = vector.broadcast %cst_92 : f32 to vector<27x64xf32>
    %119 = arith.mulf %117, %118 : vector<27x64xf32>
    %120 = math.floor %119 : vector<27x64xf32>
    %cst_93 = arith.constant 9.000000e+00 : f32
    %121 = vector.broadcast %cst_93 : f32 to vector<27x64xf32>
    %122 = arith.mulf %121, %120 : vector<27x64xf32>
    %123 = arith.subf %117, %122 : vector<27x64xf32>
    %cst_94 = arith.constant 2.000000e+00 : f32
    %124 = vector.broadcast %cst_94 : f32 to vector<27x64xf32>
    %125 = arith.cmpf oge, %123, %124 : vector<27x64xf32>
    %cst_95 = arith.constant 6.000000e+00 : f32
    %126 = vector.broadcast %cst_95 : f32 to vector<27x64xf32>
    %127 = arith.cmpf olt, %123, %126 : vector<27x64xf32>
    %128 = arith.andi %125, %127 : vector<27x64xi1>
    %cst_96 = arith.constant 0.000000e+00 : f32
    %129 = vector.broadcast %cst_96 : f32 to vector<27x64xf32>
    %130 = arith.select %128, %115, %129 : vector<27x64xi1>, vector<27x64xf32>
    %c0_97 = arith.constant 0 : index
    %c0_98 = arith.constant 0 : index
    %131 = vector.load %arg13[%c0_97, %c0_98] : memref<35x64xf32, #tpu.memory_space<vmem>>, vector<27x64xf32>
    tpu.vector_store %arg13[%c0_97, %c0_98], %130 {strides = array<i32>} : memref<35x64xf32, #tpu.memory_space<vmem>>, vector<27x64xf32>,
    %c0_99 = arith.constant 0 : index
    %c0_100 = arith.constant 0 : index
    %132 = vector.load %arg9[%c0_99, %c0_100] : memref<1x128xf32, #tpu.memory_space<vmem>>, vector<1x128xf32>
    %133 = vector.shape_cast %132 : vector<1x128xf32> to vector<1x128xf32>
    %134 = vector.broadcast %133 : vector<1x128xf32> to vector<9x128xf32>
    %c0_101 = arith.constant 0 : index
    %c0_102 = arith.constant 0 : index
    %135 = tpu.strided_load %arg13[%c0_101, %c0_102] {strides = array<i32: 3, 1>} : memref<35x64xf32, #tpu.memory_space<vmem>>, vector<9x64xf32>
    %c0_103 = arith.constant 0 : index
    %c0_104 = arith.constant 0 : index
    %c0_105 = arith.constant 0 : index
    %136 = vector.load %arg8[%c0_103, %c0_104, %c0_105] : memref<5x64x128xf32, #tpu.memory_space<vmem>>, vector<1x64x128xf32>
    %137 = vector.shape_cast %136 : vector<1x64x128xf32> to vector<64x128xf32>
    %cst_106 = arith.constant dense<0.000000e+00> : vector<9x128xf32>
    %138 = tpu.matmul %135, %137, %cst_106 {dimension_numbers = #tpu.dot_dimension_numbers<[1], [0], [0], [1], [0, 0, 1, 1], [], []>} : vector<9x64xf32>, vector<64x128xf32>, vector<9x128xf32> -> vector<9x128xf32>
    %139 = arith.addf %134, %138 : vector<9x128xf32>
    %c1_107 = arith.constant 1 : index
    %c0_108 = arith.constant 0 : index
    %140 = tpu.strided_load %arg13[%c1_107, %c0_108] {strides = array<i32: 3, 1>} : memref<35x64xf32, #tpu.memory_space<vmem>>, vector<9x64xf32>
    %c1_109 = arith.constant 1 : index
    %c0_110 = arith.constant 0 : index
    %c0_111 = arith.constant 0 : index
    %141 = vector.load %arg8[%c1_109, %c0_110, %c0_111] : memref<5x64x128xf32, #tpu.memory_space<vmem>>, vector<1x64x128xf32>
    %142 = vector.shape_cast %141 : vector<1x64x128xf32> to vector<64x128xf32>
    %cst_112 = arith.constant dense<0.000000e+00> : vector<9x128xf32>
    %143 = tpu.matmul %140, %142, %cst_112 {dimension_numbers = #tpu.dot_dimension_numbers<[1], [0], [0], [1], [0, 0, 1, 1], [], []>} : vector<9x64xf32>, vector<64x128xf32>, vector<9x128xf32> -> vector<9x128xf32>
    %144 = arith.addf %139, %143 : vector<9x128xf32>
    %c2_113 = arith.constant 2 : index
    %c0_114 = arith.constant 0 : index
    %145 = tpu.strided_load %arg13[%c2_113, %c0_114] {strides = array<i32: 3, 1>} : memref<35x64xf32, #tpu.memory_space<vmem>>, vector<9x64xf32>
    %c2_115 = arith.constant 2 : index
    %c0_116 = arith.constant 0 : index
    %c0_117 = arith.constant 0 : index
    %146 = vector.load %arg8[%c2_115, %c0_116, %c0_117] : memref<5x64x128xf32, #tpu.memory_space<vmem>>, vector<1x64x128xf32>
    %147 = vector.shape_cast %146 : vector<1x64x128xf32> to vector<64x128xf32>
    %cst_118 = arith.constant dense<0.000000e+00> : vector<9x128xf32>
    %148 = tpu.matmul %145, %147, %cst_118 {dimension_numbers = #tpu.dot_dimension_numbers<[1], [0], [0], [1], [0, 0, 1, 1], [], []>} : vector<9x64xf32>, vector<64x128xf32>, vector<9x128xf32> -> vector<9x128xf32>
    %149 = arith.addf %144, %148 : vector<9x128xf32>
    %c3_119 = arith.constant 3 : index
    %c0_120 = arith.constant 0 : index
    %150 = tpu.strided_load %arg13[%c3_119, %c0_120] {strides = array<i32: 3, 1>} : memref<35x64xf32, #tpu.memory_space<vmem>>, vector<9x64xf32>
    %c3_121 = arith.constant 3 : index
    %c0_122 = arith.constant 0 : index
    %c0_123 = arith.constant 0 : index
    %151 = vector.load %arg8[%c3_121, %c0_122, %c0_123] : memref<5x64x128xf32, #tpu.memory_space<vmem>>, vector<1x64x128xf32>
    %152 = vector.shape_cast %151 : vector<1x64x128xf32> to vector<64x128xf32>
    %cst_124 = arith.constant dense<0.000000e+00> : vector<9x128xf32>
    %153 = tpu.matmul %150, %152, %cst_124 {dimension_numbers = #tpu.dot_dimension_numbers<[1], [0], [0], [1], [0, 0, 1, 1], [], []>} : vector<9x64xf32>, vector<64x128xf32>, vector<9x128xf32> -> vector<9x128xf32>
    %154 = arith.addf %149, %153 : vector<9x128xf32>
    %c4_125 = arith.constant 4 : index
    %c0_126 = arith.constant 0 : index
    %155 = tpu.strided_load %arg13[%c4_125, %c0_126] {strides = array<i32: 3, 1>} : memref<35x64xf32, #tpu.memory_space<vmem>>, vector<9x64xf32>
    %c4_127 = arith.constant 4 : index
    %c0_128 = arith.constant 0 : index
    %c0_129 = arith.constant 0 : index
    %156 = vector.load %arg8[%c4_127, %c0_128, %c0_129] : memref<5x64x128xf32, #tpu.memory_space<vmem>>, vector<1x64x128xf32>
    %157 = vector.shape_cast %156 : vector<1x64x128xf32> to vector<64x128xf32>
    %cst_130 = arith.constant dense<0.000000e+00> : vector<9x128xf32>
    %158 = tpu.matmul %155, %157, %cst_130 {dimension_numbers = #tpu.dot_dimension_numbers<[1], [0], [0], [1], [0, 0, 1, 1], [], []>} : vector<9x64xf32>, vector<64x128xf32>, vector<9x128xf32> -> vector<9x128xf32>
    %159 = arith.addf %154, %158 : vector<9x128xf32>
    %cst_131 = arith.constant 0.000000e+00 : f32
    %160 = vector.broadcast %cst_131 : f32 to vector<9x128xf32>
    %161 = arith.cmpf ogt, %159, %160 : vector<9x128xf32>
    %cst_132 = arith.constant 1.000000e-01 : f32
    %162 = vector.broadcast %cst_132 : f32 to vector<9x128xf32>
    %163 = arith.mulf %162, %159 : vector<9x128xf32>
    %164 = arith.select %161, %159, %163 : vector<9x128xi1>, vector<9x128xf32>
    %c0_133 = arith.constant 0 : index
    %c0_134 = arith.constant 0 : index
    %c0_135 = arith.constant 0 : index
    %165 = vector.load %arg10[%c0_133, %c0_134, %c0_135] : memref<1x9x128xf32, #tpu.memory_space<vmem>>, vector<1x9x128xf32>
    %166 = vector.shape_cast %165 : vector<1x9x128xf32> to vector<9x128xf32>
    %167 = vector.shape_cast %164 : vector<9x128xf32> to vector<1x9x128xf32>
    tpu.vector_store %arg10[%c0_133, %c0_134, %c0_135], %167 {strides = array<i32>} : memref<1x9x128xf32, #tpu.memory_space<vmem>>, vector<1x9x128xf32>,
    return
  }
  func.func @transform_0(%arg0: i32) -> (i32, i32, i32) {
    %c0_i32 = arith.constant 0 : i32
    %c0_i32_0 = arith.constant 0 : i32
    %c0_i32_1 = arith.constant 0 : i32
    return %arg0, %c0_i32, %c0_i32_0 : i32, i32, i32
  }
  func.func @transform_1(%arg0: i32) -> (i32, i32) {
    %c0_i32 = arith.constant 0 : i32
    %c0_i32_0 = arith.constant 0 : i32
    %c0_i32_1 = arith.constant 0 : i32
    return %c0_i32, %c0_i32_0 : i32, i32
  }
  func.func @transform_2(%arg0: i32) -> (i32, i32) {
    %c0_i32 = arith.constant 0 : i32
    %c0_i32_0 = arith.constant 0 : i32
    %c0_i32_1 = arith.constant 0 : i32
    return %c0_i32, %c0_i32_0 : i32, i32
  }
  func.func @transform_3(%arg0: i32) -> (i32, i32, i32) {
    %c0_i32 = arith.constant 0 : i32
    %c0_i32_0 = arith.constant 0 : i32
    %c0_i32_1 = arith.constant 0 : i32
    %c0_i32_2 = arith.constant 0 : i32
    return %c0_i32, %c0_i32_0, %c0_i32_1 : i32, i32, i32
  }
  func.func @transform_4(%arg0: i32) -> (i32, i32) {
    %c0_i32 = arith.constant 0 : i32
    %c0_i32_0 = arith.constant 0 : i32
    %c0_i32_1 = arith.constant 0 : i32
    return %c0_i32, %c0_i32_0 : i32, i32
  }
  func.func @transform_5(%arg0: i32) -> (i32, i32, i32) {
    %c0_i32 = arith.constant 0 : i32
    %c0_i32_0 = arith.constant 0 : i32
    %c0_i32_1 = arith.constant 0 : i32
    %c0_i32_2 = arith.constant 0 : i32
    return %c0_i32, %c0_i32_0, %c0_i32_1 : i32, i32, i32
  }
  func.func @transform_6(%arg0: i32) -> (i32, i32) {
    %c0_i32 = arith.constant 0 : i32
    %c0_i32_0 = arith.constant 0 : i32
    %c0_i32_1 = arith.constant 0 : i32
    return %c0_i32, %c0_i32_0 : i32, i32
  }
  func.func @transform_7(%arg0: i32) -> (i32, i32, i32) {
    %c0_i32 = arith.constant 0 : i32
    %c0_i32_0 = arith.constant 0 : i32
    %c0_i32_1 = arith.constant 0 : i32
    %c0_i32_2 = arith.constant 0 : i32
    return %c0_i32, %c0_i32_0, %c0_i32_1 : i32, i32, i32
  }
  func.func @transform_8(%arg0: i32) -> (i32, i32) {
    %c0_i32 = arith.constant 0 : i32
    %c0_i32_0 = arith.constant 0 : i32
    %c0_i32_1 = arith.constant 0 : i32
    return %c0_i32, %c0_i32_0 : i32, i32
  }
  func.func @transform_9(%arg0: i32) -> (i32, i32, i32) {
    %c0_i32 = arith.constant 0 : i32
    %c0_i32_0 = arith.constant 0 : i32
    %c0_i32_1 = arith.constant 0 : i32
    return %arg0, %c0_i32, %c0_i32_0 : i32, i32, i32
  }
}

</mosaic_0001>

<llo_original>
// kernel: discriminator_p_pallas.1
$region0: #{discriminator_p_pallas.1}
  #allocation0 [shape = 'u32[]', space=smem, size = 0x4, offset = 0x4, fixed_abs, tag = 'smem constant byte address 0x4 - core index']
  #allocation1 [shape = 'u32[144,128]{1,0:T(1,128)}', space=vmem, size = 0x12000, scoped, tag = 'internal scratch']
  #allocation2 [shape = 'f32[251,16]{1,0:T(8,128)}', space=vmem, size = 0x20000, scoped, tag = 'scratch operand']
  #allocation3 [shape = 'f32[89,32]{1,0:T(8,128)}', space=vmem, size = 0xc000, scoped, tag = 'scratch operand']
  #allocation4 [shape = 'f32[35,64]{1,0:T(8,128)}', space=vmem, size = 0x5000, scoped, tag = 'scratch operand']
  %s0 = inlined_call_operand.vmem [shape: f32[2,243,5], index: 0, kind: input, shape index: {}]
  %s1 = inlined_call_operand.vmem [shape: f32[5,16], index: 1, kind: input, shape index: {}]
  %s2 = inlined_call_operand.vmem [shape: f32[1,16], index: 2, kind: input, shape index: {}]
  %s3 = inlined_call_operand.vmem [shape: f32[5,16,32], index: 3, kind: input, shape index: {}]
  %s4 = inlined_call_operand.vmem [shape: f32[1,32], index: 4, kind: input, shape index: {}]
  %s5 = inlined_call_operand.vmem [shape: f32[5,32,64], index: 5, kind: input, shape index: {}]
  %s6 = inlined_call_operand.vmem [shape: f32[1,64], index: 6, kind: input, shape index: {}]
  %s7 = inlined_call_operand.vmem [shape: f32[5,64,128], index: 7, kind: input, shape index: {}]
  %s8 = inlined_call_operand.vmem [shape: f32[1,128], index: 8, kind: input, shape index: {}]
  %s9 = inlined_call_operand.vmem [shape: f32[2,9,128], index: 9, kind: output, shape index: {}]
  %s10 = sld [smem:[#allocation0]]
  $region69: #{discriminator_p_pallas.1} parent=0
    _
  %s12 = ssub.s32 1, %s10
  %s13 = scalar_select 0, %s12, %s10
  loop: start=0, step=1, limit=4
  $region2: #{discriminator_p_pallas.1} parent=0 // loop_pre_header
    _
  $region3: #{discriminator_p_pallas.1} parent=0 // loop_header
    %s15 = sphi 0, %s19
    %p16 = scmp.ge.s32.totalorder %s15, 4
    %s25 = sphi 0, %s27
    %s28 = sphi 0, %s25
    %s29 = sphi 0, %s28
    %s45 = sphi 0, %s29
    %s49 = sphi 0, %s49
    %s51 = sphi 0, %s49
    %s52 = sphi 0, %s51
    %s66 = sphi 0, %s52
    %s70 = sphi 0, %s70
    %s72 = sphi 0, %s70
    %s73 = sphi 0, %s72
    %s87 = sphi 0, %s73
    %s91 = sphi 0, %s91
    %s93 = sphi 0, %s91
    %s94 = sphi 0, %s93
    %s108 = sphi 0, %s94
    %s112 = sphi 0, %s112
    %s114 = sphi 0, %s112
    %s115 = sphi 0, %s114
    %s129 = sphi 0, %s115
    %s133 = sphi 0, %s133
    %s135 = sphi 0, %s133
    %s136 = sphi 0, %s135
    %s150 = sphi 0, %s136
    %s154 = sphi 0, %s154
    %s156 = sphi 0, %s154
    %s157 = sphi 0, %s156
    %s171 = sphi 0, %s157
    %s175 = sphi 0, %s175
    %s177 = sphi 0, %s175
    %s178 = sphi 0, %s177
    %s192 = sphi 0, %s178
    %s196 = sphi 0, %s196
    %s198 = sphi 0, %s196
    %s199 = sphi 0, %s198
    %s213 = sphi 0, %s199
    %s219 = sphi 0, %s221
    %s222 = sphi 0, %s219
    %s223 = sphi 0, %s222
    %s239 = sphi 0, %s223
  $region4: #{discriminator_p_pallas.1} parent=0 // loop_header_branch
    %18 = sbr.rel (%p16) target = $region8
  $region5: #{discriminator_p_pallas.1} parent=0 // loop_body
    %s20 = ssub.s32 %s15, 1
    %s21 = ssub.s32 %s15, 2
    %s22 = sadd.s32 %s15, 1
    %s23 = ssub.s32 %s15, %s22
    %p24 = scmp.eq.s32.totalorder %s23, 0
    %s26 = sadd.s32 %s25, 1
    %s27 = scalar_select %p24, %s25, %s26
    %p30 = pneg %p24
    %p31 = scmp.eq.s32.totalorder %s15, 1
    %p32 = por %p30, %p31
    %p33 = scmp.ne.s32.totalorder %s25, %s28
    %p34 = scmp.eq.s32.totalorder %s15, 0
    %p35 = por %p33, %p34
    %p36 = scmp.ne.s32.totalorder %s25, %s28
    %p37 = scmp.eq.s32.totalorder %s20, 1
    %p38 = por %p36, %p37
    %p39 = scmp.ne.s32.totalorder %s28, %s29
    %p40 = scmp.eq.s32.totalorder %s20, 0
    %p41 = por %p39, %p40
    %p42 = scmp.ne.s32.totalorder %s28, %s29
    %p43 = scmp.eq.s32.totalorder %s21, 1
    %p44 = por %p42, %p43
    %p46 = scmp.ne.s32.totalorder %s29, %s45
    %p47 = scmp.eq.s32.totalorder %s21, 0
    %p48 = por %p46, %p47
    %s50 = sadd.s32 %s49, 1
    %p53 = scmp.eq.s32.totalorder %s15, 1
    %p54 = scmp.ne.s32.totalorder %s49, %s51
    %p55 = scmp.eq.s32.totalorder %s15, 0
    %p56 = por %p54, %p55
    %p57 = scmp.ne.s32.totalorder %s49, %s51
    %p58 = scmp.eq.s32.totalorder %s20, 1
    %p59 = por %p57, %p58
    %p60 = scmp.ne.s32.totalorder %s51, %s52
    %p61 = scmp.eq.s32.totalorder %s20, 0
    %p62 = por %p60, %p61
    %p63 = scmp.ne.s32.totalorder %s51, %s52
    %p64 = scmp.eq.s32.totalorder %s21, 1
    %p65 = por %p63, %p64
    %p67 = scmp.ne.s32.totalorder %s52, %s66
    %p68 = scmp.eq.s32.totalorder %s21, 0
    %p69 = por %p67, %p68
    %s71 = sadd.s32 %s70, 1
    %p74 = scmp.eq.s32.totalorder %s15, 1
    %p75 = scmp.ne.s32.totalorder %s70, %s72
    %p76 = scmp.eq.s32.totalorder %s15, 0
    %p77 = por %p75, %p76
    %p78 = scmp.ne.s32.totalorder %s70, %s72
    %p79 = scmp.eq.s32.totalorder %s20, 1
    %p80 = por %p78, %p79
    %p81 = scmp.ne.s32.totalorder %s72, %s73
    %p82 = scmp.eq.s32.totalorder %s20, 0
    %p83 = por %p81, %p82
    %p84 = scmp.ne.s32.totalorder %s72, %s73
    %p85 = scmp.eq.s32.totalorder %s21, 1
    %p86 = por %p84, %p85
    %p88 = scmp.ne.s32.totalorder %s73, %s87
    %p89 = scmp.eq.s32.totalorder %s21, 0
    %p90 = por %p88, %p89
    %s92 = sadd.s32 %s91, 1
    %p95 = scmp.eq.s32.totalorder %s15, 1
    %p96 = scmp.ne.s32.totalorder %s91, %s93
    %p97 = scmp.eq.s32.totalorder %s15, 0
    %p98 = por %p96, %p97
    %p99 = scmp.ne.s32.totalorder %s91, %s93
    %p100 = scmp.eq.s32.totalorder %s20, 1
    %p101 = por %p99, %p100
    %p102 = scmp.ne.s32.totalorder %s93, %s94
    %p103 = scmp.eq.s32.totalorder %s20, 0
    %p104 = por %p102, %p103
    %p105 = scmp.ne.s32.totalorder %s93, %s94
    %p106 = scmp.eq.s32.totalorder %s21, 1
    %p107 = por %p105, %p106
    %p109 = scmp.ne.s32.totalorder %s94, %s108
    %p110 = scmp.eq.s32.totalorder %s21, 0
    %p111 = por %p109, %p110
    %s113 = sadd.s32 %s112, 1
    %p116 = scmp.eq.s32.totalorder %s15, 1
    %p117 = scmp.ne.s32.totalorder %s112, %s114
    %p118 = scmp.eq.s32.totalorder %s15, 0
    %p119 = por %p117, %p118
    %p120 = scmp.ne.s32.totalorder %s112, %s114
    %p121 = scmp.eq.s32.totalorder %s20, 1
    %p122 = por %p120, %p121
    %p123 = scmp.ne.s32.totalorder %s114, %s115
    %p124 = scmp.eq.s32.totalorder %s20, 0
    %p125 = por %p123, %p124
    %p126 = scmp.ne.s32.totalorder %s114, %s115
    %p127 = scmp.eq.s32.totalorder %s21, 1
    %p128 = por %p126, %p127
    %p130 = scmp.ne.s32.totalorder %s115, %s129
    %p131 = scmp.eq.s32.totalorder %s21, 0
    %p132 = por %p130, %p131
    %s134 = sadd.s32 %s133, 1
    %p137 = scmp.eq.s32.totalorder %s15, 1
    %p138 = scmp.ne.s32.totalorder %s133, %s135
    %p139 = scmp.eq.s32.totalorder %s15, 0
    %p140 = por %p138, %p139
    %p141 = scmp.ne.s32.totalorder %s133, %s135
    %p142 = scmp.eq.s32.totalorder %s20, 1
    %p143 = por %p141, %p142
    %p144 = scmp.ne.s32.totalorder %s135, %s136
    %p145 = scmp.eq.s32.totalorder %s20, 0
    %p146 = por %p144, %p145
    %p147 = scmp.ne.s32.totalorder %s135, %s136
    %p148 = scmp.eq.s32.totalorder %s21, 1
    %p149 = por %p147, %p148
    %p151 = scmp.ne.s32.totalorder %s136, %s150
    %p152 = scmp.eq.s32.totalorder %s21, 0
    %p153 = por %p151, %p152
    %s155 = sadd.s32 %s154, 1
    %p158 = scmp.eq.s32.totalorder %s15, 1
    %p159 = scmp.ne.s32.totalorder %s154, %s156
    %p160 = scmp.eq.s32.totalorder %s15, 0
    %p161 = por %p159, %p160
    %p162 = scmp.ne.s32.totalorder %s154, %s156
    %p163 = scmp.eq.s32.totalorder %s20, 1
    %p164 = por %p162, %p163
    %p165 = scmp.ne.s32.totalorder %s156, %s157
    %p166 = scmp.eq.s32.totalorder %s20, 0
    %p167 = por %p165, %p166
    %p168 = scmp.ne.s32.totalorder %s156, %s157
    %p169 = scmp.eq.s32.totalorder %s21, 1
    %p170 = por %p168, %p169
    %p172 = scmp.ne.s32.totalorder %s157, %s171
    %p173 = scmp.eq.s32.totalorder %s21, 0
    %p174 = por %p172, %p173
    %s176 = sadd.s32 %s175, 1
    %p179 = scmp.eq.s32.totalorder %s15, 1
    %p180 = scmp.ne.s32.totalorder %s175, %s177
    %p181 = scmp.eq.s32.totalorder %s15, 0
    %p182 = por %p180, %p181
    %p183 = scmp.ne.s32.totalorder %s175, %s177
    %p184 = scmp.eq.s32.totalorder %s20, 1
    %p185 = por %p183, %p184
    %p186 = scmp.ne.s32.totalorder %s177, %s178
    %p187 = scmp.eq.s32.totalorder %s20, 0
    %p188 = por %p186, %p187
    %p189 = scmp.ne.s32.totalorder %s177, %s178
    %p190 = scmp.eq.s32.totalorder %s21, 1
    %p191 = por %p189, %p190
    %p193 = scmp.ne.s32.totalorder %s178, %s192
    %p194 = scmp.eq.s32.totalorder %s21, 0
    %p195 = por %p193, %p194
    %s197 = sadd.s32 %s196, 1
    %p200 = scmp.eq.s32.totalorder %s15, 1
    %p201 = scmp.ne.s32.totalorder %s196, %s198
    %p202 = scmp.eq.s32.totalorder %s15, 0
    %p203 = por %p201, %p202
    %p204 = scmp.ne.s32.totalorder %s196, %s198
    %p205 = scmp.eq.s32.totalorder %s20, 1
    %p206 = por %p204, %p205
    %p207 = scmp.ne.s32.totalorder %s198, %s199
    %p208 = scmp.eq.s32.totalorder %s20, 0
    %p209 = por %p207, %p208
    %p210 = scmp.ne.s32.totalorder %s198, %s199
    %p211 = scmp.eq.s32.totalorder %s21, 1
    %p212 = por %p210, %p211
    %p214 = scmp.ne.s32.totalorder %s199, %s213
    %p215 = scmp.eq.s32.totalorder %s21, 0
    %p216 = por %p214, %p215
    %s217 = ssub.s32 %s15, %s22
    %p218 = scmp.eq.s32.totalorder %s217, 0
    %s220 = sadd.s32 %s219, 1
    %s221 = scalar_select %p218, %s219, %s220
    %p224 = pneg %p218
    %p225 = scmp.eq.s32.totalorder %s15, 1
    %p226 = por %p224, %p225
    %p227 = scmp.ne.s32.totalorder %s219, %s222
    %p228 = scmp.eq.s32.totalorder %s15, 0
    %p229 = por %p227, %p228
    %p230 = scmp.ne.s32.totalorder %s219, %s222
    %p231 = scmp.eq.s32.totalorder %s20, 1
    %p232 = por %p230, %p231
    %p233 = scmp.ne.s32.totalorder %s222, %s223
    %p234 = scmp.eq.s32.totalorder %s20, 0
    %p235 = por %p233, %p234
    %p236 = scmp.ne.s32.totalorder %s222, %s223
    %p237 = scmp.eq.s32.totalorder %s21, 1
    %p238 = por %p236, %p237
    %p240 = scmp.ne.s32.totalorder %s223, %s239
    %p241 = scmp.eq.s32.totalorder %s21, 0
    %p242 = por %p240, %p241
    %p243 = scmp.le.s32.totalorder 1, %s15
    %p244 = scmp.lt.s32.totalorder %s15, 3
    %p245 = pnand %p243, %p244
    %p246 = pneg %p245
    // Predicated region
    $region9: #{discriminator_p_pallas.1} parent=5 // pred_check
      _
    $region10: #{discriminator_p_pallas.1} parent=5 // pred_check_branch
      %248 = sbr.rel (%p245) target = $region12
    $region11: #{discriminator_p_pallas.1} parent=5 // pred_region
      %s249 = ssub.s32 %s15, 1
      // Predicated region
      $region13: #{discriminator_p_pallas.1} parent=11 // pred_check
        %p250 = pneg %p62
      $region14: #{discriminator_p_pallas.1} parent=11 // pred_check_branch
        %252 = sbr.rel (%p250) target = $region16
      $region15: #{discriminator_p_pallas.1} parent=11 // pred_region
        _
      $region16: #{discriminator_p_pallas.1} parent=11 // pred_fallthru
        _
      // Predicated region
      $region17: #{discriminator_p_pallas.1} parent=11 // pred_check
        %p253 = pneg %p83
      $region18: #{discriminator_p_pallas.1} parent=11 // pred_check_branch
        %255 = sbr.rel (%p253) target = $region20
      $region19: #{discriminator_p_pallas.1} parent=11 // pred_region
        _
      $region20: #{discriminator_p_pallas.1} parent=11 // pred_fallthru
        _
      // Predicated region
      $region21: #{discriminator_p_pallas.1} parent=11 // pred_check
        %p256 = pneg %p104
      $region22: #{discriminator_p_pallas.1} parent=11 // pred_check_branch
        %258 = sbr.rel (%p256) target = $region24
      $region23: #{discriminator_p_pallas.1} parent=11 // pred_region
        _
      $region24: #{discriminator_p_pallas.1} parent=11 // pred_fallthru
        _
      // Predicated region
      $region25: #{discriminator_p_pallas.1} parent=11 // pred_check
        %p259 = pneg %p125
      $region26: #{discriminator_p_pallas.1} parent=11 // pred_check_branch
        %261 = sbr.rel (%p259) target = $region28
      $region27: #{discriminator_p_pallas.1} parent=11 // pred_region
        _
      $region28: #{discriminator_p_pallas.1} parent=11 // pred_fallthru
        _
      // Predicated region
      $region29: #{discriminator_p_pallas.1} parent=11 // pred_check
        %p262 = pneg %p146
      $region30: #{discriminator_p_pallas.1} parent=11 // pred_check_branch
        %264 = sbr.rel (%p262) target = $region32
      $region31: #{discriminator_p_pallas.1} parent=11 // pred_region
        _
      $region32: #{discriminator_p_pallas.1} parent=11 // pred_fallthru
        _
      // Predicated region
      $region33: #{discriminator_p_pallas.1} parent=11 // pred_check
        %p265 = pneg %p167
      $region34: #{discriminator_p_pallas.1} parent=11 // pred_check_branch
        %267 = sbr.rel (%p265) target = $region36
      $region35: #{discriminator_p_pallas.1} parent=11 // pred_region
        _
      $region36: #{discriminator_p_pallas.1} parent=11 // pred_fallthru
        _
      // Predicated region
      $region37: #{discriminator_p_pallas.1} parent=11 // pred_check
        %p268 = pneg %p188
      $region38: #{discriminator_p_pallas.1} parent=11 // pred_check_branch
        %270 = sbr.rel (%p268) target = $region40
      $region39: #{discriminator_p_pallas.1} parent=11 // pred_region
        _
      $region40: #{discriminator_p_pallas.1} parent=11 // pred_fallthru
        _
      // Predicated region
      $region41: #{discriminator_p_pallas.1} parent=11 // pred_check
        %p271 = pneg %p209
      $region42: #{discriminator_p_pallas.1} parent=11 // pred_check_branch
        %273 = sbr.rel (%p271) target = $region44
      $region43: #{discriminator_p_pallas.1} parent=11 // pred_region
        _
      $region44: #{discriminator_p_pallas.1} parent=11 // pred_fallthru
        _
    $region12: #{discriminator_p_pallas.1} parent=5 // pred_fallthru
      _
    %p274 = scmp.lt.s32.totalorder %s15, 2
    // Predicated region
    $region45: #{discriminator_p_pallas.1} parent=5 // pred_check
      %p275 = pneg %p274
    $region46: #{discriminator_p_pallas.1} parent=5 // pred_check_branch
      %277 = sbr.rel (%p275) target = $region48
    $region47: #{discriminator_p_pallas.1} parent=5 // pred_region
      // Predicated region
      $region49: #{discriminator_p_pallas.1} parent=47 // pred_check
        %p278 = pneg %p35
      $region50: #{discriminator_p_pallas.1} parent=47 // pred_check_branch
        %280 = sbr.rel (%p278) target = $region52
      $region51: #{discriminator_p_pallas.1} parent=47 // pred_region
        %p281 = scmp.lt.s32.totalorder %s15, 1
        %s282 = scalar_select %p281, %s15, 1
        %s283 = smul.addr %s282, 31
        %s284 = smul.addr %s283, 8
        %s285 = scalar_lea.vmem %s0, %s284
      $region52: #{discriminator_p_pallas.1} parent=47 // pred_fallthru
        _
    $region48: #{discriminator_p_pallas.1} parent=5 // pred_fallthru
      _
    %p286 = scmp.le.s32.totalorder 1, %s15
    %p287 = scmp.lt.s32.totalorder %s15, 3
    %p288 = pnand %p286, %p287
    %p289 = pneg %p288
    // Predicated region
    $region53: #{discriminator_p_pallas.1} parent=5 // pred_check
      _
    $region54: #{discriminator_p_pallas.1} parent=5 // pred_check_branch
      %291 = sbr.rel (%p288) target = $region56
    $region55: #{discriminator_p_pallas.1} parent=5 // pred_region
      %s292 = ssub.s32 %s15, 1
      %p293 = scmp.lt.s32.totalorder %s20, 1
      %s294 = scalar_select %p293, %s20, 1
      %s295 = smul.addr %s294, 31
      %s296 = smul.addr %s295, 8
      %s297 = scalar_lea.vmem %s0, %s296
      %p298 = pneg %p41
      %p299 = pneg %p38
      %p300 = pneg %p62
      %p301 = pneg %p59
      %p302 = pneg %p83
      %p303 = pneg %p80
      %p304 = pneg %p104
      %p305 = pneg %p101
      %p306 = pneg %p125
      %p307 = pneg %p122
      %p308 = pneg %p146
      %p309 = pneg %p143
      %p310 = pneg %p167
      %p311 = pneg %p164
      %p312 = pneg %p188
      %p313 = pneg %p185
      %p314 = pneg %p209
      %p315 = pneg %p206
      %p316 = pneg %p235
      %p317 = pneg %p232
      %p318 = scmp.lt.s32.totalorder %s20, 1
      %s319 = scalar_select %p318, %s20, 1
      %s320 = smul.addr %s319, 2
      %s321 = smul.addr %s320, 8
      %s322 = scalar_lea.vmem %s9, %s321
      %p323 = scmp.lt.s32.totalorder %s20, 1
      %s324 = scalar_select %p323, %s20, 1
      %s325 = smul.addr %s324, 31
      %s326 = smul.addr %s325, 8
      %s327 = scalar_lea.vmem %s0, %s326
      %p328 = scmp.lt.s32.totalorder %s20, 1
      %s329 = scalar_select %p328, %s20, 1
      %s330 = smul.addr %s329, 2
      %s331 = smul.addr %s330, 8
      %s332 = scalar_lea.vmem %s9, %s331
      %vm333 = vcmask 130048
      %334 = vst.msk [vmem:[#allocation2 + $0xf3] sm:$0xff] %vm333, 0.0
      %vm335 = vcmask 261120
      %336 = vst.msk [vmem:[#allocation3 + $0x51] sm:$0xff] %vm335, 0.0
      %vm337 = vcmask 523264
      %338 = vst.msk [vmem:[#allocation4 + $0x1b] sm:$0xff] %vm337, 0.0
      %v339 = vld [vmem:[%s327] sm:$0xff]
      %v340 = vld [vmem:[%s327 + $0x8] sm:$0xff]
      %v341 = vld [vmem:[%s327 + $0x10] sm:$0xff]
      %v342 = vld [vmem:[%s327 + $0x18] sm:$0xff]
      %v343 = vld [vmem:[%s327 + $0x20] sm:$0xff]
      %v344 = vld [vmem:[%s327 + $0x28] sm:$0xff]
      %v345 = vld [vmem:[%s327 + $0x30] sm:$0xff]
      %v346 = vld [vmem:[%s327 + $0x38] sm:$0xff]
      %v347 = vld [vmem:[%s327 + $0x40] sm:$0xff]
      %v348 = vld [vmem:[%s327 + $0x48] sm:$0xff]
      %v349 = vld [vmem:[%s327 + $0x50] sm:$0xff]
      %v350 = vld [vmem:[%s327 + $0x58] sm:$0xff]
      %v351 = vld [vmem:[%s327 + $0x60] sm:$0xff]
      %v352 = vld [vmem:[%s327 + $0x68] sm:$0xff]
      %v353 = vld [vmem:[%s327 + $0x70] sm:$0xff]
      %v354 = vld [vmem:[%s327 + $0x78] sm:$0xff]
      %v355 = vld [vmem:[%s327 + $0x80] sm:$0xff]
      %v356 = vld [vmem:[%s327 + $0x88] sm:$0xff]
      %v357 = vld [vmem:[%s327 + $0x90] sm:$0xff]
      %v358 = vld [vmem:[%s327 + $0x98] sm:$0xff]
      %v359 = vld [vmem:[%s327 + $0xa0] sm:$0xff]
      %v360 = vld [vmem:[%s327 + $0xa8] sm:$0xff]
      %v361 = vld [vmem:[%s327 + $0xb0] sm:$0xff]
      %v362 = vld [vmem:[%s327 + $0xb8] sm:$0xff]
      %v363 = vld [vmem:[%s327 + $0xc0] sm:$0xff]
      %v364 = vld [vmem:[%s327 + $0xc8] sm:$0xff]
      %v365 = vld [vmem:[%s327 + $0xd0] sm:$0xff]
      %v366 = vld [vmem:[%s327 + $0xd8] sm:$0xff]
      %v367 = vld [vmem:[%s327 + $0xe0] sm:$0xff]
      %v368 = vld [vmem:[%s327 + $0xe8] sm:$0xff]
      %v369 = vld [vmem:[%s327 + $0xf0] sm:$0x7]
      %v370 = vld [vmem:[%s1] sm:$0x1f]
      %v371 = vld [vmem:[%s2] sm:$0x1]
      %v373 = vlaneseq
      %v374 = vshrl.u32 %v373, 7
      %v375 = vsub.s32 0, %v374
      %v376 = vrot.slane %v371, %v375
      %vm378 = vcmask 39936
      %v380 = vsel %vm378, %v339, 0
      %v383 = vsel %vm378, %v340, 0
      %v386 = vsel %vm378, %v341, 0
      %v389 = vsel %vm378, %v342, 0
      %v392 = vsel %vm378, %v343, 0
      %v395 = vsel %vm378, %v344, 0
      %v398 = vsel %vm378, %v345, 0
      %v401 = vsel %vm378, %v346, 0
      %v404 = vsel %vm378, %v347, 0
      %v407 = vsel %vm378, %v348, 0
      %v410 = vsel %vm378, %v349, 0
      %v413 = vsel %vm378, %v350, 0
      %v416 = vsel %vm378, %v351, 0
      %v419 = vsel %vm378, %v352, 0
      %v422 = vsel %vm378, %v353, 0
      %v425 = vsel %vm378, %v354, 0
      %v428 = vsel %vm378, %v355, 0
      %v431 = vsel %vm378, %v356, 0
      %v434 = vsel %vm378, %v357, 0
      %v437 = vsel %vm378, %v358, 0
      %v440 = vsel %vm378, %v359, 0
      %v443 = vsel %vm378, %v360, 0
      %v446 = vsel %vm378, %v361, 0
      %v449 = vsel %vm378, %v362, 0
      %v452 = vsel %vm378, %v363, 0
      %v455 = vsel %vm378, %v364, 0
      %v458 = vsel %vm378, %v365, 0
      %v461 = vsel %vm378, %v366, 0
      %v464 = vsel %vm378, %v367, 0
      %v467 = vsel %vm378, %v368, 0
      %v470 = vsel %vm378, %v369, 0
      %vm472 = vcmask 1044480
      %v474 = vsel %vm472, %v370, 0
      %476 = vmatprep.subr.mxu0 0.0
      %477 = vmatpush1.msra.mxu0 %v474
      %478 = vmatprep.subr.mxu0 0.0
      %479 = vmatpush1.msra.mxu0 0.0
      %480 = vmatprep.subr.mxu0 0.0
      %481 = vmatpush1.msra.mxu0 0.0
      %482 = vmatprep.subr.mxu0 0.0
      %483 = vmatpush1.msra.mxu0 0.0
      %484 = vmatprep.subr.mxu0 0.0
      %485 = vmatpush1.msra.mxu0 0.0
      %486 = vmatprep.subr.mxu0 0.0
      %487 = vmatpush1.msra.mxu0 0.0
      %488 = vmatprep.subr.mxu0 0.0
      %489 = vmatpush1.msra.mxu0 0.0
      %490 = vmatprep.subr.mxu0 0.0
      %491 = vmatpush1.msra.mxu0 0.0
      %492 = vmatprep.subr.mxu0 0.0
      %493 = vmatpush1.msra.mxu0 0.0
      %494 = vmatprep.subr.mxu0 0.0
      %495 = vmatpush1.msra.mxu0 0.0
      %496 = vmatprep.subr.mxu0 0.0
      %497 = vmatpush1.msra.mxu0 0.0
      %498 = vmatprep.subr.mxu0 0.0
      %499 = vmatpush1.msra.mxu0 0.0
      %500 = vmatprep.subr.mxu0 0.0
      %501 = vmatpush1.msra.mxu0 0.0
      %502 = vmatprep.subr.mxu0 0.0
      %503 = vmatpush1.msra.mxu0 0.0
      %504 = vmatprep.subr.mxu0 0.0
      %505 = vmatpush1.msra.mxu0 0.0
      %506 = vmatprep.subr.mxu0 0.0
      %507 = vmatpush1.msra.mxu0 0.0
      %508 = vmatprep.subr.mxu0 0.0
      %509 = vmatpush1.msra.mxu0 0.0
      %510 = vmatprep.subr.mxu0 0.0
      %511 = vmatpush1.msra.mxu0 0.0
      %512 = vmatprep.subr.mxu0 0.0
      %513 = vmatpush1.msra.mxu0 0.0
      %514 = vmatprep.subr.mxu0 0.0
      %515 = vmatpush1.msra.mxu0 0.0
      %516 = vmatprep.subr.mxu0 0.0
      %517 = vmatpush1.msra.mxu0 0.0
      %518 = vmatprep.subr.mxu0 0.0
      %519 = vmatpush1.msra.mxu0 0.0
      %520 = vmatprep.subr.mxu0 0.0
      %521 = vmatpush1.msra.mxu0 0.0
      %522 = vmatprep.subr.mxu0 0.0
      %523 = vmatpush1.msra.mxu0 0.0
      %524 = vmatprep.subr.mxu0 0.0
      %525 = vmatpush1.msra.mxu0 0.0
      %526 = vmatprep.subr.mxu0 0.0
      %527 = vmatpush1.msra.mxu0 0.0
      %528 = vmatprep.subr.mxu0 0.0
      %529 = vmatpush1.msra.mxu0 0.0
      %530 = vmatprep.subr.mxu0 0.0
      %531 = vmatpush1.msra.mxu0 0.0
      %532 = vmatprep.subr.mxu0 0.0
      %533 = vmatpush1.msra.mxu0 0.0
      %534 = vmatprep.subr.mxu0 0.0
      %535 = vmatpush1.msra.mxu0 0.0
      %536 = vmatprep.subr.mxu0 0.0
      %537 = vmatpush1.msra.mxu0 0.0
      %538 = vmatprep.subr.mxu0 0.0
      %539 = vmatpush1.msra.mxu0 0.0
      %540 = vmatprep.mubr.f32.mxu0 0.0
      %541 = vmatmul.mubr.f32.gmra.mrb[0].mxu0 %v380
      %v542 = vpop.f32.mrb[0].mxu0
      %v543 = vadd.f32 %v376, %v542
      %v544 = vpop.f32.mrb[0].mxu0
      %545 = vmatprep.mubr.f32.mxu0 0.0
      %546 = vmatmul.mubr.f32.gmra.mrb[0].mxu0 %v383
      %v547 = vpop.f32.mrb[0].mxu0
      %v548 = vadd.f32 %v376, %v547
      %v549 = vpop.f32.mrb[0].mxu0
      %550 = vmatprep.mubr.f32.mxu0 0.0
      %551 = vmatmul.mubr.f32.gmra.mrb[0].mxu0 %v386
      %v552 = vpop.f32.mrb[0].mxu0
      %v553 = vadd.f32 %v376, %v552
      %v554 = vpop.f32.mrb[0].mxu0
      %555 = vmatprep.mubr.f32.mxu0 0.0
      %556 = vmatmul.mubr.f32.gmra.mrb[0].mxu0 %v389
      %v557 = vpop.f32.mrb[0].mxu0
      %v558 = vadd.f32 %v376, %v557
      %v559 = vpop.f32.mrb[0].mxu0
      %560 = vmatprep.mubr.f32.mxu0 0.0
      %561 = vmatmul.mubr.f32.gmra.mrb[0].mxu0 %v392
      %v562 = vpop.f32.mrb[0].mxu0
      %v563 = vadd.f32 %v376, %v562
      %v564 = vpop.f32.mrb[0].mxu0
      %565 = vmatprep.mubr.f32.mxu0 0.0
      %566 = vmatmul.mubr.f32.gmra.mrb[0].mxu0 %v395
      %v567 = vpop.f32.mrb[0].mxu0
      %v568 = vadd.f32 %v376, %v567
      %v569 = vpop.f32.mrb[0].mxu0
      %570 = vmatprep.mubr.f32.mxu0 0.0
      %571 = vmatmul.mubr.f32.gmra.mrb[0].mxu0 %v398
      %v572 = vpop.f32.mrb[0].mxu0
      %v573 = vadd.f32 %v376, %v572
      %v574 = vpop.f32.mrb[0].mxu0
      %575 = vmatprep.mubr.f32.mxu0 0.0
      %576 = vmatmul.mubr.f32.gmra.mrb[0].mxu0 %v401
      %v577 = vpop.f32.mrb[0].mxu0
      %v578 = vadd.f32 %v376, %v577
      %v579 = vpop.f32.mrb[0].mxu0
      %580 = vmatprep.mubr.f32.mxu0 0.0
      %581 = vmatmul.mubr.f32.gmra.mrb[0].mxu0 %v404
      %v582 = vpop.f32.mrb[0].mxu0
      %v583 = vadd.f32 %v376, %v582
      %v584 = vpop.f32.mrb[0].mxu0
      %585 = vmatprep.mubr.f32.mxu0 0.0
      %586 = vmatmul.mubr.f32.gmra.mrb[0].mxu0 %v407
      %v587 = vpop.f32.mrb[0].mxu0
      %v588 = vadd.f32 %v376, %v587
      %v589 = vpop.f32.mrb[0].mxu0
      %590 = vmatprep.mubr.f32.mxu0 0.0
      %591 = vmatmul.mubr.f32.gmra.mrb[0].mxu0 %v410
      %v592 = vpop.f32.mrb[0].mxu0
      %v593 = vadd.f32 %v376, %v592
      %v594 = vpop.f32.mrb[0].mxu0
      %595 = vmatprep.mubr.f32.mxu0 0.0
      %596 = vmatmul.mubr.f32.gmra.mrb[0].mxu0 %v413
      %v597 = vpop.f32.mrb[0].mxu0
      %v598 = vadd.f32 %v376, %v597
      %v599 = vpop.f32.mrb[0].mxu0
      %600 = vmatprep.mubr.f32.mxu0 0.0
      %601 = vmatmul.mubr.f32.gmra.mrb[0].mxu0 %v416
      %v602 = vpop.f32.mrb[0].mxu0
      %v603 = vadd.f32 %v376, %v602
      %v604 = vpop.f32.mrb[0].mxu0
      %605 = vmatprep.mubr.f32.mxu0 0.0
      %606 = vmatmul.mubr.f32.gmra.mrb[0].mxu0 %v419
      %v607 = vpop.f32.mrb[0].mxu0
      %v608 = vadd.f32 %v376, %v607
      %v609 = vpop.f32.mrb[0].mxu0
      %610 = vmatprep.mubr.f32.mxu0 0.0
      %611 = vmatmul.mubr.f32.gmra.mrb[0].mxu0 %v422
      %v612 = vpop.f32.mrb[0].mxu0
      %v613 = vadd.f32 %v376, %v612
      %v614 = vpop.f32.mrb[0].mxu0
      %615 = vmatprep.mubr.f32.mxu0 0.0
      %616 = vmatmul.mubr.f32.gmra.mrb[0].mxu0 %v425
      %v617 = vpop.f32.mrb[0].mxu0
      %v618 = vadd.f32 %v376, %v617
      %v619 = vpop.f32.mrb[0].mxu0
      %620 = vmatprep.mubr.f32.mxu0 0.0
      %621 = vmatmul.mubr.f32.gmra.mrb[0].mxu0 %v428
      %v622 = vpop.f32.mrb[0].mxu0
      %v623 = vadd.f32 %v376, %v622
      %v624 = vpop.f32.mrb[0].mxu0
      %625 = vmatprep.mubr.f32.mxu0 0.0
      %626 = vmatmul.mubr.f32.gmra.mrb[0].mxu0 %v431
      %v627 = vpop.f32.mrb[0].mxu0
      %v628 = vadd.f32 %v376, %v627
      %v629 = vpop.f32.mrb[0].mxu0
      %630 = vmatprep.mubr.f32.mxu0 0.0
      %631 = vmatmul.mubr.f32.gmra.mrb[0].mxu0 %v434
      %v632 = vpop.f32.mrb[0].mxu0
      %v633 = vadd.f32 %v376, %v632
      %v634 = vpop.f32.mrb[0].mxu0
      %635 = vmatprep.mubr.f32.mxu0 0.0
      %636 = vmatmul.mubr.f32.gmra.mrb[0].mxu0 %v437
      %v637 = vpop.f32.mrb[0].mxu0
      %v638 = vadd.f32 %v376, %v637
      %v639 = vpop.f32.mrb[0].mxu0
      %640 = vmatprep.mubr.f32.mxu0 0.0
      %641 = vmatmul.mubr.f32.gmra.mrb[0].mxu0 %v440
      %v642 = vpop.f32.mrb[0].mxu0
      %v643 = vadd.f32 %v376, %v642
      %v644 = vpop.f32.mrb[0].mxu0
      %645 = vmatprep.mubr.f32.mxu0 0.0
      %646 = vmatmul.mubr.f32.gmra.mrb[0].mxu0 %v443
      %v647 = vpop.f32.mrb[0].mxu0
      %v648 = vadd.f32 %v376, %v647
      %v649 = vpop.f32.mrb[0].mxu0
      %650 = vmatprep.mubr.f32.mxu0 0.0
      %651 = vmatmul.mubr.f32.gmra.mrb[0].mxu0 %v446
      %v652 = vpop.f32.mrb[0].mxu0
      %v653 = vadd.f32 %v376, %v652
      %v654 = vpop.f32.mrb[0].mxu0
      %655 = vmatprep.mubr.f32.mxu0 0.0
      %656 = vmatmul.mubr.f32.gmra.mrb[0].mxu0 %v449
      %v657 = vpop.f32.mrb[0].mxu0
      %v658 = vadd.f32 %v376, %v657
      %v659 = vpop.f32.mrb[0].mxu0
      %660 = vmatprep.mubr.f32.mxu0 0.0
      %661 = vmatmul.mubr.f32.gmra.mrb[0].mxu0 %v452
      %v662 = vpop.f32.mrb[0].mxu0
      %v663 = vadd.f32 %v376, %v662
      %v664 = vpop.f32.mrb[0].mxu0
      %665 = vmatprep.mubr.f32.mxu0 0.0
      %666 = vmatmul.mubr.f32.gmra.mrb[0].mxu0 %v455
      %v667 = vpop.f32.mrb[0].mxu0
      %v668 = vadd.f32 %v376, %v667
      %v669 = vpop.f32.mrb[0].mxu0
      %670 = vmatprep.mubr.f32.mxu0 0.0
      %671 = vmatmul.mubr.f32.gmra.mrb[0].mxu0 %v458
      %v672 = vpop.f32.mrb[0].mxu0
      %v673 = vadd.f32 %v376, %v672
      %v674 = vpop.f32.mrb[0].mxu0
      %675 = vmatprep.mubr.f32.mxu0 0.0
      %676 = vmatmul.mubr.f32.gmra.mrb[0].mxu0 %v461
      %v677 = vpop.f32.mrb[0].mxu0
      %v678 = vadd.f32 %v376, %v677
      %v679 = vpop.f32.mrb[0].mxu0
      %680 = vmatprep.mubr.f32.mxu0 0.0
      %681 = vmatmul.mubr.f32.gmra.mrb[0].mxu0 %v464
      %v682 = vpop.f32.mrb[0].mxu0
      %v683 = vadd.f32 %v376, %v682
      %v684 = vpop.f32.mrb[0].mxu0
      %685 = vmatprep.mubr.f32.mxu0 0.0
      %686 = vmatmul.mubr.f32.gmra.mrb[0].mxu0 %v467
      %v687 = vpop.f32.mrb[0].mxu0
      %v688 = vadd.f32 %v376, %v687
      %v689 = vpop.f32.mrb[0].mxu0
      %690 = vmatprep.mubr.f32.mxu0 0.0
      %691 = vmatmul.mubr.f32.gmra.mrb[0].mxu0 %v470
      %v692 = vpop.f32.mrb[0].mxu0
      %v693 = vadd.f32 %v376, %v692
      %v694 = vpop.f32.mrb[0].mxu0
      %695 = vdwg.mxu0
      %vm696 = vcmp.gt.f32.partialorder %v543, 0.0
      %vm697 = vcmp.gt.f32.partialorder %v548, 0.0
      %vm698 = vcmp.gt.f32.partialorder %v553, 0.0
      %vm699 = vcmp.gt.f32.partialorder %v558, 0.0
      %vm700 = vcmp.gt.f32.partialorder %v563, 0.0
      %vm701 = vcmp.gt.f32.partialorder %v568, 0.0
      %vm702 = vcmp.gt.f32.partialorder %v573, 0.0
      %vm703 = vcmp.gt.f32.partialorder %v578, 0.0
      %vm704 = vcmp.gt.f32.partialorder %v583, 0.0
      %vm705 = vcmp.gt.f32.partialorder %v588, 0.0
      %vm706 = vcmp.gt.f32.partialorder %v593, 0.0
      %vm707 = vcmp.gt.f32.partialorder %v598, 0.0
      %vm708 = vcmp.gt.f32.partialorder %v603, 0.0
      %vm709 = vcmp.gt.f32.partialorder %v608, 0.0
      %vm710 = vcmp.gt.f32.partialorder %v613, 0.0
      %vm711 = vcmp.gt.f32.partialorder %v618, 0.0
      %vm712 = vcmp.gt.f32.partialorder %v623, 0.0
      %vm713 = vcmp.gt.f32.partialorder %v628, 0.0
      %vm714 = vcmp.gt.f32.partialorder %v633, 0.0
      %vm715 = vcmp.gt.f32.partialorder %v638, 0.0
      %vm716 = vcmp.gt.f32.partialorder %v643, 0.0
      %vm717 = vcmp.gt.f32.partialorder %v648, 0.0
      %vm718 = vcmp.gt.f32.partialorder %v653, 0.0
      %vm719 = vcmp.gt.f32.partialorder %v658, 0.0
      %vm720 = vcmp.gt.f32.partialorder %v663, 0.0
      %vm721 = vcmp.gt.f32.partialorder %v668, 0.0
      %vm722 = vcmp.gt.f32.partialorder %v673, 0.0
      %vm723 = vcmp.gt.f32.partialorder %v678, 0.0
      %vm724 = vcmp.gt.f32.partialorder %v683, 0.0
      %vm725 = vcmp.gt.f32.partialorder %v688, 0.0
      %vm726 = vcmp.gt.f32.partialorder %v693, 0.0
      %v727 = vmul.f32 %v543, 0.1
      %v728 = vmul.f32 %v548, 0.1
      %v729 = vmul.f32 %v553, 0.1
      %v730 = vmul.f32 %v558, 0.1
      %v731 = vmul.f32 %v563, 0.1
      %v732 = vmul.f32 %v568, 0.1
      %v733 = vmul.f32 %v573, 0.1
      %v734 = vmul.f32 %v578, 0.1
      %v735 = vmul.f32 %v583, 0.1
      %v736 = vmul.f32 %v588, 0.1
      %v737 = vmul.f32 %v593, 0.1
      %v738 = vmul.f32 %v598, 0.1
      %v739 = vmul.f32 %v603, 0.1
      %v740 = vmul.f32 %v608, 0.1
      %v741 = vmul.f32 %v613, 0.1
      %v742 = vmul.f32 %v618, 0.1
      %v743 = vmul.f32 %v623, 0.1
      %v744 = vmul.f32 %v628, 0.1
      %v745 = vmul.f32 %v633, 0.1
      %v746 = vmul.f32 %v638, 0.1
      %v747 = vmul.f32 %v643, 0.1
      %v748 = vmul.f32 %v648, 0.1
      %v749 = vmul.f32 %v653, 0.1
      %v750 = vmul.f32 %v658, 0.1
      %v751 = vmul.f32 %v663, 0.1
      %v752 = vmul.f32 %v668, 0.1
      %v753 = vmul.f32 %v673, 0.1
      %v754 = vmul.f32 %v678, 0.1
      %v755 = vmul.f32 %v683, 0.1
      %v756 = vmul.f32 %v688, 0.1
      %v757 = vmul.f32 %v693, 0.1
      %v758 = vsel %vm696, %v543, %v727
      %v759 = vsel %vm697, %v548, %v728
      %v760 = vsel %vm698, %v553, %v729
      %v761 = vsel %vm699, %v558, %v730
      %v762 = vsel %vm700, %v563, %v731
      %v763 = vsel %vm701, %v568, %v732
      %v764 = vsel %vm702, %v573, %v733
      %v765 = vsel %vm703, %v578, %v734
      %v766 = vsel %vm704, %v583, %v735
      %v767 = vsel %vm705, %v588, %v736
      %v768 = vsel %vm706, %v593, %v737
      %v769 = vsel %vm707, %v598, %v738
      %v770 = vsel %vm708, %v603, %v739
      %v771 = vsel %vm709, %v608, %v740
      %v772 = vsel %vm710, %v613, %v741
      %v773 = vsel %vm711, %v618, %v742
      %v774 = vsel %vm712, %v623, %v743
      %v775 = vsel %vm713, %v628, %v744
      %v776 = vsel %vm714, %v633, %v745
      %v777 = vsel %vm715, %v638, %v746
      %v778 = vsel %vm716, %v643, %v747
      %v779 = vsel %vm717, %v648, %v748
      %v780 = vsel %vm718, %v653, %v749
      %v781 = vsel %vm719, %v658, %v750
      %v782 = vsel %vm720, %v663, %v751
      %v783 = vsel %vm721, %v668, %v752
      %v784 = vsel %vm722, %v673, %v753
      %v785 = vsel %vm723, %v678, %v754
      %v786 = vsel %vm724, %v683, %v755
      %v787 = vsel %vm725, %v688, %v756
      %v788 = vsel %vm726, %v693, %v757
      %v789 = vlaneseq
      %v790 = vshrl.u32 %v789, 7
      %v791 = vadd.s32 %v790, 8
      %v792 = vadd.s32 %v790, 16
      %v793 = vadd.s32 %v790, 24
      %v794 = vadd.s32 %v790, 32
      %v795 = vadd.s32 %v790, 40
      %v796 = vadd.s32 %v790, 48
      %v797 = vadd.s32 %v790, 56
      %v798 = vadd.s32 %v790, 64
      %v799 = vadd.s32 %v790, 72
      %v800 = vadd.s32 %v790, 80
      %v801 = vadd.s32 %v790, 88
      %v802 = vadd.s32 %v790, 96
      %v803 = vadd.s32 %v790, 104
      %v804 = vadd.s32 %v790, 112
      %v805 = vadd.s32 %v790, 120
      %v806 = vadd.s32 %v790, 128
      %v807 = vadd.s32 %v790, 136
      %v808 = vadd.s32 %v790, 144
      %v809 = vadd.s32 %v790, 152
      %v810 = vadd.s32 %v790, 160
      %v811 = vadd.s32 %v790, 168
      %v812 = vadd.s32 %v790, 176
      %v813 = vadd.s32 %v790, 184
      %v814 = vadd.s32 %v790, 192
      %v815 = vadd.s32 %v790, 200
      %v816 = vadd.s32 %v790, 208
      %v817 = vadd.s32 %v790, 216
      %v818 = vadd.s32 %v790, 224
      %v819 = vadd.s32 %v790, 232
      %v820 = vadd.s32 %v790, 240
      %v821 = vcvt.s32.f32 %v790
      %v822 = vcvt.s32.f32 %v791
      %v823 = vcvt.s32.f32 %v792
      %v824 = vcvt.s32.f32 %v793
      %v825 = vcvt.s32.f32 %v794
      %v826 = vcvt.s32.f32 %v795
      %v827 = vcvt.s32.f32 %v796
      %v828 = vcvt.s32.f32 %v797
      %v829 = vcvt.s32.f32 %v798
      %v830 = vcvt.s32.f32 %v799
      %v831 = vcvt.s32.f32 %v800
      %v832 = vcvt.s32.f32 %v801
      %v833 = vcvt.s32.f32 %v802
      %v834 = vcvt.s32.f32 %v803
      %v835 = vcvt.s32.f32 %v804
      %v836 = vcvt.s32.f32 %v805
      %v837 = vcvt.s32.f32 %v806
      %v838 = vcvt.s32.f32 %v807
      %v839 = vcvt.s32.f32 %v808
      %v840 = vcvt.s32.f32 %v809
      %v841 = vcvt.s32.f32 %v810
      %v842 = vcvt.s32.f32 %v811
      %v843 = vcvt.s32.f32 %v812
      %v844 = vcvt.s32.f32 %v813
      %v845 = vcvt.s32.f32 %v814
      %v846 = vcvt.s32.f32 %v815
      %v847 = vcvt.s32.f32 %v816
      %v848 = vcvt.s32.f32 %v817
      %v849 = vcvt.s32.f32 %v818
      %v850 = vcvt.s32.f32 %v819
      %v851 = vcvt.s32.f32 %v820
      %v852 = vmul.f32 %v821, 0.012345679
      %v853 = vmul.f32 %v822, 0.012345679
      %v854 = vmul.f32 %v823, 0.012345679
      %v855 = vmul.f32 %v824, 0.012345679
      %v856 = vmul.f32 %v825, 0.012345679
      %v857 = vmul.f32 %v826, 0.012345679
      %v858 = vmul.f32 %v827, 0.012345679
      %v859 = vmul.f32 %v828, 0.012345679
      %v860 = vmul.f32 %v829, 0.012345679
      %v861 = vmul.f32 %v830, 0.012345679
      %v862 = vmul.f32 %v831, 0.012345679
      %v863 = vmul.f32 %v832, 0.012345679
      %v864 = vmul.f32 %v833, 0.012345679
      %v865 = vmul.f32 %v834, 0.012345679
      %v866 = vmul.f32 %v835, 0.012345679
      %v867 = vmul.f32 %v836, 0.012345679
      %v868 = vmul.f32 %v837, 0.012345679
      %v869 = vmul.f32 %v838, 0.012345679
      %v870 = vmul.f32 %v839, 0.012345679
      %v871 = vmul.f32 %v840, 0.012345679
      %v872 = vmul.f32 %v841, 0.012345679
      %v873 = vmul.f32 %v842, 0.012345679
      %v874 = vmul.f32 %v843, 0.012345679
      %v875 = vmul.f32 %v844, 0.012345679
      %v876 = vmul.f32 %v845, 0.012345679
      %v877 = vmul.f32 %v846, 0.012345679
      %v878 = vmul.f32 %v847, 0.012345679
      %v879 = vmul.f32 %v848, 0.012345679
      %v880 = vmul.f32 %v849, 0.012345679
      %v881 = vmul.f32 %v850, 0.012345679
      %v882 = vmul.f32 %v851, 0.012345679
      %v883 = vfloor.f32 %v852
      %v884 = vfloor.f32 %v853
      %v885 = vfloor.f32 %v854
      %v886 = vfloor.f32 %v855
      %v887 = vfloor.f32 %v856
      %v888 = vfloor.f32 %v857
      %v889 = vfloor.f32 %v858
      %v890 = vfloor.f32 %v859
      %v891 = vfloor.f32 %v860
      %v892 = vfloor.f32 %v861
      %v893 = vfloor.f32 %v862
      %v894 = vfloor.f32 %v863
      %v895 = vfloor.f32 %v864
      %v896 = vfloor.f32 %v865
      %v897 = vfloor.f32 %v866
      %v898 = vfloor.f32 %v867
      %v899 = vfloor.f32 %v868
      %v900 = vfloor.f32 %v869
      %v901 = vfloor.f32 %v870
      %v902 = vfloor.f32 %v871
      %v903 = vfloor.f32 %v872
      %v904 = vfloor.f32 %v873
      %v905 = vfloor.f32 %v874
      %v906 = vfloor.f32 %v875
      %v907 = vfloor.f32 %v876
      %v908 = vfloor.f32 %v877
      %v909 = vfloor.f32 %v878
      %v910 = vfloor.f32 %v879
      %v911 = vfloor.f32 %v880
      %v912 = vfloor.f32 %v881
      %v913 = vfloor.f32 %v882
      %v914 = vmul.f32 %v883, 81.0
      %v915 = vmul.f32 %v884, 81.0
      %v916 = vmul.f32 %v885, 81.0
      %v917 = vmul.f32 %v886, 81.0
      %v918 = vmul.f32 %v887, 81.0
      %v919 = vmul.f32 %v888, 81.0
      %v920 = vmul.f32 %v889, 81.0
      %v921 = vmul.f32 %v890, 81.0
      %v922 = vmul.f32 %v891, 81.0
      %v923 = vmul.f32 %v892, 81.0
      %v924 = vmul.f32 %v893, 81.0
      %v925 = vmul.f32 %v894, 81.0
      %v926 = vmul.f32 %v895, 81.0
      %v927 = vmul.f32 %v896, 81.0
      %v928 = vmul.f32 %v897, 81.0
      %v929 = vmul.f32 %v898, 81.0
      %v930 = vmul.f32 %v899, 81.0
      %v931 = vmul.f32 %v900, 81.0
      %v932 = vmul.f32 %v901, 81.0
      %v933 = vmul.f32 %v902, 81.0
      %v934 = vmul.f32 %v903, 81.0
      %v935 = vmul.f32 %v904, 81.0
      %v936 = vmul.f32 %v905, 81.0
      %v937 = vmul.f32 %v906, 81.0
      %v938 = vmul.f32 %v907, 81.0
      %v939 = vmul.f32 %v908, 81.0
      %v940 = vmul.f32 %v909, 81.0
      %v941 = vmul.f32 %v910, 81.0
      %v942 = vmul.f32 %v911, 81.0
      %v943 = vmul.f32 %v912, 81.0
      %v944 = vmul.f32 %v913, 81.0
      %v945 = vsub.f32 %v821, %v914
      %v946 = vsub.f32 %v822, %v915
      %v947 = vsub.f32 %v823, %v916
      %v948 = vsub.f32 %v824, %v917
      %v949 = vsub.f32 %v825, %v918
      %v950 = vsub.f32 %v826, %v919
      %v951 = vsub.f32 %v827, %v920
      %v952 = vsub.f32 %v828, %v921
      %v953 = vsub.f32 %v829, %v922
      %v954 = vsub.f32 %v830, %v923
      %v955 = vsub.f32 %v831, %v924
      %v956 = vsub.f32 %v832, %v925
      %v957 = vsub.f32 %v833, %v926
      %v958 = vsub.f32 %v834, %v927
      %v959 = vsub.f32 %v835, %v928
      %v960 = vsub.f32 %v836, %v929
      %v961 = vsub.f32 %v837, %v930
      %v962 = vsub.f32 %v838, %v931
      %v963 = vsub.f32 %v839, %v932
      %v964 = vsub.f32 %v840, %v933
      %v965 = vsub.f32 %v841, %v934
      %v966 = vsub.f32 %v842, %v935
      %v967 = vsub.f32 %v843, %v936
      %v968 = vsub.f32 %v844, %v937
      %v969 = vsub.f32 %v845, %v938
      %v970 = vsub.f32 %v846, %v939
      %v971 = vsub.f32 %v847, %v940
      %v972 = vsub.f32 %v848, %v941
      %v973 = vsub.f32 %v849, %v942
      %v974 = vsub.f32 %v850, %v943
      %v975 = vsub.f32 %v851, %v944
      %vm976 = vcmp.ge.f32.partialorder %v945, 26.0
      %vm977 = vcmp.ge.f32.partialorder %v946, 26.0
      %vm978 = vcmp.ge.f32.partialorder %v947, 26.0
      %vm979 = vcmp.ge.f32.partialorder %v948, 26.0
      %vm980 = vcmp.ge.f32.partialorder %v949, 26.0
      %vm981 = vcmp.ge.f32.partialorder %v950, 26.0
      %vm982 = vcmp.ge.f32.partialorder %v951, 26.0
      %vm983 = vcmp.ge.f32.partialorder %v952, 26.0
      %vm984 = vcmp.ge.f32.partialorder %v953, 26.0
      %vm985 = vcmp.ge.f32.partialorder %v954, 26.0
      %vm986 = vcmp.ge.f32.partialorder %v955, 26.0
      %vm987 = vcmp.ge.f32.partialorder %v956, 26.0
      %vm988 = vcmp.ge.f32.partialorder %v957, 26.0
      %vm989 = vcmp.ge.f32.partialorder %v958, 26.0
      %vm990 = vcmp.ge.f32.partialorder %v959, 26.0
      %vm991 = vcmp.ge.f32.partialorder %v960, 26.0
      %vm992 = vcmp.ge.f32.partialorder %v961, 26.0
      %vm993 = vcmp.ge.f32.partialorder %v962, 26.0
      %vm994 = vcmp.ge.f32.partialorder %v963, 26.0
      %vm995 = vcmp.ge.f32.partialorder %v964, 26.0
      %vm996 = vcmp.ge.f32.partialorder %v965, 26.0
      %vm997 = vcmp.ge.f32.partialorder %v966, 26.0
      %vm998 = vcmp.ge.f32.partialorder %v967, 26.0
      %vm999 = vcmp.ge.f32.partialorder %v968, 26.0
      %vm1000 = vcmp.ge.f32.partialorder %v969, 26.0
      %vm1001 = vcmp.ge.f32.partialorder %v970, 26.0
      %vm1002 = vcmp.ge.f32.partialorder %v971, 26.0
      %vm1003 = vcmp.ge.f32.partialorder %v972, 26.0
      %vm1004 = vcmp.ge.f32.partialorder %v973, 26.0
      %vm1005 = vcmp.ge.f32.partialorder %v974, 26.0
      %vm1006 = vcmp.ge.f32.partialorder %v975, 26.0
      %vm1007 = vcmp.lt.f32.partialorder %v945, 55.0
      %vm1008 = vcmp.lt.f32.partialorder %v946, 55.0
      %vm1009 = vcmp.lt.f32.partialorder %v947, 55.0
      %vm1010 = vcmp.lt.f32.partialorder %v948, 55.0
      %vm1011 = vcmp.lt.f32.partialorder %v949, 55.0
      %vm1012 = vcmp.lt.f32.partialorder %v950, 55.0
      %vm1013 = vcmp.lt.f32.partialorder %v951, 55.0
      %vm1014 = vcmp.lt.f32.partialorder %v952, 55.0
      %vm1015 = vcmp.lt.f32.partialorder %v953, 55.0
      %vm1016 = vcmp.lt.f32.partialorder %v954, 55.0
      %vm1017 = vcmp.lt.f32.partialorder %v955, 55.0
      %vm1018 = vcmp.lt.f32.partialorder %v956, 55.0
      %vm1019 = vcmp.lt.f32.partialorder %v957, 55.0
      %vm1020 = vcmp.lt.f32.partialorder %v958, 55.0
      %vm1021 = vcmp.lt.f32.partialorder %v959, 55.0
      %vm1022 = vcmp.lt.f32.partialorder %v960, 55.0
      %vm1023 = vcmp.lt.f32.partialorder %v961, 55.0
      %vm1024 = vcmp.lt.f32.partialorder %v962, 55.0
      %vm1025 = vcmp.lt.f32.partialorder %v963, 55.0
      %vm1026 = vcmp.lt.f32.partialorder %v964, 55.0
      %vm1027 = vcmp.lt.f32.partialorder %v965, 55.0
      %vm1028 = vcmp.lt.f32.partialorder %v966, 55.0
      %vm1029 = vcmp.lt.f32.partialorder %v967, 55.0
      %vm1030 = vcmp.lt.f32.partialorder %v968, 55.0
      %vm1031 = vcmp.lt.f32.partialorder %v969, 55.0
      %vm1032 = vcmp.lt.f32.partialorder %v970, 55.0
      %vm1033 = vcmp.lt.f32.partialorder %v971, 55.0
      %vm1034 = vcmp.lt.f32.partialorder %v972, 55.0
      %vm1035 = vcmp.lt.f32.partialorder %v973, 55.0
      %vm1036 = vcmp.lt.f32.partialorder %v974, 55.0
      %vm1037 = vcmp.lt.f32.partialorder %v975, 55.0
      %vm1038 = vmand %vm976, %vm1007
      %vm1039 = vmand %vm977, %vm1008
      %vm1040 = vmand %vm978, %vm1009
      %vm1041 = vmand %vm979, %vm1010
      %vm1042 = vmand %vm980, %vm1011
      %vm1043 = vmand %vm981, %vm1012
      %vm1044 = vmand %vm982, %vm1013
      %vm1045 = vmand %vm983, %vm1014
      %vm1046 = vmand %vm984, %vm1015
      %vm1047 = vmand %vm985, %vm1016
      %vm1048 = vmand %vm986, %vm1017
      %vm1049 = vmand %vm987, %vm1018
      %vm1050 = vmand %vm988, %vm1019
      %vm1051 = vmand %vm989, %vm1020
      %vm1052 = vmand %vm990, %vm1021
      %vm1053 = vmand %vm991, %vm1022
      %vm1054 = vmand %vm992, %vm1023
      %vm1055 = vmand %vm993, %vm1024
      %vm1056 = vmand %vm994, %vm1025
      %vm1057 = vmand %vm995, %vm1026
      %vm1058 = vmand %vm996, %vm1027
      %vm1059 = vmand %vm997, %vm1028
      %vm1060 = vmand %vm998, %vm1029
      %vm1061 = vmand %vm999, %vm1030
      %vm1062 = vmand %vm1000, %vm1031
      %vm1063 = vmand %vm1001, %vm1032
      %vm1064 = vmand %vm1002, %vm1033
      %vm1065 = vmand %vm1003, %vm1034
      %vm1066 = vmand %vm1004, %vm1035
      %vm1067 = vmand %vm1005, %vm1036
      %vm1068 = vmand %vm1006, %vm1037
      %v1069 = vsel %vm1038, %v758, 0.0
      %v1070 = vsel %vm1039, %v759, 0.0
      %v1071 = vsel %vm1040, %v760, 0.0
      %v1072 = vsel %vm1041, %v761, 0.0
      %v1073 = vsel %vm1042, %v762, 0.0
      %v1074 = vsel %vm1043, %v763, 0.0
      %v1075 = vsel %vm1044, %v764, 0.0
      %v1076 = vsel %vm1045, %v765, 0.0
      %v1077 = vsel %vm1046, %v766, 0.0
      %v1078 = vsel %vm1047, %v767, 0.0
      %v1079 = vsel %vm1048, %v768, 0.0
      %v1080 = vsel %vm1049, %v769, 0.0
      %v1081 = vsel %vm1050, %v770, 0.0
      %v1082 = vsel %vm1051, %v771, 0.0
      %v1083 = vsel %vm1052, %v772, 0.0
      %v1084 = vsel %vm1053, %v773, 0.0
      %v1085 = vsel %vm1054, %v774, 0.0
      %v1086 = vsel %vm1055, %v775, 0.0
      %v1087 = vsel %vm1056, %v776, 0.0
      %v1088 = vsel %vm1057, %v777, 0.0
      %v1089 = vsel %vm1058, %v778, 0.0
      %v1090 = vsel %vm1059, %v779, 0.0
      %v1091 = vsel %vm1060, %v780, 0.0
      %v1092 = vsel %vm1061, %v781, 0.0
      %v1093 = vsel %vm1062, %v782, 0.0
      %v1094 = vsel %vm1063, %v783, 0.0
      %v1095 = vsel %vm1064, %v784, 0.0
      %v1096 = vsel %vm1065, %v785, 0.0
      %v1097 = vsel %vm1066, %v786, 0.0
      %v1098 = vsel %vm1067, %v787, 0.0
      %v1099 = vsel %vm1068, %v788, 0.0
      %1100 = vst.msk [vmem:[#allocation2] sm:$0xff] %vm333, %v1069
      %1101 = vst.msk [vmem:[#allocation2 + $0x8] sm:$0xff] %vm333, %v1070
      %1102 = vst.msk [vmem:[#allocation2 + $0x10] sm:$0xff] %vm333, %v1071
      %1103 = vst.msk [vmem:[#allocation2 + $0x18] sm:$0xff] %vm333, %v1072
      %1104 = vst.msk [vmem:[#allocation2 + $0x20] sm:$0xff] %vm333, %v1073
      %1105 = vst.msk [vmem:[#allocation2 + $0x28] sm:$0xff] %vm333, %v1074
      %1106 = vst.msk [vmem:[#allocation2 + $0x30] sm:$0xff] %vm333, %v1075
      %1107 = vst.msk [vmem:[#allocation2 + $0x38] sm:$0xff] %vm333, %v1076
      %1108 = vst.msk [vmem:[#allocation2 + $0x40] sm:$0xff] %vm333, %v1077
      %1109 = vst.msk [vmem:[#allocation2 + $0x48] sm:$0xff] %vm333, %v1078
      %1110 = vst.msk [vmem:[#allocation2 + $0x50] sm:$0xff] %vm333, %v1079
      %1111 = vst.msk [vmem:[#allocation2 + $0x58] sm:$0xff] %vm333, %v1080
      %1112 = vst.msk [vmem:[#allocation2 + $0x60] sm:$0xff] %vm333, %v1081
      %1113 = vst.msk [vmem:[#allocation2 + $0x68] sm:$0xff] %vm333, %v1082
      %1114 = vst.msk [vmem:[#allocation2 + $0x70] sm:$0xff] %vm333, %v1083
      %1115 = vst.msk [vmem:[#allocation2 + $0x78] sm:$0xff] %vm333, %v1084
      %1116 = vst.msk [vmem:[#allocation2 + $0x80] sm:$0xff] %vm333, %v1085
      %1117 = vst.msk [vmem:[#allocation2 + $0x88] sm:$0xff] %vm333, %v1086
      %1118 = vst.msk [vmem:[#allocation2 + $0x90] sm:$0xff] %vm333, %v1087
      %1119 = vst.msk [vmem:[#allocation2 + $0x98] sm:$0xff] %vm333, %v1088
      %1120 = vst.msk [vmem:[#allocation2 + $0xa0] sm:$0xff] %vm333, %v1089
      %1121 = vst.msk [vmem:[#allocation2 + $0xa8] sm:$0xff] %vm333, %v1090
      %1122 = vst.msk [vmem:[#allocation2 + $0xb0] sm:$0xff] %vm333, %v1091
      %1123 = vst.msk [vmem:[#allocation2 + $0xb8] sm:$0xff] %vm333, %v1092
      %1124 = vst.msk [vmem:[#allocation2 + $0xc0] sm:$0xff] %vm333, %v1093
      %1125 = vst.msk [vmem:[#allocation2 + $0xc8] sm:$0xff] %vm333, %v1094
      %1126 = vst.msk [vmem:[#allocation2 + $0xd0] sm:$0xff] %vm333, %v1095
      %1127 = vst.msk [vmem:[#allocation2 + $0xd8] sm:$0xff] %vm333, %v1096
      %1128 = vst.msk [vmem:[#allocation2 + $0xe0] sm:$0xff] %vm333, %v1097
      %1129 = vst.msk [vmem:[#allocation2 + $0xe8] sm:$0xff] %vm333, %v1098
      %vm1130 = vcmask 124928
      %1131 = vst.msk [vmem:[#allocation2 + $0xf0] sm:$0x7] %vm1130, %v1099
      %v1132 = vld [vmem:[%s4] sm:$0x1]
      %v1134 = vlaneseq
      %v1135 = vshrl.u32 %v1134, 7
      %v1136 = vsub.s32 0, %v1135
      %v1137 = vrot.slane %v1132, %v1136
      %v1139 = vld [vmem:[#allocation2] ss:$3 sm:$0xff]
      %s1140 = scalar_lea.vmem [#allocation2], 24
      %v1141 = vld [vmem:[%s1140] ss:$3 sm:$0xff]
      %s1142 = scalar_lea.vmem [#allocation2], 48
      %v1143 = vld [vmem:[%s1142] ss:$3 sm:$0xff]
      %s1144 = scalar_lea.vmem [#allocation2], 72
      %v1145 = vld [vmem:[%s1144] ss:$3 sm:$0xff]
      %s1146 = scalar_lea.vmem [#allocation2], 96
      %v1147 = vld [vmem:[%s1146] ss:$3 sm:$0xff]
      %s1148 = scalar_lea.vmem [#allocation2], 120
      %v1149 = vld [vmem:[%s1148] ss:$3 sm:$0xff]
      %s1150 = scalar_lea.vmem [#allocation2], 144
      %v1151 = vld [vmem:[%s1150] ss:$3 sm:$0xff]
      %s1152 = scalar_lea.vmem [#allocation2], 168
      %v1153 = vld [vmem:[%s1152] ss:$3 sm:$0xff]
      %s1154 = scalar_lea.vmem [#allocation2], 192
      %v1155 = vld [vmem:[%s1154] ss:$3 sm:$0xff]
      %s1156 = scalar_lea.vmem [#allocation2], 216
      %v1157 = vld [vmem:[%s1156] ss:$3 sm:$0xff]
      %s1158 = scalar_lea.vmem [#allocation2], 240
      %v1159 = vld [vmem:[%s1158] ss:$3 sm:$0x1]
      %v1160 = vld [vmem:[%s3] sm:$0xff]
      %v1161 = vld [vmem:[%s3 + $0x8] sm:$0xff]
      %v1163 = vsel %vm333, %v1139, 0
      %v1166 = vsel %vm333, %v1141, 0
      %v1169 = vsel %vm333, %v1143, 0
      %v1172 = vsel %vm333, %v1145, 0
      %v1175 = vsel %vm333, %v1147, 0
      %v1178 = vsel %vm333, %v1149, 0
      %v1181 = vsel %vm333, %v1151, 0
      %v1184 = vsel %vm333, %v1153, 0
      %v1187 = vsel %vm333, %v1155, 0
      %v1190 = vsel %vm333, %v1157, 0
      %v1193 = vsel %vm333, %v1159, 0
      %1195 = vmatprep.subr.mxu0 0.0
      %1196 = vmatpush1.msra.mxu0 %v1160
      %1197 = vmatprep.subr.mxu0 0.0
      %1198 = vmatpush1.msra.mxu0 %v1161
      %1199 = vmatprep.subr.mxu0 0.0
      %1200 = vmatpush1.msra.mxu0 0.0
      %1201 = vmatprep.subr.mxu0 0.0
      %1202 = vmatpush1.msra.mxu0 0.0
      %1203 = vmatprep.subr.mxu0 0.0
      %1204 = vmatpush1.msra.mxu0 0.0
      %1205 = vmatprep.subr.mxu0 0.0
      %1206 = vmatpush1.msra.mxu0 0.0
      %1207 = vmatprep.subr.mxu0 0.0
      %1208 = vmatpush1.msra.mxu0 0.0
      %1209 = vmatprep.subr.mxu0 0.0
      %1210 = vmatpush1.msra.mxu0 0.0
      %1211 = vmatprep.subr.mxu0 0.0
      %1212 = vmatpush1.msra.mxu0 0.0
      %1213 = vmatprep.subr.mxu0 0.0
      %1214 = vmatpush1.msra.mxu0 0.0
      %1215 = vmatprep.subr.mxu0 0.0
      %1216 = vmatpush1.msra.mxu0 0.0
      %1217 = vmatprep.subr.mxu0 0.0
      %1218 = vmatpush1.msra.mxu0 0.0
      %1219 = vmatprep.subr.mxu0 0.0
      %1220 = vmatpush1.msra.mxu0 0.0
      %1221 = vmatprep.subr.mxu0 0.0
      %1222 = vmatpush1.msra.mxu0 0.0
      %1223 = vmatprep.subr.mxu0 0.0
      %1224 = vmatpush1.msra.mxu0 0.0
      %1225 = vmatprep.subr.mxu0 0.0
      %1226 = vmatpush1.msra.mxu0 0.0
      %1227 = vmatprep.subr.mxu0 0.0
      %1228 = vmatpush1.msra.mxu0 0.0
      %1229 = vmatprep.subr.mxu0 0.0
      %1230 = vmatpush1.msra.mxu0 0.0
      %1231 = vmatprep.subr.mxu0 0.0
      %1232 = vmatpush1.msra.mxu0 0.0
      %1233 = vmatprep.subr.mxu0 0.0
      %1234 = vmatpush1.msra.mxu0 0.0
      %1235 = vmatprep.subr.mxu0 0.0
      %1236 = vmatpush1.msra.mxu0 0.0
      %1237 = vmatprep.subr.mxu0 0.0
      %1238 = vmatpush1.msra.mxu0 0.0
      %1239 = vmatprep.subr.mxu0 0.0
      %1240 = vmatpush1.msra.mxu0 0.0
      %1241 = vmatprep.subr.mxu0 0.0
      %1242 = vmatpush1.msra.mxu0 0.0
      %1243 = vmatprep.subr.mxu0 0.0
      %1244 = vmatpush1.msra.mxu0 0.0
      %1245 = vmatprep.subr.mxu0 0.0
      %1246 = vmatpush1.msra.mxu0 0.0
      %1247 = vmatprep.subr.mxu0 0.0
      %1248 = vmatpush1.msra.mxu0 0.0
      %1249 = vmatprep.subr.mxu0 0.0
      %1250 = vmatpush1.msra.mxu0 0.0
      %1251 = vmatprep.subr.mxu0 0.0
      %1252 = vmatpush1.msra.mxu0 0.0
      %1253 = vmatprep.subr.mxu0 0.0
      %1254 = vmatpush1.msra.mxu0 0.0
      %1255 = vmatprep.subr.mxu0 0.0
      %1256 = vmatpush1.msra.mxu0 0.0
      %1257 = vmatprep.subr.mxu0 0.0
      %1258 = vmatpush1.msra.mxu0 0.0
      %1259 = vmatprep.mubr.f32.mxu0 0.0
      %1260 = vmatmul.mubr.f32.gmra.mrb[0].mxu0 %v1163
      %v1261 = vpop.f32.mrb[0].mxu0
      %v1262 = vadd.f32 0.0, %v1261
      %v1263 = vpop.f32.mrb[0].mxu0
      %1264 = vmatprep.mubr.f32.mxu0 0.0
      %1265 = vmatmul.mubr.f32.gmra.mrb[0].mxu0 %v1166
      %v1266 = vpop.f32.mrb[0].mxu0
      %v1267 = vadd.f32 0.0, %v1266
      %v1268 = vpop.f32.mrb[0].mxu0
      %1269 = vmatprep.mubr.f32.mxu0 0.0
      %1270 = vmatmul.mubr.f32.gmra.mrb[0].mxu0 %v1169
      %v1271 = vpop.f32.mrb[0].mxu0
      %v1272 = vadd.f32 0.0, %v1271
      %v1273 = vpop.f32.mrb[0].mxu0
      %1274 = vmatprep.mubr.f32.mxu0 0.0
      %1275 = vmatmul.mubr.f32.gmra.mrb[0].mxu0 %v1172
      %v1276 = vpop.f32.mrb[0].mxu0
      %v1277 = vadd.f32 0.0, %v1276
      %v1278 = vpop.f32.mrb[0].mxu0
      %1279 = vmatprep.mubr.f32.mxu0 0.0
      %1280 = vmatmul.mubr.f32.gmra.mrb[0].mxu0 %v1175
      %v1281 = vpop.f32.mrb[0].mxu0
      %v1282 = vadd.f32 0.0, %v1281
      %v1283 = vpop.f32.mrb[0].mxu0
      %1284 = vmatprep.mubr.f32.mxu0 0.0
      %1285 = vmatmul.mubr.f32.gmra.mrb[0].mxu0 %v1178
      %v1286 = vpop.f32.mrb[0].mxu0
      %v1287 = vadd.f32 0.0, %v1286
      %v1288 = vpop.f32.mrb[0].mxu0
      %1289 = vmatprep.mubr.f32.mxu0 0.0
      %1290 = vmatmul.mubr.f32.gmra.mrb[0].mxu0 %v1181
      %v1291 = vpop.f32.mrb[0].mxu0
      %v1292 = vadd.f32 0.0, %v1291
      %v1293 = vpop.f32.mrb[0].mxu0
      %1294 = vmatprep.mubr.f32.mxu0 0.0
      %1295 = vmatmul.mubr.f32.gmra.mrb[0].mxu0 %v1184
      %v1296 = vpop.f32.mrb[0].mxu0
      %v1297 = vadd.f32 0.0, %v1296
      %v1298 = vpop.f32.mrb[0].mxu0
      %1299 = vmatprep.mubr.f32.mxu0 0.0
      %1300 = vmatmul.mubr.f32.gmra.mrb[0].mxu0 %v1187
      %v1301 = vpop.f32.mrb[0].mxu0
      %v1302 = vadd.f32 0.0, %v1301
      %v1303 = vpop.f32.mrb[0].mxu0
      %1304 = vmatprep.mubr.f32.mxu0 0.0
      %1305 = vmatmul.mubr.f32.gmra.mrb[0].mxu0 %v1190
      %v1306 = vpop.f32.mrb[0].mxu0
      %v1307 = vadd.f32 0.0, %v1306
      %v1308 = vpop.f32.mrb[0].mxu0
      %1309 = vmatprep.mubr.f32.mxu0 0.0
      %1310 = vmatmul.mubr.f32.gmra.mrb[0].mxu0 %v1193
      %v1311 = vpop.f32.mrb[0].mxu0
      %v1312 = vadd.f32 0.0, %v1311
      %v1313 = vpop.f32.mrb[0].mxu0
      %1314 = vdwg.mxu0
      %v1315 = vadd.f32 %v1137, %v1262
      %v1316 = vadd.f32 %v1137, %v1267
      %v1317 = vadd.f32 %v1137, %v1272
      %v1318 = vadd.f32 %v1137, %v1277
      %v1319 = vadd.f32 %v1137, %v1282
      %v1320 = vadd.f32 %v1137, %v1287
      %v1321 = vadd.f32 %v1137, %v1292
      %v1322 = vadd.f32 %v1137, %v1297
      %v1323 = vadd.f32 %v1137, %v1302
      %v1324 = vadd.f32 %v1137, %v1307
      %v1325 = vadd.f32 %v1137, %v1312
      %s1326 = scalar_lea.vmem [#allocation2], 1
      %v1327 = vld [vmem:[%s1326] ss:$3 sm:$0xff]
      %s1328 = scalar_lea.vmem [#allocation2], 25
      %v1329 = vld [vmem:[%s1328] ss:$3 sm:$0xff]
      %s1330 = scalar_lea.vmem [#allocation2], 49
      %v1331 = vld [vmem:[%s1330] ss:$3 sm:$0xff]
      %s1332 = scalar_lea.vmem [#allocation2], 73
      %v1333 = vld [vmem:[%s1332] ss:$3 sm:$0xff]
      %s1334 = scalar_lea.vmem [#allocation2], 97
      %v1335 = vld [vmem:[%s1334] ss:$3 sm:$0xff]
      %s1336 = scalar_lea.vmem [#allocation2], 121
      %v1337 = vld [vmem:[%s1336] ss:$3 sm:$0xff]
      %s1338 = scalar_lea.vmem [#allocation2], 145
      %v1339 = vld [vmem:[%s1338] ss:$3 sm:$0xff]
      %s1340 = scalar_lea.vmem [#allocation2], 169
      %v1341 = vld [vmem:[%s1340] ss:$3 sm:$0xff]
      %s1342 = scalar_lea.vmem [#allocation2], 193
      %v1343 = vld [vmem:[%s1342] ss:$3 sm:$0xff]
      %s1344 = scalar_lea.vmem [#allocation2], 217
      %v1345 = vld [vmem:[%s1344] ss:$3 sm:$0xff]
      %s1346 = scalar_lea.vmem [#allocation2], 241
      %v1347 = vld [vmem:[%s1346] ss:$3 sm:$0x1]
      %s1348 = scalar_lea.vmem %s3, 16
      %v1349 = vld [vmem:[%s1348] sm:$0xff]
      %v1350 = vld [vmem:[%s1348 + $0x8] sm:$0xff]
      %v1352 = vsel %vm333, %v1327, 0
      %v1355 = vsel %vm333, %v1329, 0
      %v1358 = vsel %vm333, %v1331, 0
      %v1361 = vsel %vm333, %v1333, 0
      %v1364 = vsel %vm333, %v1335, 0
      %v1367 = vsel %vm333, %v1337, 0
      %v1370 = vsel %vm333, %v1339, 0
      %v1373 = vsel %vm333, %v1341, 0
      %v1376 = vsel %vm333, %v1343, 0
      %v1379 = vsel %vm333, %v1345, 0
      %v1382 = vsel %vm333, %v1347, 0
      %1384 = vmatprep.subr.mxu0 0.0
      %1385 = vmatpush1.msra.mxu0 %v1349
      %1386 = vmatprep.subr.mxu0 0.0
      %1387 = vmatpush1.msra.mxu0 %v1350
      %1388 = vmatprep.subr.mxu0 0.0
      %1389 = vmatpush1.msra.mxu0 0.0
      %1390 = vmatprep.subr.mxu0 0.0
      %1391 = vmatpush1.msra.mxu0 0.0
      %1392 = vmatprep.subr.mxu0 0.0
      %1393 = vmatpush1.msra.mxu0 0.0
      %1394 = vmatprep.subr.mxu0 0.0
      %1395 = vmatpush1.msra.mxu0 0.0
      %1396 = vmatprep.subr.mxu0 0.0
      %1397 = vmatpush1.msra.mxu0 0.0
      %1398 = vmatprep.subr.mxu0 0.0
      %1399 = vmatpush1.msra.mxu0 0.0
      %1400 = vmatprep.subr.mxu0 0.0
      %1401 = vmatpush1.msra.mxu0 0.0
      %1402 = vmatprep.subr.mxu0 0.0
      %1403 = vmatpush1.msra.mxu0 0.0
      %1404 = vmatprep.subr.mxu0 0.0
      %1405 = vmatpush1.msra.mxu0 0.0
      %1406 = vmatprep.subr.mxu0 0.0
      %1407 = vmatpush1.msra.mxu0 0.0
      %1408 = vmatprep.subr.mxu0 0.0
      %1409 = vmatpush1.msra.mxu0 0.0
      %1410 = vmatprep.subr.mxu0 0.0
      %1411 = vmatpush1.msra.mxu0 0.0
      %1412 = vmatprep.subr.mxu0 0.0
      %1413 = vmatpush1.msra.mxu0 0.0
      %1414 = vmatprep.subr.mxu0 0.0
      %1415 = vmatpush1.msra.mxu0 0.0
      %1416 = vmatprep.subr.mxu0 0.0
      %1417 = vmatpush1.msra.mxu0 0.0
      %1418 = vmatprep.subr.mxu0 0.0
      %1419 = vmatpush1.msra.mxu0 0.0
      %1420 = vmatprep.subr.mxu0 0.0
      %1421 = vmatpush1.msra.mxu0 0.0
      %1422 = vmatprep.subr.mxu0 0.0
      %1423 = vmatpush1.msra.mxu0 0.0
      %1424 = vmatprep.subr.mxu0 0.0
      %1425 = vmatpush1.msra.mxu0 0.0
      %1426 = vmatprep.subr.mxu0 0.0
      %1427 = vmatpush1.msra.mxu0 0.0
      %1428 = vmatprep.subr.mxu0 0.0
      %1429 = vmatpush1.msra.mxu0 0.0
      %1430 = vmatprep.subr.mxu0 0.0
      %1431 = vmatpush1.msra.mxu0 0.0
      %1432 = vmatprep.subr.mxu0 0.0
      %1433 = vmatpush1.msra.mxu0 0.0
      %1434 = vmatprep.subr.mxu0 0.0
      %1435 = vmatpush1.msra.mxu0 0.0
      %1436 = vmatprep.subr.mxu0 0.0
      %1437 = vmatpush1.msra.mxu0 0.0
      %1438 = vmatprep.subr.mxu0 0.0
      %1439 = vmatpush1.msra.mxu0 0.0
      %1440 = vmatprep.subr.mxu0 0.0
      %1441 = vmatpush1.msra.mxu0 0.0
      %1442 = vmatprep.subr.mxu0 0.0
      %1443 = vmatpush1.msra.mxu0 0.0
      %1444 = vmatprep.subr.mxu0 0.0
      %1445 = vmatpush1.msra.mxu0 0.0
      %1446 = vmatprep.subr.mxu0 0.0
      %1447 = vmatpush1.msra.mxu0 0.0
      %1448 = vmatprep.mubr.f32.mxu0 0.0
      %1449 = vmatmul.mubr.f32.gmra.mrb[0].mxu0 %v1352
      %v1450 = vpop.f32.mrb[0].mxu0
      %v1451 = vadd.f32 0.0, %v1450
      %v1452 = vpop.f32.mrb[0].mxu0
      %1453 = vmatprep.mubr.f32.mxu0 0.0
      %1454 = vmatmul.mubr.f32.gmra.mrb[0].mxu0 %v1355
      %v1455 = vpop.f32.mrb[0].mxu0
      %v1456 = vadd.f32 0.0, %v1455
      %v1457 = vpop.f32.mrb[0].mxu0
      %1458 = vmatprep.mubr.f32.mxu0 0.0
      %1459 = vmatmul.mubr.f32.gmra.mrb[0].mxu0 %v1358
      %v1460 = vpop.f32.mrb[0].mxu0
      %v1461 = vadd.f32 0.0, %v1460
      %v1462 = vpop.f32.mrb[0].mxu0
      %1463 = vmatprep.mubr.f32.mxu0 0.0
      %1464 = vmatmul.mubr.f32.gmra.mrb[0].mxu0 %v1361
      %v1465 = vpop.f32.mrb[0].mxu0
      %v1466 = vadd.f32 0.0, %v1465
      %v1467 = vpop.f32.mrb[0].mxu0
      %1468 = vmatprep.mubr.f32.mxu0 0.0
      %1469 = vmatmul.mubr.f32.gmra.mrb[0].mxu0 %v1364
      %v1470 = vpop.f32.mrb[0].mxu0
      %v1471 = vadd.f32 0.0, %v1470
      %v1472 = vpop.f32.mrb[0].mxu0
      %1473 = vmatprep.mubr.f32.mxu0 0.0
      %1474 = vmatmul.mubr.f32.gmra.mrb[0].mxu0 %v1367
      %v1475 = vpop.f32.mrb[0].mxu0
      %v1476 = vadd.f32 0.0, %v1475
      %v1477 = vpop.f32.mrb[0].mxu0
      %1478 = vmatprep.mubr.f32.mxu0 0.0
      %1479 = vmatmul.mubr.f32.gmra.mrb[0].mxu0 %v1370
      %v1480 = vpop.f32.mrb[0].mxu0
      %v1481 = vadd.f32 0.0, %v1480
      %v1482 = vpop.f32.mrb[0].mxu0
      %1483 = vmatprep.mubr.f32.mxu0 0.0
      %1484 = vmatmul.mubr.f32.gmra.mrb[0].mxu0 %v1373
      %v1485 = vpop.f32.mrb[0].mxu0
      %v1486 = vadd.f32 0.0, %v1485
      %v1487 = vpop.f32.mrb[0].mxu0
      %1488 = vmatprep.mubr.f32.mxu0 0.0
      %1489 = vmatmul.mubr.f32.gmra.mrb[0].mxu0 %v1376
      %v1490 = vpop.f32.mrb[0].mxu0
      %v1491 = vadd.f32 0.0, %v1490
      %v1492 = vpop.f32.mrb[0].mxu0
      %1493 = vmatprep.mubr.f32.mxu0 0.0
      %1494 = vmatmul.mubr.f32.gmra.mrb[0].mxu0 %v1379
      %v1495 = vpop.f32.mrb[0].mxu0
      %v1496 = vadd.f32 0.0, %v1495
      %v1497 = vpop.f32.mrb[0].mxu0
      %1498 = vmatprep.mubr.f32.mxu0 0.0
      %1499 = vmatmul.mubr.f32.gmra.mrb[0].mxu0 %v1382
      %v1500 = vpop.f32.mrb[0].mxu0
      %v1501 = vadd.f32 0.0, %v1500
      %v1502 = vpop.f32.mrb[0].mxu0
      %1503 = vdwg.mxu0
      %v1504 = vadd.f32 %v1315, %v1451
      %v1505 = vadd.f32 %v1316, %v1456
      %v1506 = vadd.f32 %v1317, %v1461
      %v1507 = vadd.f32 %v1318, %v1466
      %v1508 = vadd.f32 %v1319, %v1471
      %v1509 = vadd.f32 %v1320, %v1476
      %v1510 = vadd.f32 %v1321, %v1481
      %v1511 = vadd.f32 %v1322, %v1486
      %v1512 = vadd.f32 %v1323, %v1491
      %v1513 = vadd.f32 %v1324, %v1496
      %v1514 = vadd.f32 %v1325, %v1501
      %s1515 = scalar_lea.vmem [#allocation2], 2
      %v1516 = vld [vmem:[%s1515] ss:$3 sm:$0xff]
      %s1517 = scalar_lea.vmem [#allocation2], 26
      %v1518 = vld [vmem:[%s1517] ss:$3 sm:$0xff]
      %s1519 = scalar_lea.vmem [#allocation2], 50
      %v1520 = vld [vmem:[%s1519] ss:$3 sm:$0xff]
      %s1521 = scalar_lea.vmem [#allocation2], 74
      %v1522 = vld [vmem:[%s1521] ss:$3 sm:$0xff]
      %s1523 = scalar_lea.vmem [#allocation2], 98
      %v1524 = vld [vmem:[%s1523] ss:$3 sm:$0xff]
      %s1525 = scalar_lea.vmem [#allocation2], 122
      %v1526 = vld [vmem:[%s1525] ss:$3 sm:$0xff]
      %s1527 = scalar_lea.vmem [#allocation2], 146
      %v1528 = vld [vmem:[%s1527] ss:$3 sm:$0xff]
      %s1529 = scalar_lea.vmem [#allocation2], 170
      %v1530 = vld [vmem:[%s1529] ss:$3 sm:$0xff]
      %s1531 = scalar_lea.vmem [#allocation2], 194
      %v1532 = vld [vmem:[%s1531] ss:$3 sm:$0xff]
      %s1533 = scalar_lea.vmem [#allocation2], 218
      %v1534 = vld [vmem:[%s1533] ss:$3 sm:$0xff]
      %s1535 = scalar_lea.vmem [#allocation2], 242
      %v1536 = vld [vmem:[%s1535] ss:$3 sm:$0x1]
      %s1537 = scalar_lea.vmem %s3, 32
      %v1538 = vld [vmem:[%s1537] sm:$0xff]
      %v1539 = vld [vmem:[%s1537 + $0x8] sm:$0xff]
      %v1541 = vsel %vm333, %v1516, 0
      %v1544 = vsel %vm333, %v1518, 0
      %v1547 = vsel %vm333, %v1520, 0
      %v1550 = vsel %vm333, %v1522, 0
      %v1553 = vsel %vm333, %v1524, 0
      %v1556 = vsel %vm333, %v1526, 0
      %v1559 = vsel %vm333, %v1528, 0
      %v1562 = vsel %vm333, %v1530, 0
      %v1565 = vsel %vm333, %v1532, 0
      %v1568 = vsel %vm333, %v1534, 0
      %v1571 = vsel %vm333, %v1536, 0
      %1573 = vmatprep.subr.mxu0 0.0
      %1574 = vmatpush1.msra.mxu0 %v1538
      %1575 = vmatprep.subr.mxu0 0.0
      %1576 = vmatpush1.msra.mxu0 %v1539
      %1577 = vmatprep.subr.mxu0 0.0
      %1578 = vmatpush1.msra.mxu0 0.0
      %1579 = vmatprep.subr.mxu0 0.0
      %1580 = vmatpush1.msra.mxu0 0.0
      %1581 = vmatprep.subr.mxu0 0.0
      %1582 = vmatpush1.msra.mxu0 0.0
      %1583 = vmatprep.subr.mxu0 0.0
      %1584 = vmatpush1.msra.mxu0 0.0
      %1585 = vmatprep.subr.mxu0 0.0
      %1586 = vmatpush1.msra.mxu0 0.0
      %1587 = vmatprep.subr.mxu0 0.0
      %1588 = vmatpush1.msra.mxu0 0.0
      %1589 = vmatprep.subr.mxu0 0.0
      %1590 = vmatpush1.msra.mxu0 0.0
      %1591 = vmatprep.subr.mxu0 0.0
      %1592 = vmatpush1.msra.mxu0 0.0
      %1593 = vmatprep.subr.mxu0 0.0
      %1594 = vmatpush1.msra.mxu0 0.0
      %1595 = vmatprep.subr.mxu0 0.0
      %1596 = vmatpush1.msra.mxu0 0.0
      %1597 = vmatprep.subr.mxu0 0.0
      %1598 = vmatpush1.msra.mxu0 0.0
      %1599 = vmatprep.subr.mxu0 0.0
      %1600 = vmatpush1.msra.mxu0 0.0
      %1601 = vmatprep.subr.mxu0 0.0
      %1602 = vmatpush1.msra.mxu0 0.0
      %1603 = vmatprep.subr.mxu0 0.0
      %1604 = vmatpush1.msra.mxu0 0.0
      %1605 = vmatprep.subr.mxu0 0.0
      %1606 = vmatpush1.msra.mxu0 0.0
      %1607 = vmatprep.subr.mxu0 0.0
      %1608 = vmatpush1.msra.mxu0 0.0
      %1609 = vmatprep.subr.mxu0 0.0
      %1610 = vmatpush1.msra.mxu0 0.0
      %1611 = vmatprep.subr.mxu0 0.0
      %1612 = vmatpush1.msra.mxu0 0.0
      %1613 = vmatprep.subr.mxu0 0.0
      %1614 = vmatpush1.msra.mxu0 0.0
      %1615 = vmatprep.subr.mxu0 0.0
      %1616 = vmatpush1.msra.mxu0 0.0
      %1617 = vmatprep.subr.mxu0 0.0
      %1618 = vmatpush1.msra.mxu0 0.0
      %1619 = vmatprep.subr.mxu0 0.0
      %1620 = vmatpush1.msra.mxu0 0.0
      %1621 = vmatprep.subr.mxu0 0.0
      %1622 = vmatpush1.msra.mxu0 0.0
      %1623 = vmatprep.subr.mxu0 0.0
      %1624 = vmatpush1.msra.mxu0 0.0
      %1625 = vmatprep.subr.mxu0 0.0
      %1626 = vmatpush1.msra.mxu0 0.0
      %1627 = vmatprep.subr.mxu0 0.0
      %1628 = vmatpush1.msra.mxu0 0.0
      %1629 = vmatprep.subr.mxu0 0.0
      %1630 = vmatpush1.msra.mxu0 0.0
      %1631 = vmatprep.subr.mxu0 0.0
      %1632 = vmatpush1.msra.mxu0 0.0
      %1633 = vmatprep.subr.mxu0 0.0
      %1634 = vmatpush1.msra.mxu0 0.0
      %1635 = vmatprep.subr.mxu0 0.0
      %1636 = vmatpush1.msra.mxu0 0.0
      %1637 = vmatprep.mubr.f32.mxu0 0.0
      %1638 = vmatmul.mubr.f32.gmra.mrb[0].mxu0 %v1541
      %v1639 = vpop.f32.mrb[0].mxu0
      %v1640 = vadd.f32 0.0, %v1639
      %v1641 = vpop.f32.mrb[0].mxu0
      %1642 = vmatprep.mubr.f32.mxu0 0.0
      %1643 = vmatmul.mubr.f32.gmra.mrb[0].mxu0 %v1544
      %v1644 = vpop.f32.mrb[0].mxu0
      %v1645 = vadd.f32 0.0, %v1644
      %v1646 = vpop.f32.mrb[0].mxu0
      %1647 = vmatprep.mubr.f32.mxu0 0.0
      %1648 = vmatmul.mubr.f32.gmra.mrb[0].mxu0 %v1547
      %v1649 = vpop.f32.mrb[0].mxu0
      %v1650 = vadd.f32 0.0, %v1649
      %v1651 = vpop.f32.mrb[0].mxu0
      %1652 = vmatprep.mubr.f32.mxu0 0.0
      %1653 = vmatmul.mubr.f32.gmra.mrb[0].mxu0 %v1550
      %v1654 = vpop.f32.mrb[0].mxu0
      %v1655 = vadd.f32 0.0, %v1654
      %v1656 = vpop.f32.mrb[0].mxu0
      %1657 = vmatprep.mubr.f32.mxu0 0.0
      %1658 = vmatmul.mubr.f32.gmra.mrb[0].mxu0 %v1553
      %v1659 = vpop.f32.mrb[0].mxu0
      %v1660 = vadd.f32 0.0, %v1659
      %v1661 = vpop.f32.mrb[0].mxu0
      %1662 = vmatprep.mubr.f32.mxu0 0.0
      %1663 = vmatmul.mubr.f32.gmra.mrb[0].mxu0 %v1556
      %v1664 = vpop.f32.mrb[0].mxu0
      %v1665 = vadd.f32 0.0, %v1664
      %v1666 = vpop.f32.mrb[0].mxu0
      %1667 = vmatprep.mubr.f32.mxu0 0.0
      %1668 = vmatmul.mubr.f32.gmra.mrb[0].mxu0 %v1559
      %v1669 = vpop.f32.mrb[0].mxu0
      %v1670 = vadd.f32 0.0, %v1669
      %v1671 = vpop.f32.mrb[0].mxu0
      %1672 = vmatprep.mubr.f32.mxu0 0.0
      %1673 = vmatmul.mubr.f32.gmra.mrb[0].mxu0 %v1562
      %v1674 = vpop.f32.mrb[0].mxu0
      %v1675 = vadd.f32 0.0, %v1674
      %v1676 = vpop.f32.mrb[0].mxu0
      %1677 = vmatprep.mubr.f32.mxu0 0.0
      %1678 = vmatmul.mubr.f32.gmra.mrb[0].mxu0 %v1565
      %v1679 = vpop.f32.mrb[0].mxu0
      %v1680 = vadd.f32 0.0, %v1679
      %v1681 = vpop.f32.mrb[0].mxu0
      %1682 = vmatprep.mubr.f32.mxu0 0.0
      %1683 = vmatmul.mubr.f32.gmra.mrb[0].mxu0 %v1568
      %v1684 = vpop.f32.mrb[0].mxu0
      %v1685 = vadd.f32 0.0, %v1684
      %v1686 = vpop.f32.mrb[0].mxu0
      %1687 = vmatprep.mubr.f32.mxu0 0.0
      %1688 = vmatmul.mubr.f32.gmra.mrb[0].mxu0 %v1571
      %v1689 = vpop.f32.mrb[0].mxu0
      %v1690 = vadd.f32 0.0, %v1689
      %v1691 = vpop.f32.mrb[0].mxu0
      %1692 = vdwg.mxu0
      %v1693 = vadd.f32 %v1504, %v1640
      %v1694 = vadd.f32 %v1505, %v1645
      %v1695 = vadd.f32 %v1506, %v1650
      %v1696 = vadd.f32 %v1507, %v1655
      %v1697 = vadd.f32 %v1508, %v1660
      %v1698 = vadd.f32 %v1509, %v1665
      %v1699 = vadd.f32 %v1510, %v1670
      %v1700 = vadd.f32 %v1511, %v1675
      %v1701 = vadd.f32 %v1512, %v1680
      %v1702 = vadd.f32 %v1513, %v1685
      %v1703 = vadd.f32 %v1514, %v1690
      %s1704 = scalar_lea.vmem [#allocation2], 3
      %v1705 = vld [vmem:[%s1704] ss:$3 sm:$0xff]
      %s1706 = scalar_lea.vmem [#allocation2], 27
      %v1707 = vld [vmem:[%s1706] ss:$3 sm:$0xff]
      %s1708 = scalar_lea.vmem [#allocation2], 51
      %v1709 = vld [vmem:[%s1708] ss:$3 sm:$0xff]
      %s1710 = scalar_lea.vmem [#allocation2], 75
      %v1711 = vld [vmem:[%s1710] ss:$3 sm:$0xff]
      %s1712 = scalar_lea.vmem [#allocation2], 99
      %v1713 = vld [vmem:[%s1712] ss:$3 sm:$0xff]
      %s1714 = scalar_lea.vmem [#allocation2], 123
      %v1715 = vld [vmem:[%s1714] ss:$3 sm:$0xff]
      %s1716 = scalar_lea.vmem [#allocation2], 147
      %v1717 = vld [vmem:[%s1716] ss:$3 sm:$0xff]
      %s1718 = scalar_lea.vmem [#allocation2], 171
      %v1719 = vld [vmem:[%s1718] ss:$3 sm:$0xff]
      %s1720 = scalar_lea.vmem [#allocation2], 195
      %v1721 = vld [vmem:[%s1720] ss:$3 sm:$0xff]
      %s1722 = scalar_lea.vmem [#allocation2], 219
      %v1723 = vld [vmem:[%s1722] ss:$3 sm:$0xff]
      %s1724 = scalar_lea.vmem [#allocation2], 243
      %v1725 = vld [vmem:[%s1724] ss:$3 sm:$0x1]
      %s1726 = scalar_lea.vmem %s3, 48
      %v1727 = vld [vmem:[%s1726] sm:$0xff]
      %v1728 = vld [vmem:[%s1726 + $0x8] sm:$0xff]
      %v1730 = vsel %vm333, %v1705, 0
      %v1733 = vsel %vm333, %v1707, 0
      %v1736 = vsel %vm333, %v1709, 0
      %v1739 = vsel %vm333, %v1711, 0
      %v1742 = vsel %vm333, %v1713, 0
      %v1745 = vsel %vm333, %v1715, 0
      %v1748 = vsel %vm333, %v1717, 0
      %v1751 = vsel %vm333, %v1719, 0
      %v1754 = vsel %vm333, %v1721, 0
      %v1757 = vsel %vm333, %v1723, 0
      %v1760 = vsel %vm333, %v1725, 0
      %1762 = vmatprep.subr.mxu0 0.0
      %1763 = vmatpush1.msra.mxu0 %v1727
      %1764 = vmatprep.subr.mxu0 0.0
      %1765 = vmatpush1.msra.mxu0 %v1728
      %1766 = vmatprep.subr.mxu0 0.0
      %1767 = vmatpush1.msra.mxu0 0.0
      %1768 = vmatprep.subr.mxu0 0.0
      %1769 = vmatpush1.msra.mxu0 0.0
      %1770 = vmatprep.subr.mxu0 0.0
      %1771 = vmatpush1.msra.mxu0 0.0
      %1772 = vmatprep.subr.mxu0 0.0
      %1773 = vmatpush1.msra.mxu0 0.0
      %1774 = vmatprep.subr.mxu0 0.0
      %1775 = vmatpush1.msra.mxu0 0.0
      %1776 = vmatprep.subr.mxu0 0.0
      %1777 = vmatpush1.msra.mxu0 0.0
      %1778 = vmatprep.subr.mxu0 0.0
      %1779 = vmatpush1.msra.mxu0 0.0
      %1780 = vmatprep.subr.mxu0 0.0
      %1781 = vmatpush1.msra.mxu0 0.0
      %1782 = vmatprep.subr.mxu0 0.0
      %1783 = vmatpush1.msra.mxu0 0.0
      %1784 = vmatprep.subr.mxu0 0.0
      %1785 = vmatpush1.msra.mxu0 0.0
      %1786 = vmatprep.subr.mxu0 0.0
      %1787 = vmatpush1.msra.mxu0 0.0
      %1788 = vmatprep.subr.mxu0 0.0
      %1789 = vmatpush1.msra.mxu0 0.0
      %1790 = vmatprep.subr.mxu0 0.0
      %1791 = vmatpush1.msra.mxu0 0.0
      %1792 = vmatprep.subr.mxu0 0.0
      %1793 = vmatpush1.msra.mxu0 0.0
      %1794 = vmatprep.subr.mxu0 0.0
      %1795 = vmatpush1.msra.mxu0 0.0
      %1796 = vmatprep.subr.mxu0 0.0
      %1797 = vmatpush1.msra.mxu0 0.0
      %1798 = vmatprep.subr.mxu0 0.0
      %1799 = vmatpush1.msra.mxu0 0.0
      %1800 = vmatprep.subr.mxu0 0.0
      %1801 = vmatpush1.msra.mxu0 0.0
      %1802 = vmatprep.subr.mxu0 0.0
      %1803 = vmatpush1.msra.mxu0 0.0
      %1804 = vmatprep.subr.mxu0 0.0
      %1805 = vmatpush1.msra.mxu0 0.0
      %1806 = vmatprep.subr.mxu0 0.0
      %1807 = vmatpush1.msra.mxu0 0.0
      %1808 = vmatprep.subr.mxu0 0.0
      %1809 = vmatpush1.msra.mxu0 0.0
      %1810 = vmatprep.subr.mxu0 0.0
      %1811 = vmatpush1.msra.mxu0 0.0
      %1812 = vmatprep.subr.mxu0 0.0
      %1813 = vmatpush1.msra.mxu0 0.0
      %1814 = vmatprep.subr.mxu0 0.0
      %1815 = vmatpush1.msra.mxu0 0.0
      %1816 = vmatprep.subr.mxu0 0.0
      %1817 = vmatpush1.msra.mxu0 0.0
      %1818 = vmatprep.subr.mxu0 0.0
      %1819 = vmatpush1.msra.mxu0 0.0
      %1820 = vmatprep.subr.mxu0 0.0
      %1821 = vmatpush1.msra.mxu0 0.0
      %1822 = vmatprep.subr.mxu0 0.0
      %1823 = vmatpush1.msra.mxu0 0.0
      %1824 = vmatprep.subr.mxu0 0.0
      %1825 = vmatpush1.msra.mxu0 0.0
      %1826 = vmatprep.mubr.f32.mxu0 0.0
      %1827 = vmatmul.mubr.f32.gmra.mrb[0].mxu0 %v1730
      %v1828 = vpop.f32.mrb[0].mxu0
      %v1829 = vadd.f32 0.0, %v1828
      %v1830 = vpop.f32.mrb[0].mxu0
      %1831 = vmatprep.mubr.f32.mxu0 0.0
      %1832 = vmatmul.mubr.f32.gmra.mrb[0].mxu0 %v1733
      %v1833 = vpop.f32.mrb[0].mxu0
      %v1834 = vadd.f32 0.0, %v1833
      %v1835 = vpop.f32.mrb[0].mxu0
      %1836 = vmatprep.mubr.f32.mxu0 0.0
      %1837 = vmatmul.mubr.f32.gmra.mrb[0].mxu0 %v1736
      %v1838 = vpop.f32.mrb[0].mxu0
      %v1839 = vadd.f32 0.0, %v1838
      %v1840 = vpop.f32.mrb[0].mxu0
      %1841 = vmatprep.mubr.f32.mxu0 0.0
      %1842 = vmatmul.mubr.f32.gmra.mrb[0].mxu0 %v1739
      %v1843 = vpop.f32.mrb[0].mxu0
      %v1844 = vadd.f32 0.0, %v1843
      %v1845 = vpop.f32.mrb[0].mxu0
      %1846 = vmatprep.mubr.f32.mxu0 0.0
      %1847 = vmatmul.mubr.f32.gmra.mrb[0].mxu0 %v1742
      %v1848 = vpop.f32.mrb[0].mxu0
      %v1849 = vadd.f32 0.0, %v1848
      %v1850 = vpop.f32.mrb[0].mxu0
      %1851 = vmatprep.mubr.f32.mxu0 0.0
      %1852 = vmatmul.mubr.f32.gmra.mrb[0].mxu0 %v1745
      %v1853 = vpop.f32.mrb[0].mxu0
      %v1854 = vadd.f32 0.0, %v1853
      %v1855 = vpop.f32.mrb[0].mxu0
      %1856 = vmatprep.mubr.f32.mxu0 0.0
      %1857 = vmatmul.mubr.f32.gmra.mrb[0].mxu0 %v1748
      %v1858 = vpop.f32.mrb[0].mxu0
      %v1859 = vadd.f32 0.0, %v1858
      %v1860 = vpop.f32.mrb[0].mxu0
      %1861 = vmatprep.mubr.f32.mxu0 0.0
      %1862 = vmatmul.mubr.f32.gmra.mrb[0].mxu0 %v1751
      %v1863 = vpop.f32.mrb[0].mxu0
      %v1864 = vadd.f32 0.0, %v1863
      %v1865 = vpop.f32.mrb[0].mxu0
      %1866 = vmatprep.mubr.f32.mxu0 0.0
      %1867 = vmatmul.mubr.f32.gmra.mrb[0].mxu0 %v1754
      %v1868 = vpop.f32.mrb[0].mxu0
      %v1869 = vadd.f32 0.0, %v1868
      %v1870 = vpop.f32.mrb[0].mxu0
      %1871 = vmatprep.mubr.f32.mxu0 0.0
      %1872 = vmatmul.mubr.f32.gmra.mrb[0].mxu0 %v1757
      %v1873 = vpop.f32.mrb[0].mxu0
      %v1874 = vadd.f32 0.0, %v1873
      %v1875 = vpop.f32.mrb[0].mxu0
      %1876 = vmatprep.mubr.f32.mxu0 0.0
      %1877 = vmatmul.mubr.f32.gmra.mrb[0].mxu0 %v1760
      %v1878 = vpop.f32.mrb[0].mxu0
      %v1879 = vadd.f32 0.0, %v1878
      %v1880 = vpop.f32.mrb[0].mxu0
      %1881 = vdwg.mxu0
      %v1882 = vadd.f32 %v1693, %v1829
      %v1883 = vadd.f32 %v1694, %v1834
      %v1884 = vadd.f32 %v1695, %v1839
      %v1885 = vadd.f32 %v1696, %v1844
      %v1886 = vadd.f32 %v1697, %v1849
      %v1887 = vadd.f32 %v1698, %v1854
      %v1888 = vadd.f32 %v1699, %v1859
      %v1889 = vadd.f32 %v1700, %v1864
      %v1890 = vadd.f32 %v1701, %v1869
      %v1891 = vadd.f32 %v1702, %v1874
      %v1892 = vadd.f32 %v1703, %v1879
      %s1893 = scalar_lea.vmem [#allocation2], 4
      %v1894 = vld [vmem:[%s1893] ss:$3 sm:$0xff]
      %s1895 = scalar_lea.vmem [#allocation2], 28
      %v1896 = vld [vmem:[%s1895] ss:$3 sm:$0xff]
      %s1897 = scalar_lea.vmem [#allocation2], 52
      %v1898 = vld [vmem:[%s1897] ss:$3 sm:$0xff]
      %s1899 = scalar_lea.vmem [#allocation2], 76
      %v1900 = vld [vmem:[%s1899] ss:$3 sm:$0xff]
      %s1901 = scalar_lea.vmem [#allocation2], 100
      %v1902 = vld [vmem:[%s1901] ss:$3 sm:$0xff]
      %s1903 = scalar_lea.vmem [#allocation2], 124
      %v1904 = vld [vmem:[%s1903] ss:$3 sm:$0xff]
      %s1905 = scalar_lea.vmem [#allocation2], 148
      %v1906 = vld [vmem:[%s1905] ss:$3 sm:$0xff]
      %s1907 = scalar_lea.vmem [#allocation2], 172
      %v1908 = vld [vmem:[%s1907] ss:$3 sm:$0xff]
      %s1909 = scalar_lea.vmem [#allocation2], 196
      %v1910 = vld [vmem:[%s1909] ss:$3 sm:$0xff]
      %s1911 = scalar_lea.vmem [#allocation2], 220
      %v1912 = vld [vmem:[%s1911] ss:$3 sm:$0xff]
      %s1913 = scalar_lea.vmem [#allocation2], 244
      %v1914 = vld [vmem:[%s1913] ss:$3 sm:$0x1]
      %s1915 = scalar_lea.vmem %s3, 64
      %v1916 = vld [vmem:[%s1915] sm:$0xff]
      %v1917 = vld [vmem:[%s1915 + $0x8] sm:$0xff]
      %v1919 = vsel %vm333, %v1894, 0
      %v1922 = vsel %vm333, %v1896, 0
      %v1925 = vsel %vm333, %v1898, 0
      %v1928 = vsel %vm333, %v1900, 0
      %v1931 = vsel %vm333, %v1902, 0
      %v1934 = vsel %vm333, %v1904, 0
      %v1937 = vsel %vm333, %v1906, 0
      %v1940 = vsel %vm333, %v1908, 0
      %v1943 = vsel %vm333, %v1910, 0
      %v1946 = vsel %vm333, %v1912, 0
      %v1949 = vsel %vm333, %v1914, 0
      %1951 = vmatprep.subr.mxu0 0.0
      %1952 = vmatpush1.msra.mxu0 %v1916
      %1953 = vmatprep.subr.mxu0 0.0
      %1954 = vmatpush1.msra.mxu0 %v1917
      %1955 = vmatprep.subr.mxu0 0.0
      %1956 = vmatpush1.msra.mxu0 0.0
      %1957 = vmatprep.subr.mxu0 0.0
      %1958 = vmatpush1.msra.mxu0 0.0
      %1959 = vmatprep.subr.mxu0 0.0
      %1960 = vmatpush1.msra.mxu0 0.0
      %1961 = vmatprep.subr.mxu0 0.0
      %1962 = vmatpush1.msra.mxu0 0.0
      %1963 = vmatprep.subr.mxu0 0.0
      %1964 = vmatpush1.msra.mxu0 0.0
      %1965 = vmatprep.subr.mxu0 0.0
      %1966 = vmatpush1.msra.mxu0 0.0
      %1967 = vmatprep.subr.mxu0 0.0
      %1968 = vmatpush1.msra.mxu0 0.0
      %1969 = vmatprep.subr.mxu0 0.0
      %1970 = vmatpush1.msra.mxu0 0.0
      %1971 = vmatprep.subr.mxu0 0.0
      %1972 = vmatpush1.msra.mxu0 0.0
      %1973 = vmatprep.subr.mxu0 0.0
      %1974 = vmatpush1.msra.mxu0 0.0
      %1975 = vmatprep.subr.mxu0 0.0
      %1976 = vmatpush1.msra.mxu0 0.0
      %1977 = vmatprep.subr.mxu0 0.0
      %1978 = vmatpush1.msra.mxu0 0.0
      %1979 = vmatprep.subr.mxu0 0.0
      %1980 = vmatpush1.msra.mxu0 0.0
      %1981 = vmatprep.subr.mxu0 0.0
      %1982 = vmatpush1.msra.mxu0 0.0
      %1983 = vmatprep.subr.mxu0 0.0
      %1984 = vmatpush1.msra.mxu0 0.0
      %1985 = vmatprep.subr.mxu0 0.0
      %1986 = vmatpush1.msra.mxu0 0.0
      %1987 = vmatprep.subr.mxu0 0.0
      %1988 = vmatpush1.msra.mxu0 0.0
      %1989 = vmatprep.subr.mxu0 0.0
      %1990 = vmatpush1.msra.mxu0 0.0
      %1991 = vmatprep.subr.mxu0 0.0
      %1992 = vmatpush1.msra.mxu0 0.0
      %1993 = vmatprep.subr.mxu0 0.0
      %1994 = vmatpush1.msra.mxu0 0.0
      %1995 = vmatprep.subr.mxu0 0.0
      %1996 = vmatpush1.msra.mxu0 0.0
      %1997 = vmatprep.subr.mxu0 0.0
      %1998 = vmatpush1.msra.mxu0 0.0
      %1999 = vmatprep.subr.mxu0 0.0
      %2000 = vmatpush1.msra.mxu0 0.0
      %2001 = vmatprep.subr.mxu0 0.0
      %2002 = vmatpush1.msra.mxu0 0.0
      %2003 = vmatprep.subr.mxu0 0.0
      %2004 = vmatpush1.msra.mxu0 0.0
      %2005 = vmatprep.subr.mxu0 0.0
      %2006 = vmatpush1.msra.mxu0 0.0
      %2007 = vmatprep.subr.mxu0 0.0
      %2008 = vmatpush1.msra.mxu0 0.0
      %2009 = vmatprep.subr.mxu0 0.0
      %2010 = vmatpush1.msra.mxu0 0.0
      %2011 = vmatprep.subr.mxu0 0.0
      %2012 = vmatpush1.msra.mxu0 0.0
      %2013 = vmatprep.subr.mxu0 0.0
      %2014 = vmatpush1.msra.mxu0 0.0
      %2015 = vmatprep.mubr.f32.mxu0 0.0
      %2016 = vmatmul.mubr.f32.gmra.mrb[0].mxu0 %v1919
      %v2017 = vpop.f32.mrb[0].mxu0
      %v2018 = vadd.f32 0.0, %v2017
      %v2019 = vpop.f32.mrb[0].mxu0
      %2020 = vmatprep.mubr.f32.mxu0 0.0
      %2021 = vmatmul.mubr.f32.gmra.mrb[0].mxu0 %v1922
      %v2022 = vpop.f32.mrb[0].mxu0
      %v2023 = vadd.f32 0.0, %v2022
      %v2024 = vpop.f32.mrb[0].mxu0
      %2025 = vmatprep.mubr.f32.mxu0 0.0
      %2026 = vmatmul.mubr.f32.gmra.mrb[0].mxu0 %v1925
      %v2027 = vpop.f32.mrb[0].mxu0
      %v2028 = vadd.f32 0.0, %v2027
      %v2029 = vpop.f32.mrb[0].mxu0
      %2030 = vmatprep.mubr.f32.mxu0 0.0
      %2031 = vmatmul.mubr.f32.gmra.mrb[0].mxu0 %v1928
      %v2032 = vpop.f32.mrb[0].mxu0
      %v2033 = vadd.f32 0.0, %v2032
      %v2034 = vpop.f32.mrb[0].mxu0
      %2035 = vmatprep.mubr.f32.mxu0 0.0
      %2036 = vmatmul.mubr.f32.gmra.mrb[0].mxu0 %v1931
      %v2037 = vpop.f32.mrb[0].mxu0
      %v2038 = vadd.f32 0.0, %v2037
      %v2039 = vpop.f32.mrb[0].mxu0
      %2040 = vmatprep.mubr.f32.mxu0 0.0
      %2041 = vmatmul.mubr.f32.gmra.mrb[0].mxu0 %v1934
      %v2042 = vpop.f32.mrb[0].mxu0
      %v2043 = vadd.f32 0.0, %v2042
      %v2044 = vpop.f32.mrb[0].mxu0
      %2045 = vmatprep.mubr.f32.mxu0 0.0
      %2046 = vmatmul.mubr.f32.gmra.mrb[0].mxu0 %v1937
      %v2047 = vpop.f32.mrb[0].mxu0
      %v2048 = vadd.f32 0.0, %v2047
      %v2049 = vpop.f32.mrb[0].mxu0
      %2050 = vmatprep.mubr.f32.mxu0 0.0
      %2051 = vmatmul.mubr.f32.gmra.mrb[0].mxu0 %v1940
      %v2052 = vpop.f32.mrb[0].mxu0
      %v2053 = vadd.f32 0.0, %v2052
      %v2054 = vpop.f32.mrb[0].mxu0
      %2055 = vmatprep.mubr.f32.mxu0 0.0
      %2056 = vmatmul.mubr.f32.gmra.mrb[0].mxu0 %v1943
      %v2057 = vpop.f32.mrb[0].mxu0
      %v2058 = vadd.f32 0.0, %v2057
      %v2059 = vpop.f32.mrb[0].mxu0
      %2060 = vmatprep.mubr.f32.mxu0 0.0
      %2061 = vmatmul.mubr.f32.gmra.mrb[0].mxu0 %v1946
      %v2062 = vpop.f32.mrb[0].mxu0
      %v2063 = vadd.f32 0.0, %v2062
      %v2064 = vpop.f32.mrb[0].mxu0
      %2065 = vmatprep.mubr.f32.mxu0 0.0
      %2066 = vmatmul.mubr.f32.gmra.mrb[0].mxu0 %v1949
      %v2067 = vpop.f32.mrb[0].mxu0
      %v2068 = vadd.f32 0.0, %v2067
      %v2069 = vpop.f32.mrb[0].mxu0
      %2070 = vdwg.mxu0
      %v2071 = vadd.f32 %v1882, %v2018
      %v2072 = vadd.f32 %v1883, %v2023
      %v2073 = vadd.f32 %v1884, %v2028
      %v2074 = vadd.f32 %v1885, %v2033
      %v2075 = vadd.f32 %v1886, %v2038
      %v2076 = vadd.f32 %v1887, %v2043
      %v2077 = vadd.f32 %v1888, %v2048
      %v2078 = vadd.f32 %v1889, %v2053
      %v2079 = vadd.f32 %v1890, %v2058
      %v2080 = vadd.f32 %v1891, %v2063
      %v2081 = vadd.f32 %v1892, %v2068
      %vm2082 = vcmp.gt.f32.partialorder %v2071, 0.0
      %vm2083 = vcmp.gt.f32.partialorder %v2072, 0.0
      %vm2084 = vcmp.gt.f32.partialorder %v2073, 0.0
      %vm2085 = vcmp.gt.f32.partialorder %v2074, 0.0
      %vm2086 = vcmp.gt.f32.partialorder %v2075, 0.0
      %vm2087 = vcmp.gt.f32.partialorder %v2076, 0.0
      %vm2088 = vcmp.gt.f32.partialorder %v2077, 0.0
      %vm2089 = vcmp.gt.f32.partialorder %v2078, 0.0
      %vm2090 = vcmp.gt.f32.partialorder %v2079, 0.0
      %vm2091 = vcmp.gt.f32.partialorder %v2080, 0.0
      %vm2092 = vcmp.gt.f32.partialorder %v2081, 0.0
      %v2093 = vmul.f32 %v2071, 0.1
      %v2094 = vmul.f32 %v2072, 0.1
      %v2095 = vmul.f32 %v2073, 0.1
      %v2096 = vmul.f32 %v2074, 0.1
      %v2097 = vmul.f32 %v2075, 0.1
      %v2098 = vmul.f32 %v2076, 0.1
      %v2099 = vmul.f32 %v2077, 0.1
      %v2100 = vmul.f32 %v2078, 0.1
      %v2101 = vmul.f32 %v2079, 0.1
      %v2102 = vmul.f32 %v2080, 0.1
      %v2103 = vmul.f32 %v2081, 0.1
      %v2104 = vsel %vm2082, %v2071, %v2093
      %v2105 = vsel %vm2083, %v2072, %v2094
      %v2106 = vsel %vm2084, %v2073, %v2095
      %v2107 = vsel %vm2085, %v2074, %v2096
      %v2108 = vsel %vm2086, %v2075, %v2097
      %v2109 = vsel %vm2087, %v2076, %v2098
      %v2110 = vsel %vm2088, %v2077, %v2099
      %v2111 = vsel %vm2089, %v2078, %v2100
      %v2112 = vsel %vm2090, %v2079, %v2101
      %v2113 = vsel %vm2091, %v2080, %v2102
      %v2114 = vsel %vm2092, %v2081, %v2103
      %v2115 = vmul.f32 %v821, 0.037037037
      %v2116 = vmul.f32 %v822, 0.037037037
      %v2117 = vmul.f32 %v823, 0.037037037
      %v2118 = vmul.f32 %v824, 0.037037037
      %v2119 = vmul.f32 %v825, 0.037037037
      %v2120 = vmul.f32 %v826, 0.037037037
      %v2121 = vmul.f32 %v827, 0.037037037
      %v2122 = vmul.f32 %v828, 0.037037037
      %v2123 = vmul.f32 %v829, 0.037037037
      %v2124 = vmul.f32 %v830, 0.037037037
      %v2125 = vmul.f32 %v831, 0.037037037
      %v2126 = vfloor.f32 %v2115
      %v2127 = vfloor.f32 %v2116
      %v2128 = vfloor.f32 %v2117
      %v2129 = vfloor.f32 %v2118
      %v2130 = vfloor.f32 %v2119
      %v2131 = vfloor.f32 %v2120
      %v2132 = vfloor.f32 %v2121
      %v2133 = vfloor.f32 %v2122
      %v2134 = vfloor.f32 %v2123
      %v2135 = vfloor.f32 %v2124
      %v2136 = vfloor.f32 %v2125
      %v2137 = vmul.f32 %v2126, 27.0
      %v2138 = vmul.f32 %v2127, 27.0
      %v2139 = vmul.f32 %v2128, 27.0
      %v2140 = vmul.f32 %v2129, 27.0
      %v2141 = vmul.f32 %v2130, 27.0
      %v2142 = vmul.f32 %v2131, 27.0
      %v2143 = vmul.f32 %v2132, 27.0
      %v2144 = vmul.f32 %v2133, 27.0
      %v2145 = vmul.f32 %v2134, 27.0
      %v2146 = vmul.f32 %v2135, 27.0
      %v2147 = vmul.f32 %v2136, 27.0
      %v2148 = vsub.f32 %v821, %v2137
      %v2149 = vsub.f32 %v822, %v2138
      %v2150 = vsub.f32 %v823, %v2139
      %v2151 = vsub.f32 %v824, %v2140
      %v2152 = vsub.f32 %v825, %v2141
      %v2153 = vsub.f32 %v826, %v2142
      %v2154 = vsub.f32 %v827, %v2143
      %v2155 = vsub.f32 %v828, %v2144
      %v2156 = vsub.f32 %v829, %v2145
      %v2157 = vsub.f32 %v830, %v2146
      %v2158 = vsub.f32 %v831, %v2147
      %vm2159 = vcmp.ge.f32.partialorder %v2148, 8.0
      %vm2160 = vcmp.ge.f32.partialorder %v2149, 8.0
      %vm2161 = vcmp.ge.f32.partialorder %v2150, 8.0
      %vm2162 = vcmp.ge.f32.partialorder %v2151, 8.0
      %vm2163 = vcmp.ge.f32.partialorder %v2152, 8.0
      %vm2164 = vcmp.ge.f32.partialorder %v2153, 8.0
      %vm2165 = vcmp.ge.f32.partialorder %v2154, 8.0
      %vm2166 = vcmp.ge.f32.partialorder %v2155, 8.0
      %vm2167 = vcmp.ge.f32.partialorder %v2156, 8.0
      %vm2168 = vcmp.ge.f32.partialorder %v2157, 8.0
      %vm2169 = vcmp.ge.f32.partialorder %v2158, 8.0
      %vm2170 = vcmp.lt.f32.partialorder %v2148, 18.0
      %vm2171 = vcmp.lt.f32.partialorder %v2149, 18.0
      %vm2172 = vcmp.lt.f32.partialorder %v2150, 18.0
      %vm2173 = vcmp.lt.f32.partialorder %v2151, 18.0
      %vm2174 = vcmp.lt.f32.partialorder %v2152, 18.0
      %vm2175 = vcmp.lt.f32.partialorder %v2153, 18.0
      %vm2176 = vcmp.lt.f32.partialorder %v2154, 18.0
      %vm2177 = vcmp.lt.f32.partialorder %v2155, 18.0
      %vm2178 = vcmp.lt.f32.partialorder %v2156, 18.0
      %vm2179 = vcmp.lt.f32.partialorder %v2157, 18.0
      %vm2180 = vcmp.lt.f32.partialorder %v2158, 18.0
      %vm2181 = vmand %vm2159, %vm2170
      %vm2182 = vmand %vm2160, %vm2171
      %vm2183 = vmand %vm2161, %vm2172
      %vm2184 = vmand %vm2162, %vm2173
      %vm2185 = vmand %vm2163, %vm2174
      %vm2186 = vmand %vm2164, %vm2175
      %vm2187 = vmand %vm2165, %vm2176
      %vm2188 = vmand %vm2166, %vm2177
      %vm2189 = vmand %vm2167, %vm2178
      %vm2190 = vmand %vm2168, %vm2179
      %vm2191 = vmand %vm2169, %vm2180
      %v2192 = vsel %vm2181, %v2104, 0.0
      %v2193 = vsel %vm2182, %v2105, 0.0
      %v2194 = vsel %vm2183, %v2106, 0.0
      %v2195 = vsel %vm2184, %v2107, 0.0
      %v2196 = vsel %vm2185, %v2108, 0.0
      %v2197 = vsel %vm2186, %v2109, 0.0
      %v2198 = vsel %vm2187, %v2110, 0.0
      %v2199 = vsel %vm2188, %v2111, 0.0
      %v2200 = vsel %vm2189, %v2112, 0.0
      %v2201 = vsel %vm2190, %v2113, 0.0
      %v2202 = vsel %vm2191, %v2114, 0.0
      %2203 = vst.msk [vmem:[#allocation3] sm:$0xff] %vm335, %v2192
      %2204 = vst.msk [vmem:[#allocation3 + $0x8] sm:$0xff] %vm335, %v2193
      %2205 = vst.msk [vmem:[#allocation3 + $0x10] sm:$0xff] %vm335, %v2194
      %2206 = vst.msk [vmem:[#allocation3 + $0x18] sm:$0xff] %vm335, %v2195
      %2207 = vst.msk [vmem:[#allocation3 + $0x20] sm:$0xff] %vm335, %v2196
      %2208 = vst.msk [vmem:[#allocation3 + $0x28] sm:$0xff] %vm335, %v2197
      %2209 = vst.msk [vmem:[#allocation3 + $0x30] sm:$0xff] %vm335, %v2198
      %2210 = vst.msk [vmem:[#allocation3 + $0x38] sm:$0xff] %vm335, %v2199
      %2211 = vst.msk [vmem:[#allocation3 + $0x40] sm:$0xff] %vm335, %v2200
      %2212 = vst.msk [vmem:[#allocation3 + $0x48] sm:$0xff] %vm335, %v2201
      %vm2213 = vcmask 253952
      %2214 = vst.msk [vmem:[#allocation3 + $0x50] sm:$0x1] %vm2213, %v2202
      %v2215 = vld [vmem:[%s6] sm:$0x1]
      %v2217 = vlaneseq
      %v2218 = vshrl.u32 %v2217, 7
      %v2219 = vsub.s32 0, %v2218
      %v2220 = vrot.slane %v2215, %v2219
      %v2222 = vld [vmem:[#allocation3] ss:$3 sm:$0xff]
      %s2223 = scalar_lea.vmem [#allocation3], 24
      %v2224 = vld [vmem:[%s2223] ss:$3 sm:$0xff]
      %s2225 = scalar_lea.vmem [#allocation3], 48
      %v2226 = vld [vmem:[%s2225] ss:$3 sm:$0xff]
      %s2227 = scalar_lea.vmem [#allocation3], 72
      %v2228 = vld [vmem:[%s2227] ss:$3 sm:$0x7]
      %v2229 = vld [vmem:[%s5] sm:$0xff]
      %v2230 = vld [vmem:[%s5 + $0x8] sm:$0xff]
      %v2231 = vld [vmem:[%s5 + $0x10] sm:$0xff]
      %v2232 = vld [vmem:[%s5 + $0x18] sm:$0xff]
      %v2234 = vsel %vm335, %v2222, 0
      %v2237 = vsel %vm335, %v2224, 0
      %v2240 = vsel %vm335, %v2226, 0
      %v2243 = vsel %vm335, %v2228, 0
      %2245 = vmatprep.subr.mxu0 0.0
      %2246 = vmatpush1.msra.mxu0 %v2229
      %2247 = vmatprep.subr.mxu0 0.0
      %2248 = vmatpush1.msra.mxu0 %v2230
      %2249 = vmatprep.subr.mxu0 0.0
      %2250 = vmatpush1.msra.mxu0 %v2231
      %2251 = vmatprep.subr.mxu0 0.0
      %2252 = vmatpush1.msra.mxu0 %v2232
      %2253 = vmatprep.subr.mxu0 0.0
      %2254 = vmatpush1.msra.mxu0 0.0
      %2255 = vmatprep.subr.mxu0 0.0
      %2256 = vmatpush1.msra.mxu0 0.0
      %2257 = vmatprep.subr.mxu0 0.0
      %2258 = vmatpush1.msra.mxu0 0.0
      %2259 = vmatprep.subr.mxu0 0.0
      %2260 = vmatpush1.msra.mxu0 0.0
      %2261 = vmatprep.subr.mxu0 0.0
      %2262 = vmatpush1.msra.mxu0 0.0
      %2263 = vmatprep.subr.mxu0 0.0
      %2264 = vmatpush1.msra.mxu0 0.0
      %2265 = vmatprep.subr.mxu0 0.0
      %2266 = vmatpush1.msra.mxu0 0.0
      %2267 = vmatprep.subr.mxu0 0.0
      %2268 = vmatpush1.msra.mxu0 0.0
      %2269 = vmatprep.subr.mxu0 0.0
      %2270 = vmatpush1.msra.mxu0 0.0
      %2271 = vmatprep.subr.mxu0 0.0
      %2272 = vmatpush1.msra.mxu0 0.0
      %2273 = vmatprep.subr.mxu0 0.0
      %2274 = vmatpush1.msra.mxu0 0.0
      %2275 = vmatprep.subr.mxu0 0.0
      %2276 = vmatpush1.msra.mxu0 0.0
      %2277 = vmatprep.subr.mxu0 0.0
      %2278 = vmatpush1.msra.mxu0 0.0
      %2279 = vmatprep.subr.mxu0 0.0
      %2280 = vmatpush1.msra.mxu0 0.0
      %2281 = vmatprep.subr.mxu0 0.0
      %2282 = vmatpush1.msra.mxu0 0.0
      %2283 = vmatprep.subr.mxu0 0.0
      %2284 = vmatpush1.msra.mxu0 0.0
      %2285 = vmatprep.subr.mxu0 0.0
      %2286 = vmatpush1.msra.mxu0 0.0
      %2287 = vmatprep.subr.mxu0 0.0
      %2288 = vmatpush1.msra.mxu0 0.0
      %2289 = vmatprep.subr.mxu0 0.0
      %2290 = vmatpush1.msra.mxu0 0.0
      %2291 = vmatprep.subr.mxu0 0.0
      %2292 = vmatpush1.msra.mxu0 0.0
      %2293 = vmatprep.subr.mxu0 0.0
      %2294 = vmatpush1.msra.mxu0 0.0
      %2295 = vmatprep.subr.mxu0 0.0
      %2296 = vmatpush1.msra.mxu0 0.0
      %2297 = vmatprep.subr.mxu0 0.0
      %2298 = vmatpush1.msra.mxu0 0.0
      %2299 = vmatprep.subr.mxu0 0.0
      %2300 = vmatpush1.msra.mxu0 0.0
      %2301 = vmatprep.subr.mxu0 0.0
      %2302 = vmatpush1.msra.mxu0 0.0
      %2303 = vmatprep.subr.mxu0 0.0
      %2304 = vmatpush1.msra.mxu0 0.0
      %2305 = vmatprep.subr.mxu0 0.0
      %2306 = vmatpush1.msra.mxu0 0.0
      %2307 = vmatprep.subr.mxu0 0.0
      %2308 = vmatpush1.msra.mxu0 0.0
      %2309 = vmatprep.mubr.f32.mxu0 0.0
      %2310 = vmatmul.mubr.f32.gmra.mrb[0].mxu0 %v2234
      %v2311 = vpop.f32.mrb[0].mxu0
      %v2312 = vadd.f32 0.0, %v2311
      %v2313 = vpop.f32.mrb[0].mxu0
      %2314 = vmatprep.mubr.f32.mxu0 0.0
      %2315 = vmatmul.mubr.f32.gmra.mrb[0].mxu0 %v2237
      %v2316 = vpop.f32.mrb[0].mxu0
      %v2317 = vadd.f32 0.0, %v2316
      %v2318 = vpop.f32.mrb[0].mxu0
      %2319 = vmatprep.mubr.f32.mxu0 0.0
      %2320 = vmatmul.mubr.f32.gmra.mrb[0].mxu0 %v2240
      %v2321 = vpop.f32.mrb[0].mxu0
      %v2322 = vadd.f32 0.0, %v2321
      %v2323 = vpop.f32.mrb[0].mxu0
      %2324 = vmatprep.mubr.f32.mxu0 0.0
      %2325 = vmatmul.mubr.f32.gmra.mrb[0].mxu0 %v2243
      %v2326 = vpop.f32.mrb[0].mxu0
      %v2327 = vadd.f32 0.0, %v2326
      %v2328 = vpop.f32.mrb[0].mxu0
      %2329 = vdwg.mxu0
      %v2330 = vadd.f32 %v2220, %v2312
      %v2331 = vadd.f32 %v2220, %v2317
      %v2332 = vadd.f32 %v2220, %v2322
      %v2333 = vadd.f32 %v2220, %v2327
      %s2334 = scalar_lea.vmem [#allocation3], 1
      %v2335 = vld [vmem:[%s2334] ss:$3 sm:$0xff]
      %s2336 = scalar_lea.vmem [#allocation3], 25
      %v2337 = vld [vmem:[%s2336] ss:$3 sm:$0xff]
      %s2338 = scalar_lea.vmem [#allocation3], 49
      %v2339 = vld [vmem:[%s2338] ss:$3 sm:$0xff]
      %s2340 = scalar_lea.vmem [#allocation3], 73
      %v2341 = vld [vmem:[%s2340] ss:$3 sm:$0x7]
      %s2342 = scalar_lea.vmem %s5, 32
      %v2343 = vld [vmem:[%s2342] sm:$0xff]
      %v2344 = vld [vmem:[%s2342 + $0x8] sm:$0xff]
      %v2345 = vld [vmem:[%s2342 + $0x10] sm:$0xff]
      %v2346 = vld [vmem:[%s2342 + $0x18] sm:$0xff]
      %v2348 = vsel %vm335, %v2335, 0
      %v2351 = vsel %vm335, %v2337, 0
      %v2354 = vsel %vm335, %v2339, 0
      %v2357 = vsel %vm335, %v2341, 0
      %2359 = vmatprep.subr.mxu0 0.0
      %2360 = vmatpush1.msra.mxu0 %v2343
      %2361 = vmatprep.subr.mxu0 0.0
      %2362 = vmatpush1.msra.mxu0 %v2344
      %2363 = vmatprep.subr.mxu0 0.0
      %2364 = vmatpush1.msra.mxu0 %v2345
      %2365 = vmatprep.subr.mxu0 0.0
      %2366 = vmatpush1.msra.mxu0 %v2346
      %2367 = vmatprep.subr.mxu0 0.0
      %2368 = vmatpush1.msra.mxu0 0.0
      %2369 = vmatprep.subr.mxu0 0.0
      %2370 = vmatpush1.msra.mxu0 0.0
      %2371 = vmatprep.subr.mxu0 0.0
      %2372 = vmatpush1.msra.mxu0 0.0
      %2373 = vmatprep.subr.mxu0 0.0
      %2374 = vmatpush1.msra.mxu0 0.0
      %2375 = vmatprep.subr.mxu0 0.0
      %2376 = vmatpush1.msra.mxu0 0.0
      %2377 = vmatprep.subr.mxu0 0.0
      %2378 = vmatpush1.msra.mxu0 0.0
      %2379 = vmatprep.subr.mxu0 0.0
      %2380 = vmatpush1.msra.mxu0 0.0
      %2381 = vmatprep.subr.mxu0 0.0
      %2382 = vmatpush1.msra.mxu0 0.0
      %2383 = vmatprep.subr.mxu0 0.0
      %2384 = vmatpush1.msra.mxu0 0.0
      %2385 = vmatprep.subr.mxu0 0.0
      %2386 = vmatpush1.msra.mxu0 0.0
      %2387 = vmatprep.subr.mxu0 0.0
      %2388 = vmatpush1.msra.mxu0 0.0
      %2389 = vmatprep.subr.mxu0 0.0
      %2390 = vmatpush1.msra.mxu0 0.0
      %2391 = vmatprep.subr.mxu0 0.0
      %2392 = vmatpush1.msra.mxu0 0.0
      %2393 = vmatprep.subr.mxu0 0.0
      %2394 = vmatpush1.msra.mxu0 0.0
      %2395 = vmatprep.subr.mxu0 0.0
      %2396 = vmatpush1.msra.mxu0 0.0
      %2397 = vmatprep.subr.mxu0 0.0
      %2398 = vmatpush1.msra.mxu0 0.0
      %2399 = vmatprep.subr.mxu0 0.0
      %2400 = vmatpush1.msra.mxu0 0.0
      %2401 = vmatprep.subr.mxu0 0.0
      %2402 = vmatpush1.msra.mxu0 0.0
      %2403 = vmatprep.subr.mxu0 0.0
      %2404 = vmatpush1.msra.mxu0 0.0
      %2405 = vmatprep.subr.mxu0 0.0
      %2406 = vmatpush1.msra.mxu0 0.0
      %2407 = vmatprep.subr.mxu0 0.0
      %2408 = vmatpush1.msra.mxu0 0.0
      %2409 = vmatprep.subr.mxu0 0.0
      %2410 = vmatpush1.msra.mxu0 0.0
      %2411 = vmatprep.subr.mxu0 0.0
      %2412 = vmatpush1.msra.mxu0 0.0
      %2413 = vmatprep.subr.mxu0 0.0
      %2414 = vmatpush1.msra.mxu0 0.0
      %2415 = vmatprep.subr.mxu0 0.0
      %2416 = vmatpush1.msra.mxu0 0.0
      %2417 = vmatprep.subr.mxu0 0.0
      %2418 = vmatpush1.msra.mxu0 0.0
      %2419 = vmatprep.subr.mxu0 0.0
      %2420 = vmatpush1.msra.mxu0 0.0
      %2421 = vmatprep.subr.mxu0 0.0
      %2422 = vmatpush1.msra.mxu0 0.0
      %2423 = vmatprep.mubr.f32.mxu0 0.0
      %2424 = vmatmul.mubr.f32.gmra.mrb[0].mxu0 %v2348
      %v2425 = vpop.f32.mrb[0].mxu0
      %v2426 = vadd.f32 0.0, %v2425
      %v2427 = vpop.f32.mrb[0].mxu0
      %2428 = vmatprep.mubr.f32.mxu0 0.0
      %2429 = vmatmul.mubr.f32.gmra.mrb[0].mxu0 %v2351
      %v2430 = vpop.f32.mrb[0].mxu0
      %v2431 = vadd.f32 0.0, %v2430
      %v2432 = vpop.f32.mrb[0].mxu0
      %2433 = vmatprep.mubr.f32.mxu0 0.0
      %2434 = vmatmul.mubr.f32.gmra.mrb[0].mxu0 %v2354
      %v2435 = vpop.f32.mrb[0].mxu0
      %v2436 = vadd.f32 0.0, %v2435
      %v2437 = vpop.f32.mrb[0].mxu0
      %2438 = vmatprep.mubr.f32.mxu0 0.0
      %2439 = vmatmul.mubr.f32.gmra.mrb[0].mxu0 %v2357
      %v2440 = vpop.f32.mrb[0].mxu0
      %v2441 = vadd.f32 0.0, %v2440
      %v2442 = vpop.f32.mrb[0].mxu0
      %2443 = vdwg.mxu0
      %v2444 = vadd.f32 %v2330, %v2426
      %v2445 = vadd.f32 %v2331, %v2431
      %v2446 = vadd.f32 %v2332, %v2436
      %v2447 = vadd.f32 %v2333, %v2441
      %s2448 = scalar_lea.vmem [#allocation3], 2
      %v2449 = vld [vmem:[%s2448] ss:$3 sm:$0xff]
      %s2450 = scalar_lea.vmem [#allocation3], 26
      %v2451 = vld [vmem:[%s2450] ss:$3 sm:$0xff]
      %s2452 = scalar_lea.vmem [#allocation3], 50
      %v2453 = vld [vmem:[%s2452] ss:$3 sm:$0xff]
      %s2454 = scalar_lea.vmem [#allocation3], 74
      %v2455 = vld [vmem:[%s2454] ss:$3 sm:$0x7]
      %s2456 = scalar_lea.vmem %s5, 64
      %v2457 = vld [vmem:[%s2456] sm:$0xff]
      %v2458 = vld [vmem:[%s2456 + $0x8] sm:$0xff]
      %v2459 = vld [vmem:[%s2456 + $0x10] sm:$0xff]
      %v2460 = vld [vmem:[%s2456 + $0x18] sm:$0xff]
      %v2462 = vsel %vm335, %v2449, 0
      %v2465 = vsel %vm335, %v2451, 0
      %v2468 = vsel %vm335, %v2453, 0
      %v2471 = vsel %vm335, %v2455, 0
      %2473 = vmatprep.subr.mxu0 0.0
      %2474 = vmatpush1.msra.mxu0 %v2457
      %2475 = vmatprep.subr.mxu0 0.0
      %2476 = vmatpush1.msra.mxu0 %v2458
      %2477 = vmatprep.subr.mxu0 0.0
      %2478 = vmatpush1.msra.mxu0 %v2459
      %2479 = vmatprep.subr.mxu0 0.0
      %2480 = vmatpush1.msra.mxu0 %v2460
      %2481 = vmatprep.subr.mxu0 0.0
      %2482 = vmatpush1.msra.mxu0 0.0
      %2483 = vmatprep.subr.mxu0 0.0
      %2484 = vmatpush1.msra.mxu0 0.0
      %2485 = vmatprep.subr.mxu0 0.0
      %2486 = vmatpush1.msra.mxu0 0.0
      %2487 = vmatprep.subr.mxu0 0.0
      %2488 = vmatpush1.msra.mxu0 0.0
      %2489 = vmatprep.subr.mxu0 0.0
      %2490 = vmatpush1.msra.mxu0 0.0
      %2491 = vmatprep.subr.mxu0 0.0
      %2492 = vmatpush1.msra.mxu0 0.0
      %2493 = vmatprep.subr.mxu0 0.0
      %2494 = vmatpush1.msra.mxu0 0.0
      %2495 = vmatprep.subr.mxu0 0.0
      %2496 = vmatpush1.msra.mxu0 0.0
      %2497 = vmatprep.subr.mxu0 0.0
      %2498 = vmatpush1.msra.mxu0 0.0
      %2499 = vmatprep.subr.mxu0 0.0
      %2500 = vmatpush1.msra.mxu0 0.0
      %2501 = vmatprep.subr.mxu0 0.0
      %2502 = vmatpush1.msra.mxu0 0.0
      %2503 = vmatprep.subr.mxu0 0.0
      %2504 = vmatpush1.msra.mxu0 0.0
      %2505 = vmatprep.subr.mxu0 0.0
      %2506 = vmatpush1.msra.mxu0 0.0
      %2507 = vmatprep.subr.mxu0 0.0
      %2508 = vmatpush1.msra.mxu0 0.0
      %2509 = vmatprep.subr.mxu0 0.0
      %2510 = vmatpush1.msra.mxu0 0.0
      %2511 = vmatprep.subr.mxu0 0.0
      %2512 = vmatpush1.msra.mxu0 0.0
      %2513 = vmatprep.subr.mxu0 0.0
      %2514 = vmatpush1.msra.mxu0 0.0
      %2515 = vmatprep.subr.mxu0 0.0
      %2516 = vmatpush1.msra.mxu0 0.0
      %2517 = vmatprep.subr.mxu0 0.0
      %2518 = vmatpush1.msra.mxu0 0.0
      %2519 = vmatprep.subr.mxu0 0.0
      %2520 = vmatpush1.msra.mxu0 0.0
      %2521 = vmatprep.subr.mxu0 0.0
      %2522 = vmatpush1.msra.mxu0 0.0
      %2523 = vmatprep.subr.mxu0 0.0
      %2524 = vmatpush1.msra.mxu0 0.0
      %2525 = vmatprep.subr.mxu0 0.0
      %2526 = vmatpush1.msra.mxu0 0.0
      %2527 = vmatprep.subr.mxu0 0.0
      %2528 = vmatpush1.msra.mxu0 0.0
      %2529 = vmatprep.subr.mxu0 0.0
      %2530 = vmatpush1.msra.mxu0 0.0
      %2531 = vmatprep.subr.mxu0 0.0
      %2532 = vmatpush1.msra.mxu0 0.0
      %2533 = vmatprep.subr.mxu0 0.0
      %2534 = vmatpush1.msra.mxu0 0.0
      %2535 = vmatprep.subr.mxu0 0.0
      %2536 = vmatpush1.msra.mxu0 0.0
      %2537 = vmatprep.mubr.f32.mxu0 0.0
      %2538 = vmatmul.mubr.f32.gmra.mrb[0].mxu0 %v2462
      %v2539 = vpop.f32.mrb[0].mxu0
      %v2540 = vadd.f32 0.0, %v2539
      %v2541 = vpop.f32.mrb[0].mxu0
      %2542 = vmatprep.mubr.f32.mxu0 0.0
      %2543 = vmatmul.mubr.f32.gmra.mrb[0].mxu0 %v2465
      %v2544 = vpop.f32.mrb[0].mxu0
      %v2545 = vadd.f32 0.0, %v2544
      %v2546 = vpop.f32.mrb[0].mxu0
      %2547 = vmatprep.mubr.f32.mxu0 0.0
      %2548 = vmatmul.mubr.f32.gmra.mrb[0].mxu0 %v2468
      %v2549 = vpop.f32.mrb[0].mxu0
      %v2550 = vadd.f32 0.0, %v2549
      %v2551 = vpop.f32.mrb[0].mxu0
      %2552 = vmatprep.mubr.f32.mxu0 0.0
      %2553 = vmatmul.mubr.f32.gmra.mrb[0].mxu0 %v2471
      %v2554 = vpop.f32.mrb[0].mxu0
      %v2555 = vadd.f32 0.0, %v2554
      %v2556 = vpop.f32.mrb[0].mxu0
      %2557 = vdwg.mxu0
      %v2558 = vadd.f32 %v2444, %v2540
      %v2559 = vadd.f32 %v2445, %v2545
      %v2560 = vadd.f32 %v2446, %v2550
      %v2561 = vadd.f32 %v2447, %v2555
      %s2562 = scalar_lea.vmem [#allocation3], 3
      %v2563 = vld [vmem:[%s2562] ss:$3 sm:$0xff]
      %s2564 = scalar_lea.vmem [#allocation3], 27
      %v2565 = vld [vmem:[%s2564] ss:$3 sm:$0xff]
      %s2566 = scalar_lea.vmem [#allocation3], 51
      %v2567 = vld [vmem:[%s2566] ss:$3 sm:$0xff]
      %s2568 = scalar_lea.vmem [#allocation3], 75
      %v2569 = vld [vmem:[%s2568] ss:$3 sm:$0x7]
      %s2570 = scalar_lea.vmem %s5, 96
      %v2571 = vld [vmem:[%s2570] sm:$0xff]
      %v2572 = vld [vmem:[%s2570 + $0x8] sm:$0xff]
      %v2573 = vld [vmem:[%s2570 + $0x10] sm:$0xff]
      %v2574 = vld [vmem:[%s2570 + $0x18] sm:$0xff]
      %v2576 = vsel %vm335, %v2563, 0
      %v2579 = vsel %vm335, %v2565, 0
      %v2582 = vsel %vm335, %v2567, 0
      %v2585 = vsel %vm335, %v2569, 0
      %2587 = vmatprep.subr.mxu0 0.0
      %2588 = vmatpush1.msra.mxu0 %v2571
      %2589 = vmatprep.subr.mxu0 0.0
      %2590 = vmatpush1.msra.mxu0 %v2572
      %2591 = vmatprep.subr.mxu0 0.0
      %2592 = vmatpush1.msra.mxu0 %v2573
      %2593 = vmatprep.subr.mxu0 0.0
      %2594 = vmatpush1.msra.mxu0 %v2574
      %2595 = vmatprep.subr.mxu0 0.0
      %2596 = vmatpush1.msra.mxu0 0.0
      %2597 = vmatprep.subr.mxu0 0.0
      %2598 = vmatpush1.msra.mxu0 0.0
      %2599 = vmatprep.subr.mxu0 0.0
      %2600 = vmatpush1.msra.mxu0 0.0
      %2601 = vmatprep.subr.mxu0 0.0
      %2602 = vmatpush1.msra.mxu0 0.0
      %2603 = vmatprep.subr.mxu0 0.0
      %2604 = vmatpush1.msra.mxu0 0.0
      %2605 = vmatprep.subr.mxu0 0.0
      %2606 = vmatpush1.msra.mxu0 0.0
      %2607 = vmatprep.subr.mxu0 0.0
      %2608 = vmatpush1.msra.mxu0 0.0
      %2609 = vmatprep.subr.mxu0 0.0
      %2610 = vmatpush1.msra.mxu0 0.0
      %2611 = vmatprep.subr.mxu0 0.0
      %2612 = vmatpush1.msra.mxu0 0.0
      %2613 = vmatprep.subr.mxu0 0.0
      %2614 = vmatpush1.msra.mxu0 0.0
      %2615 = vmatprep.subr.mxu0 0.0
      %2616 = vmatpush1.msra.mxu0 0.0
      %2617 = vmatprep.subr.mxu0 0.0
      %2618 = vmatpush1.msra.mxu0 0.0
      %2619 = vmatprep.subr.mxu0 0.0
      %2620 = vmatpush1.msra.mxu0 0.0
      %2621 = vmatprep.subr.mxu0 0.0
      %2622 = vmatpush1.msra.mxu0 0.0
      %2623 = vmatprep.subr.mxu0 0.0
      %2624 = vmatpush1.msra.mxu0 0.0
      %2625 = vmatprep.subr.mxu0 0.0
      %2626 = vmatpush1.msra.mxu0 0.0
      %2627 = vmatprep.subr.mxu0 0.0
      %2628 = vmatpush1.msra.mxu0 0.0
      %2629 = vmatprep.subr.mxu0 0.0
      %2630 = vmatpush1.msra.mxu0 0.0
      %2631 = vmatprep.subr.mxu0 0.0
      %2632 = vmatpush1.msra.mxu0 0.0
      %2633 = vmatprep.subr.mxu0 0.0
      %2634 = vmatpush1.msra.mxu0 0.0
      %2635 = vmatprep.subr.mxu0 0.0
      %2636 = vmatpush1.msra.mxu0 0.0
      %2637 = vmatprep.subr.mxu0 0.0
      %2638 = vmatpush1.msra.mxu0 0.0
      %2639 = vmatprep.subr.mxu0 0.0
      %2640 = vmatpush1.msra.mxu0 0.0
      %2641 = vmatprep.subr.mxu0 0.0
      %2642 = vmatpush1.msra.mxu0 0.0
      %2643 = vmatprep.subr.mxu0 0.0
      %2644 = vmatpush1.msra.mxu0 0.0
      %2645 = vmatprep.subr.mxu0 0.0
      %2646 = vmatpush1.msra.mxu0 0.0
      %2647 = vmatprep.subr.mxu0 0.0
      %2648 = vmatpush1.msra.mxu0 0.0
      %2649 = vmatprep.subr.mxu0 0.0
      %2650 = vmatpush1.msra.mxu0 0.0
      %2651 = vmatprep.mubr.f32.mxu0 0.0
      %2652 = vmatmul.mubr.f32.gmra.mrb[0].mxu0 %v2576
      %v2653 = vpop.f32.mrb[0].mxu0
      %v2654 = vadd.f32 0.0, %v2653
      %v2655 = vpop.f32.mrb[0].mxu0
      %2656 = vmatprep.mubr.f32.mxu0 0.0
      %2657 = vmatmul.mubr.f32.gmra.mrb[0].mxu0 %v2579
      %v2658 = vpop.f32.mrb[0].mxu0
      %v2659 = vadd.f32 0.0, %v2658
      %v2660 = vpop.f32.mrb[0].mxu0
      %2661 = vmatprep.mubr.f32.mxu0 0.0
      %2662 = vmatmul.mubr.f32.gmra.mrb[0].mxu0 %v2582
      %v2663 = vpop.f32.mrb[0].mxu0
      %v2664 = vadd.f32 0.0, %v2663
      %v2665 = vpop.f32.mrb[0].mxu0
      %2666 = vmatprep.mubr.f32.mxu0 0.0
      %2667 = vmatmul.mubr.f32.gmra.mrb[0].mxu0 %v2585
      %v2668 = vpop.f32.mrb[0].mxu0
      %v2669 = vadd.f32 0.0, %v2668
      %v2670 = vpop.f32.mrb[0].mxu0
      %2671 = vdwg.mxu0
      %v2672 = vadd.f32 %v2558, %v2654
      %v2673 = vadd.f32 %v2559, %v2659
      %v2674 = vadd.f32 %v2560, %v2664
      %v2675 = vadd.f32 %v2561, %v2669
      %s2676 = scalar_lea.vmem [#allocation3], 4
      %v2677 = vld [vmem:[%s2676] ss:$3 sm:$0xff]
      %s2678 = scalar_lea.vmem [#allocation3], 28
      %v2679 = vld [vmem:[%s2678] ss:$3 sm:$0xff]
      %s2680 = scalar_lea.vmem [#allocation3], 52
      %v2681 = vld [vmem:[%s2680] ss:$3 sm:$0xff]
      %s2682 = scalar_lea.vmem [#allocation3], 76
      %v2683 = vld [vmem:[%s2682] ss:$3 sm:$0x7]
      %s2684 = scalar_lea.vmem %s5, 128
      %v2685 = vld [vmem:[%s2684] sm:$0xff]
      %v2686 = vld [vmem:[%s2684 + $0x8] sm:$0xff]
      %v2687 = vld [vmem:[%s2684 + $0x10] sm:$0xff]
      %v2688 = vld [vmem:[%s2684 + $0x18] sm:$0xff]
      %v2690 = vsel %vm335, %v2677, 0
      %v2693 = vsel %vm335, %v2679, 0
      %v2696 = vsel %vm335, %v2681, 0
      %v2699 = vsel %vm335, %v2683, 0
      %2701 = vmatprep.subr.mxu0 0.0
      %2702 = vmatpush1.msra.mxu0 %v2685
      %2703 = vmatprep.subr.mxu0 0.0
      %2704 = vmatpush1.msra.mxu0 %v2686
      %2705 = vmatprep.subr.mxu0 0.0
      %2706 = vmatpush1.msra.mxu0 %v2687
      %2707 = vmatprep.subr.mxu0 0.0
      %2708 = vmatpush1.msra.mxu0 %v2688
      %2709 = vmatprep.subr.mxu0 0.0
      %2710 = vmatpush1.msra.mxu0 0.0
      %2711 = vmatprep.subr.mxu0 0.0
      %2712 = vmatpush1.msra.mxu0 0.0
      %2713 = vmatprep.subr.mxu0 0.0
      %2714 = vmatpush1.msra.mxu0 0.0
      %2715 = vmatprep.subr.mxu0 0.0
      %2716 = vmatpush1.msra.mxu0 0.0
      %2717 = vmatprep.subr.mxu0 0.0
      %2718 = vmatpush1.msra.mxu0 0.0
      %2719 = vmatprep.subr.mxu0 0.0
      %2720 = vmatpush1.msra.mxu0 0.0
      %2721 = vmatprep.subr.mxu0 0.0
      %2722 = vmatpush1.msra.mxu0 0.0
      %2723 = vmatprep.subr.mxu0 0.0
      %2724 = vmatpush1.msra.mxu0 0.0
      %2725 = vmatprep.subr.mxu0 0.0
      %2726 = vmatpush1.msra.mxu0 0.0
      %2727 = vmatprep.subr.mxu0 0.0
      %2728 = vmatpush1.msra.mxu0 0.0
      %2729 = vmatprep.subr.mxu0 0.0
      %2730 = vmatpush1.msra.mxu0 0.0
      %2731 = vmatprep.subr.mxu0 0.0
      %2732 = vmatpush1.msra.mxu0 0.0
      %2733 = vmatprep.subr.mxu0 0.0
      %2734 = vmatpush1.msra.mxu0 0.0
      %2735 = vmatprep.subr.mxu0 0.0
      %2736 = vmatpush1.msra.mxu0 0.0
      %2737 = vmatprep.subr.mxu0 0.0
      %2738 = vmatpush1.msra.mxu0 0.0
      %2739 = vmatprep.subr.mxu0 0.0
      %2740 = vmatpush1.msra.mxu0 0.0
      %2741 = vmatprep.subr.mxu0 0.0
      %2742 = vmatpush1.msra.mxu0 0.0
      %2743 = vmatprep.subr.mxu0 0.0
      %2744 = vmatpush1.msra.mxu0 0.0
      %2745 = vmatprep.subr.mxu0 0.0
      %2746 = vmatpush1.msra.mxu0 0.0
      %2747 = vmatprep.subr.mxu0 0.0
      %2748 = vmatpush1.msra.mxu0 0.0
      %2749 = vmatprep.subr.mxu0 0.0
      %2750 = vmatpush1.msra.mxu0 0.0
      %2751 = vmatprep.subr.mxu0 0.0
      %2752 = vmatpush1.msra.mxu0 0.0
      %2753 = vmatprep.subr.mxu0 0.0
      %2754 = vmatpush1.msra.mxu0 0.0
      %2755 = vmatprep.subr.mxu0 0.0
      %2756 = vmatpush1.msra.mxu0 0.0
      %2757 = vmatprep.subr.mxu0 0.0
      %2758 = vmatpush1.msra.mxu0 0.0
      %2759 = vmatprep.subr.mxu0 0.0
      %2760 = vmatpush1.msra.mxu0 0.0
      %2761 = vmatprep.subr.mxu0 0.0
      %2762 = vmatpush1.msra.mxu0 0.0
      %2763 = vmatprep.subr.mxu0 0.0
      %2764 = vmatpush1.msra.mxu0 0.0
      %2765 = vmatprep.mubr.f32.mxu0 0.0
      %2766 = vmatmul.mubr.f32.gmra.mrb[0].mxu0 %v2690
      %v2767 = vpop.f32.mrb[0].mxu0
      %v2768 = vadd.f32 0.0, %v2767
      %v2769 = vpop.f32.mrb[0].mxu0
      %2770 = vmatprep.mubr.f32.mxu0 0.0
      %2771 = vmatmul.mubr.f32.gmra.mrb[0].mxu0 %v2693
      %v2772 = vpop.f32.mrb[0].mxu0
      %v2773 = vadd.f32 0.0, %v2772
      %v2774 = vpop.f32.mrb[0].mxu0
      %2775 = vmatprep.mubr.f32.mxu0 0.0
      %2776 = vmatmul.mubr.f32.gmra.mrb[0].mxu0 %v2696
      %v2777 = vpop.f32.mrb[0].mxu0
      %v2778 = vadd.f32 0.0, %v2777
      %v2779 = vpop.f32.mrb[0].mxu0
      %2780 = vmatprep.mubr.f32.mxu0 0.0
      %2781 = vmatmul.mubr.f32.gmra.mrb[0].mxu0 %v2699
      %v2782 = vpop.f32.mrb[0].mxu0
      %v2783 = vadd.f32 0.0, %v2782
      %v2784 = vpop.f32.mrb[0].mxu0
      %2785 = vdwg.mxu0
      %v2786 = vadd.f32 %v2672, %v2768
      %v2787 = vadd.f32 %v2673, %v2773
      %v2788 = vadd.f32 %v2674, %v2778
      %v2789 = vadd.f32 %v2675, %v2783
      %vm2790 = vcmp.gt.f32.partialorder %v2786, 0.0
      %vm2791 = vcmp.gt.f32.partialorder %v2787, 0.0
      %vm2792 = vcmp.gt.f32.partialorder %v2788, 0.0
      %vm2793 = vcmp.gt.f32.partialorder %v2789, 0.0
      %v2794 = vmul.f32 %v2786, 0.1
      %v2795 = vmul.f32 %v2787, 0.1
      %v2796 = vmul.f32 %v2788, 0.1
      %v2797 = vmul.f32 %v2789, 0.1
      %v2798 = vsel %vm2790, %v2786, %v2794
      %v2799 = vsel %vm2791, %v2787, %v2795
      %v2800 = vsel %vm2792, %v2788, %v2796
      %v2801 = vsel %vm2793, %v2789, %v2797
      %v2802 = vmul.f32 %v821, 0.11111111
      %v2803 = vmul.f32 %v822, 0.11111111
      %v2804 = vmul.f32 %v823, 0.11111111
      %v2805 = vmul.f32 %v824, 0.11111111
      %v2806 = vfloor.f32 %v2802
      %v2807 = vfloor.f32 %v2803
      %v2808 = vfloor.f32 %v2804
      %v2809 = vfloor.f32 %v2805
      %v2810 = vmul.f32 %v2806, 9.0
      %v2811 = vmul.f32 %v2807, 9.0
      %v2812 = vmul.f32 %v2808, 9.0
      %v2813 = vmul.f32 %v2809, 9.0
      %v2814 = vsub.f32 %v821, %v2810
      %v2815 = vsub.f32 %v822, %v2811
      %v2816 = vsub.f32 %v823, %v2812
      %v2817 = vsub.f32 %v824, %v2813
      %vm2818 = vcmp.ge.f32.partialorder %v2814, 2.0
      %vm2819 = vcmp.ge.f32.partialorder %v2815, 2.0
      %vm2820 = vcmp.ge.f32.partialorder %v2816, 2.0
      %vm2821 = vcmp.ge.f32.partialorder %v2817, 2.0
      %vm2822 = vcmp.lt.f32.partialorder %v2814, 6.0
      %vm2823 = vcmp.lt.f32.partialorder %v2815, 6.0
      %vm2824 = vcmp.lt.f32.partialorder %v2816, 6.0
      %vm2825 = vcmp.lt.f32.partialorder %v2817, 6.0
      %vm2826 = vmand %vm2818, %vm2822
      %vm2827 = vmand %vm2819, %vm2823
      %vm2828 = vmand %vm2820, %vm2824
      %vm2829 = vmand %vm2821, %vm2825
      %v2830 = vsel %vm2826, %v2798, 0.0
      %v2831 = vsel %vm2827, %v2799, 0.0
      %v2832 = vsel %vm2828, %v2800, 0.0
      %v2833 = vsel %vm2829, %v2801, 0.0
      %2834 = vst.msk [vmem:[#allocation4] sm:$0xff] %vm337, %v2830
      %2835 = vst.msk [vmem:[#allocation4 + $0x8] sm:$0xff] %vm337, %v2831
      %2836 = vst.msk [vmem:[#allocation4 + $0x10] sm:$0xff] %vm337, %v2832
      %vm2837 = vcmask 518144
      %2838 = vst.msk [vmem:[#allocation4 + $0x18] sm:$0x7] %vm2837, %v2833
      %v2839 = vld [vmem:[%s8] sm:$0x1]
      %v2841 = vlaneseq
      %v2842 = vshrl.u32 %v2841, 7
      %v2843 = vsub.s32 0, %v2842
      %v2844 = vrot.slane %v2839, %v2843
      %v2846 = vld [vmem:[#allocation4] ss:$3 sm:$0xff]
      %s2847 = scalar_lea.vmem [#allocation4], 24
      %v2848 = vld [vmem:[%s2847] ss:$3 sm:$0x1]
      %v2849 = vld [vmem:[%s7] sm:$0xff]
      %v2850 = vld [vmem:[%s7 + $0x8] sm:$0xff]
      %v2851 = vld [vmem:[%s7 + $0x10] sm:$0xff]
      %v2852 = vld [vmem:[%s7 + $0x18] sm:$0xff]
      %v2853 = vld [vmem:[%s7 + $0x20] sm:$0xff]
      %v2854 = vld [vmem:[%s7 + $0x28] sm:$0xff]
      %v2855 = vld [vmem:[%s7 + $0x30] sm:$0xff]
      %v2856 = vld [vmem:[%s7 + $0x38] sm:$0xff]
      %v2858 = vsel %vm337, %v2846, 0
      %v2861 = vsel %vm337, %v2848, 0
      %2863 = vmatprep.subr.mxu0 0.0
      %2864 = vmatpush1.msra.mxu0 %v2849
      %2865 = vmatprep.subr.mxu0 0.0
      %2866 = vmatpush1.msra.mxu0 %v2850
      %2867 = vmatprep.subr.mxu0 0.0
      %2868 = vmatpush1.msra.mxu0 %v2851
      %2869 = vmatprep.subr.mxu0 0.0
      %2870 = vmatpush1.msra.mxu0 %v2852
      %2871 = vmatprep.subr.mxu0 0.0
      %2872 = vmatpush1.msra.mxu0 %v2853
      %2873 = vmatprep.subr.mxu0 0.0
      %2874 = vmatpush1.msra.mxu0 %v2854
      %2875 = vmatprep.subr.mxu0 0.0
      %2876 = vmatpush1.msra.mxu0 %v2855
      %2877 = vmatprep.subr.mxu0 0.0
      %2878 = vmatpush1.msra.mxu0 %v2856
      %2879 = vmatprep.subr.mxu0 0.0
      %2880 = vmatpush1.msra.mxu0 0.0
      %2881 = vmatprep.subr.mxu0 0.0
      %2882 = vmatpush1.msra.mxu0 0.0
      %2883 = vmatprep.subr.mxu0 0.0
      %2884 = vmatpush1.msra.mxu0 0.0
      %2885 = vmatprep.subr.mxu0 0.0
      %2886 = vmatpush1.msra.mxu0 0.0
      %2887 = vmatprep.subr.mxu0 0.0
      %2888 = vmatpush1.msra.mxu0 0.0
      %2889 = vmatprep.subr.mxu0 0.0
      %2890 = vmatpush1.msra.mxu0 0.0
      %2891 = vmatprep.subr.mxu0 0.0
      %2892 = vmatpush1.msra.mxu0 0.0
      %2893 = vmatprep.subr.mxu0 0.0
      %2894 = vmatpush1.msra.mxu0 0.0
      %2895 = vmatprep.subr.mxu0 0.0
      %2896 = vmatpush1.msra.mxu0 0.0
      %2897 = vmatprep.subr.mxu0 0.0
      %2898 = vmatpush1.msra.mxu0 0.0
      %2899 = vmatprep.subr.mxu0 0.0
      %2900 = vmatpush1.msra.mxu0 0.0
      %2901 = vmatprep.subr.mxu0 0.0
      %2902 = vmatpush1.msra.mxu0 0.0
      %2903 = vmatprep.subr.mxu0 0.0
      %2904 = vmatpush1.msra.mxu0 0.0
      %2905 = vmatprep.subr.mxu0 0.0
      %2906 = vmatpush1.msra.mxu0 0.0
      %2907 = vmatprep.subr.mxu0 0.0
      %2908 = vmatpush1.msra.mxu0 0.0
      %2909 = vmatprep.subr.mxu0 0.0
      %2910 = vmatpush1.msra.mxu0 0.0
      %2911 = vmatprep.subr.mxu0 0.0
      %2912 = vmatpush1.msra.mxu0 0.0
      %2913 = vmatprep.subr.mxu0 0.0
      %2914 = vmatpush1.msra.mxu0 0.0
      %2915 = vmatprep.subr.mxu0 0.0
      %2916 = vmatpush1.msra.mxu0 0.0
      %2917 = vmatprep.subr.mxu0 0.0
      %2918 = vmatpush1.msra.mxu0 0.0
      %2919 = vmatprep.subr.mxu0 0.0
      %2920 = vmatpush1.msra.mxu0 0.0
      %2921 = vmatprep.subr.mxu0 0.0
      %2922 = vmatpush1.msra.mxu0 0.0
      %2923 = vmatprep.subr.mxu0 0.0
      %2924 = vmatpush1.msra.mxu0 0.0
      %2925 = vmatprep.subr.mxu0 0.0
      %2926 = vmatpush1.msra.mxu0 0.0
      %2927 = vmatprep.mubr.f32.mxu0 0.0
      %2928 = vmatmul.mubr.f32.gmra.mrb[0].mxu0 %v2858
      %v2929 = vpop.f32.mrb[0].mxu0
      %v2930 = vadd.f32 0.0, %v2929
      %v2931 = vpop.f32.mrb[0].mxu0
      %2932 = vmatprep.mubr.f32.mxu0 0.0
      %2933 = vmatmul.mubr.f32.gmra.mrb[0].mxu0 %v2861
      %v2934 = vpop.f32.mrb[0].mxu0
      %v2935 = vadd.f32 0.0, %v2934
      %v2936 = vpop.f32.mrb[0].mxu0
      %2937 = vdwg.mxu0
      %v2938 = vadd.f32 %v2844, %v2930
      %v2939 = vadd.f32 %v2844, %v2935
      %s2940 = scalar_lea.vmem [#allocation4], 1
      %v2941 = vld [vmem:[%s2940] ss:$3 sm:$0xff]
      %s2942 = scalar_lea.vmem [#allocation4], 25
      %v2943 = vld [vmem:[%s2942] ss:$3 sm:$0x1]
      %s2944 = scalar_lea.vmem %s7, 64
      %v2945 = vld [vmem:[%s2944] sm:$0xff]
      %v2946 = vld [vmem:[%s2944 + $0x8] sm:$0xff]
      %v2947 = vld [vmem:[%s2944 + $0x10] sm:$0xff]
      %v2948 = vld [vmem:[%s2944 + $0x18] sm:$0xff]
      %v2949 = vld [vmem:[%s2944 + $0x20] sm:$0xff]
      %v2950 = vld [vmem:[%s2944 + $0x28] sm:$0xff]
      %v2951 = vld [vmem:[%s2944 + $0x30] sm:$0xff]
      %v2952 = vld [vmem:[%s2944 + $0x38] sm:$0xff]
      %v2954 = vsel %vm337, %v2941, 0
      %v2957 = vsel %vm337, %v2943, 0
      %2959 = vmatprep.subr.mxu0 0.0
      %2960 = vmatpush1.msra.mxu0 %v2945
      %2961 = vmatprep.subr.mxu0 0.0
      %2962 = vmatpush1.msra.mxu0 %v2946
      %2963 = vmatprep.subr.mxu0 0.0
      %2964 = vmatpush1.msra.mxu0 %v2947
      %2965 = vmatprep.subr.mxu0 0.0
      %2966 = vmatpush1.msra.mxu0 %v2948
      %2967 = vmatprep.subr.mxu0 0.0
      %2968 = vmatpush1.msra.mxu0 %v2949
      %2969 = vmatprep.subr.mxu0 0.0
      %2970 = vmatpush1.msra.mxu0 %v2950
      %2971 = vmatprep.subr.mxu0 0.0
      %2972 = vmatpush1.msra.mxu0 %v2951
      %2973 = vmatprep.subr.mxu0 0.0
      %2974 = vmatpush1.msra.mxu0 %v2952
      %2975 = vmatprep.subr.mxu0 0.0
      %2976 = vmatpush1.msra.mxu0 0.0
      %2977 = vmatprep.subr.mxu0 0.0
      %2978 = vmatpush1.msra.mxu0 0.0
      %2979 = vmatprep.subr.mxu0 0.0
      %2980 = vmatpush1.msra.mxu0 0.0
      %2981 = vmatprep.subr.mxu0 0.0
      %2982 = vmatpush1.msra.mxu0 0.0
      %2983 = vmatprep.subr.mxu0 0.0
      %2984 = vmatpush1.msra.mxu0 0.0
      %2985 = vmatprep.subr.mxu0 0.0
      %2986 = vmatpush1.msra.mxu0 0.0
      %2987 = vmatprep.subr.mxu0 0.0
      %2988 = vmatpush1.msra.mxu0 0.0
      %2989 = vmatprep.subr.mxu0 0.0
      %2990 = vmatpush1.msra.mxu0 0.0
      %2991 = vmatprep.subr.mxu0 0.0
      %2992 = vmatpush1.msra.mxu0 0.0
      %2993 = vmatprep.subr.mxu0 0.0
      %2994 = vmatpush1.msra.mxu0 0.0
      %2995 = vmatprep.subr.mxu0 0.0
      %2996 = vmatpush1.msra.mxu0 0.0
      %2997 = vmatprep.subr.mxu0 0.0
      %2998 = vmatpush1.msra.mxu0 0.0
      %2999 = vmatprep.subr.mxu0 0.0
      %3000 = vmatpush1.msra.mxu0 0.0
      %3001 = vmatprep.subr.mxu0 0.0
      %3002 = vmatpush1.msra.mxu0 0.0
      %3003 = vmatprep.subr.mxu0 0.0
      %3004 = vmatpush1.msra.mxu0 0.0
      %3005 = vmatprep.subr.mxu0 0.0
      %3006 = vmatpush1.msra.mxu0 0.0
      %3007 = vmatprep.subr.mxu0 0.0
      %3008 = vmatpush1.msra.mxu0 0.0
      %3009 = vmatprep.subr.mxu0 0.0
      %3010 = vmatpush1.msra.mxu0 0.0
      %3011 = vmatprep.subr.mxu0 0.0
      %3012 = vmatpush1.msra.mxu0 0.0
      %3013 = vmatprep.subr.mxu0 0.0
      %3014 = vmatpush1.msra.mxu0 0.0
      %3015 = vmatprep.subr.mxu0 0.0
      %3016 = vmatpush1.msra.mxu0 0.0
      %3017 = vmatprep.subr.mxu0 0.0
      %3018 = vmatpush1.msra.mxu0 0.0
      %3019 = vmatprep.subr.mxu0 0.0
      %3020 = vmatpush1.msra.mxu0 0.0
      %3021 = vmatprep.subr.mxu0 0.0
      %3022 = vmatpush1.msra.mxu0 0.0
      %3023 = vmatprep.mubr.f32.mxu0 0.0
      %3024 = vmatmul.mubr.f32.gmra.mrb[0].mxu0 %v2954
      %v3025 = vpop.f32.mrb[0].mxu0
      %v3026 = vadd.f32 0.0, %v3025
      %v3027 = vpop.f32.mrb[0].mxu0
      %3028 = vmatprep.mubr.f32.mxu0 0.0
      %3029 = vmatmul.mubr.f32.gmra.mrb[0].mxu0 %v2957
      %v3030 = vpop.f32.mrb[0].mxu0
      %v3031 = vadd.f32 0.0, %v3030
      %v3032 = vpop.f32.mrb[0].mxu0
      %3033 = vdwg.mxu0
      %v3034 = vadd.f32 %v2938, %v3026
      %v3035 = vadd.f32 %v2939, %v3031
      %s3036 = scalar_lea.vmem [#allocation4], 2
      %v3037 = vld [vmem:[%s3036] ss:$3 sm:$0xff]
      %s3038 = scalar_lea.vmem [#allocation4], 26
      %v3039 = vld [vmem:[%s3038] ss:$3 sm:$0x1]
      %s3040 = scalar_lea.vmem %s7, 128
      %v3041 = vld [vmem:[%s3040] sm:$0xff]
      %v3042 = vld [vmem:[%s3040 + $0x8] sm:$0xff]
      %v3043 = vld [vmem:[%s3040 + $0x10] sm:$0xff]
      %v3044 = vld [vmem:[%s3040 + $0x18] sm:$0xff]
      %v3045 = vld [vmem:[%s3040 + $0x20] sm:$0xff]
      %v3046 = vld [vmem:[%s3040 + $0x28] sm:$0xff]
      %v3047 = vld [vmem:[%s3040 + $0x30] sm:$0xff]
      %v3048 = vld [vmem:[%s3040 + $0x38] sm:$0xff]
      %v3050 = vsel %vm337, %v3037, 0
      %v3053 = vsel %vm337, %v3039, 0
      %3055 = vmatprep.subr.mxu0 0.0
      %3056 = vmatpush1.msra.mxu0 %v3041
      %3057 = vmatprep.subr.mxu0 0.0
      %3058 = vmatpush1.msra.mxu0 %v3042
      %3059 = vmatprep.subr.mxu0 0.0
      %3060 = vmatpush1.msra.mxu0 %v3043
      %3061 = vmatprep.subr.mxu0 0.0
      %3062 = vmatpush1.msra.mxu0 %v3044
      %3063 = vmatprep.subr.mxu0 0.0
      %3064 = vmatpush1.msra.mxu0 %v3045
      %3065 = vmatprep.subr.mxu0 0.0
      %3066 = vmatpush1.msra.mxu0 %v3046
      %3067 = vmatprep.subr.mxu0 0.0
      %3068 = vmatpush1.msra.mxu0 %v3047
      %3069 = vmatprep.subr.mxu0 0.0
      %3070 = vmatpush1.msra.mxu0 %v3048
      %3071 = vmatprep.subr.mxu0 0.0
      %3072 = vmatpush1.msra.mxu0 0.0
      %3073 = vmatprep.subr.mxu0 0.0
      %3074 = vmatpush1.msra.mxu0 0.0
      %3075 = vmatprep.subr.mxu0 0.0
      %3076 = vmatpush1.msra.mxu0 0.0
      %3077 = vmatprep.subr.mxu0 0.0
      %3078 = vmatpush1.msra.mxu0 0.0
      %3079 = vmatprep.subr.mxu0 0.0
      %3080 = vmatpush1.msra.mxu0 0.0
      %3081 = vmatprep.subr.mxu0 0.0
      %3082 = vmatpush1.msra.mxu0 0.0
      %3083 = vmatprep.subr.mxu0 0.0
      %3084 = vmatpush1.msra.mxu0 0.0
      %3085 = vmatprep.subr.mxu0 0.0
      %3086 = vmatpush1.msra.mxu0 0.0
      %3087 = vmatprep.subr.mxu0 0.0
      %3088 = vmatpush1.msra.mxu0 0.0
      %3089 = vmatprep.subr.mxu0 0.0
      %3090 = vmatpush1.msra.mxu0 0.0
      %3091 = vmatprep.subr.mxu0 0.0
      %3092 = vmatpush1.msra.mxu0 0.0
      %3093 = vmatprep.subr.mxu0 0.0
      %3094 = vmatpush1.msra.mxu0 0.0
      %3095 = vmatprep.subr.mxu0 0.0
      %3096 = vmatpush1.msra.mxu0 0.0
      %3097 = vmatprep.subr.mxu0 0.0
      %3098 = vmatpush1.msra.mxu0 0.0
      %3099 = vmatprep.subr.mxu0 0.0
      %3100 = vmatpush1.msra.mxu0 0.0
      %3101 = vmatprep.subr.mxu0 0.0
      %3102 = vmatpush1.msra.mxu0 0.0
      %3103 = vmatprep.subr.mxu0 0.0
      %3104 = vmatpush1.msra.mxu0 0.0
      %3105 = vmatprep.subr.mxu0 0.0
      %3106 = vmatpush1.msra.mxu0 0.0
      %3107 = vmatprep.subr.mxu0 0.0
      %3108 = vmatpush1.msra.mxu0 0.0
      %3109 = vmatprep.subr.mxu0 0.0
      %3110 = vmatpush1.msra.mxu0 0.0
      %3111 = vmatprep.subr.mxu0 0.0
      %3112 = vmatpush1.msra.mxu0 0.0
      %3113 = vmatprep.subr.mxu0 0.0
      %3114 = vmatpush1.msra.mxu0 0.0
      %3115 = vmatprep.subr.mxu0 0.0
      %3116 = vmatpush1.msra.mxu0 0.0
      %3117 = vmatprep.subr.mxu0 0.0
      %3118 = vmatpush1.msra.mxu0 0.0
      %3119 = vmatprep.mubr.f32.mxu0 0.0
      %3120 = vmatmul.mubr.f32.gmra.mrb[0].mxu0 %v3050
      %v3121 = vpop.f32.mrb[0].mxu0
      %v3122 = vadd.f32 0.0, %v3121
      %v3123 = vpop.f32.mrb[0].mxu0
      %3124 = vmatprep.mubr.f32.mxu0 0.0
      %3125 = vmatmul.mubr.f32.gmra.mrb[0].mxu0 %v3053
      %v3126 = vpop.f32.mrb[0].mxu0
      %v3127 = vadd.f32 0.0, %v3126
      %v3128 = vpop.f32.mrb[0].mxu0
      %3129 = vdwg.mxu0
      %v3130 = vadd.f32 %v3034, %v3122
      %v3131 = vadd.f32 %v3035, %v3127
      %s3132 = scalar_lea.vmem [#allocation4], 3
      %v3133 = vld [vmem:[%s3132] ss:$3 sm:$0xff]
      %s3134 = scalar_lea.vmem [#allocation4], 27
      %v3135 = vld [vmem:[%s3134] ss:$3 sm:$0x1]
      %s3136 = scalar_lea.vmem %s7, 192
      %v3137 = vld [vmem:[%s3136] sm:$0xff]
      %v3138 = vld [vmem:[%s3136 + $0x8] sm:$0xff]
      %v3139 = vld [vmem:[%s3136 + $0x10] sm:$0xff]
      %v3140 = vld [vmem:[%s3136 + $0x18] sm:$0xff]
      %v3141 = vld [vmem:[%s3136 + $0x20] sm:$0xff]
      %v3142 = vld [vmem:[%s3136 + $0x28] sm:$0xff]
      %v3143 = vld [vmem:[%s3136 + $0x30] sm:$0xff]
      %v3144 = vld [vmem:[%s3136 + $0x38] sm:$0xff]
      %v3146 = vsel %vm337, %v3133, 0
      %v3149 = vsel %vm337, %v3135, 0
      %3151 = vmatprep.subr.mxu0 0.0
      %3152 = vmatpush1.msra.mxu0 %v3137
      %3153 = vmatprep.subr.mxu0 0.0
      %3154 = vmatpush1.msra.mxu0 %v3138
      %3155 = vmatprep.subr.mxu0 0.0
      %3156 = vmatpush1.msra.mxu0 %v3139
      %3157 = vmatprep.subr.mxu0 0.0
      %3158 = vmatpush1.msra.mxu0 %v3140
      %3159 = vmatprep.subr.mxu0 0.0
      %3160 = vmatpush1.msra.mxu0 %v3141
      %3161 = vmatprep.subr.mxu0 0.0
      %3162 = vmatpush1.msra.mxu0 %v3142
      %3163 = vmatprep.subr.mxu0 0.0
      %3164 = vmatpush1.msra.mxu0 %v3143
      %3165 = vmatprep.subr.mxu0 0.0
      %3166 = vmatpush1.msra.mxu0 %v3144
      %3167 = vmatprep.subr.mxu0 0.0
      %3168 = vmatpush1.msra.mxu0 0.0
      %3169 = vmatprep.subr.mxu0 0.0
      %3170 = vmatpush1.msra.mxu0 0.0
      %3171 = vmatprep.subr.mxu0 0.0
      %3172 = vmatpush1.msra.mxu0 0.0
      %3173 = vmatprep.subr.mxu0 0.0
      %3174 = vmatpush1.msra.mxu0 0.0
      %3175 = vmatprep.subr.mxu0 0.0
      %3176 = vmatpush1.msra.mxu0 0.0
      %3177 = vmatprep.subr.mxu0 0.0
      %3178 = vmatpush1.msra.mxu0 0.0
      %3179 = vmatprep.subr.mxu0 0.0
      %3180 = vmatpush1.msra.mxu0 0.0
      %3181 = vmatprep.subr.mxu0 0.0
      %3182 = vmatpush1.msra.mxu0 0.0
      %3183 = vmatprep.subr.mxu0 0.0
      %3184 = vmatpush1.msra.mxu0 0.0
      %3185 = vmatprep.subr.mxu0 0.0
      %3186 = vmatpush1.msra.mxu0 0.0
      %3187 = vmatprep.subr.mxu0 0.0
      %3188 = vmatpush1.msra.mxu0 0.0
      %3189 = vmatprep.subr.mxu0 0.0
      %3190 = vmatpush1.msra.mxu0 0.0
      %3191 = vmatprep.subr.mxu0 0.0
      %3192 = vmatpush1.msra.mxu0 0.0
      %3193 = vmatprep.subr.mxu0 0.0
      %3194 = vmatpush1.msra.mxu0 0.0
      %3195 = vmatprep.subr.mxu0 0.0
      %3196 = vmatpush1.msra.mxu0 0.0
      %3197 = vmatprep.subr.mxu0 0.0
      %3198 = vmatpush1.msra.mxu0 0.0
      %3199 = vmatprep.subr.mxu0 0.0
      %3200 = vmatpush1.msra.mxu0 0.0
      %3201 = vmatprep.subr.mxu0 0.0
      %3202 = vmatpush1.msra.mxu0 0.0
      %3203 = vmatprep.subr.mxu0 0.0
      %3204 = vmatpush1.msra.mxu0 0.0
      %3205 = vmatprep.subr.mxu0 0.0
      %3206 = vmatpush1.msra.mxu0 0.0
      %3207 = vmatprep.subr.mxu0 0.0
      %3208 = vmatpush1.msra.mxu0 0.0
      %3209 = vmatprep.subr.mxu0 0.0
      %3210 = vmatpush1.msra.mxu0 0.0
      %3211 = vmatprep.subr.mxu0 0.0
      %3212 = vmatpush1.msra.mxu0 0.0
      %3213 = vmatprep.subr.mxu0 0.0
      %3214 = vmatpush1.msra.mxu0 0.0
      %3215 = vmatprep.mubr.f32.mxu0 0.0
      %3216 = vmatmul.mubr.f32.gmra.mrb[0].mxu0 %v3146
      %v3217 = vpop.f32.mrb[0].mxu0
      %v3218 = vadd.f32 0.0, %v3217
      %v3219 = vpop.f32.mrb[0].mxu0
      %3220 = vmatprep.mubr.f32.mxu0 0.0
      %3221 = vmatmul.mubr.f32.gmra.mrb[0].mxu0 %v3149
      %v3222 = vpop.f32.mrb[0].mxu0
      %v3223 = vadd.f32 0.0, %v3222
      %v3224 = vpop.f32.mrb[0].mxu0
      %3225 = vdwg.mxu0
      %v3226 = vadd.f32 %v3130, %v3218
      %v3227 = vadd.f32 %v3131, %v3223
      %s3228 = scalar_lea.vmem [#allocation4], 4
      %v3229 = vld [vmem:[%s3228] ss:$3 sm:$0xff]
      %s3230 = scalar_lea.vmem [#allocation4], 28
      %v3231 = vld [vmem:[%s3230] ss:$3 sm:$0x1]
      %s3232 = scalar_lea.vmem %s7, 256
      %v3233 = vld [vmem:[%s3232] sm:$0xff]
      %v3234 = vld [vmem:[%s3232 + $0x8] sm:$0xff]
      %v3235 = vld [vmem:[%s3232 + $0x10] sm:$0xff]
      %v3236 = vld [vmem:[%s3232 + $0x18] sm:$0xff]
      %v3237 = vld [vmem:[%s3232 + $0x20] sm:$0xff]
      %v3238 = vld [vmem:[%s3232 + $0x28] sm:$0xff]
      %v3239 = vld [vmem:[%s3232 + $0x30] sm:$0xff]
      %v3240 = vld [vmem:[%s3232 + $0x38] sm:$0xff]
      %v3242 = vsel %vm337, %v3229, 0
      %v3245 = vsel %vm337, %v3231, 0
      %3247 = vmatprep.subr.mxu0 0.0
      %3248 = vmatpush1.msra.mxu0 %v3233
      %3249 = vmatprep.subr.mxu0 0.0
      %3250 = vmatpush1.msra.mxu0 %v3234
      %3251 = vmatprep.subr.mxu0 0.0
      %3252 = vmatpush1.msra.mxu0 %v3235
      %3253 = vmatprep.subr.mxu0 0.0
      %3254 = vmatpush1.msra.mxu0 %v3236
      %3255 = vmatprep.subr.mxu0 0.0
      %3256 = vmatpush1.msra.mxu0 %v3237
      %3257 = vmatprep.subr.mxu0 0.0
      %3258 = vmatpush1.msra.mxu0 %v3238
      %3259 = vmatprep.subr.mxu0 0.0
      %3260 = vmatpush1.msra.mxu0 %v3239
      %3261 = vmatprep.subr.mxu0 0.0
      %3262 = vmatpush1.msra.mxu0 %v3240
      %3263 = vmatprep.subr.mxu0 0.0
      %3264 = vmatpush1.msra.mxu0 0.0
      %3265 = vmatprep.subr.mxu0 0.0
      %3266 = vmatpush1.msra.mxu0 0.0
      %3267 = vmatprep.subr.mxu0 0.0
      %3268 = vmatpush1.msra.mxu0 0.0
      %3269 = vmatprep.subr.mxu0 0.0
      %3270 = vmatpush1.msra.mxu0 0.0
      %3271 = vmatprep.subr.mxu0 0.0
      %3272 = vmatpush1.msra.mxu0 0.0
      %3273 = vmatprep.subr.mxu0 0.0
      %3274 = vmatpush1.msra.mxu0 0.0
      %3275 = vmatprep.subr.mxu0 0.0
      %3276 = vmatpush1.msra.mxu0 0.0
      %3277 = vmatprep.subr.mxu0 0.0
      %3278 = vmatpush1.msra.mxu0 0.0
      %3279 = vmatprep.subr.mxu0 0.0
      %3280 = vmatpush1.msra.mxu0 0.0
      %3281 = vmatprep.subr.mxu0 0.0
      %3282 = vmatpush1.msra.mxu0 0.0
      %3283 = vmatprep.subr.mxu0 0.0
      %3284 = vmatpush1.msra.mxu0 0.0
      %3285 = vmatprep.subr.mxu0 0.0
      %3286 = vmatpush1.msra.mxu0 0.0
      %3287 = vmatprep.subr.mxu0 0.0
      %3288 = vmatpush1.msra.mxu0 0.0
      %3289 = vmatprep.subr.mxu0 0.0
      %3290 = vmatpush1.msra.mxu0 0.0
      %3291 = vmatprep.subr.mxu0 0.0
      %3292 = vmatpush1.msra.mxu0 0.0
      %3293 = vmatprep.subr.mxu0 0.0
      %3294 = vmatpush1.msra.mxu0 0.0
      %3295 = vmatprep.subr.mxu0 0.0
      %3296 = vmatpush1.msra.mxu0 0.0
      %3297 = vmatprep.subr.mxu0 0.0
      %3298 = vmatpush1.msra.mxu0 0.0
      %3299 = vmatprep.subr.mxu0 0.0
      %3300 = vmatpush1.msra.mxu0 0.0
      %3301 = vmatprep.subr.mxu0 0.0
      %3302 = vmatpush1.msra.mxu0 0.0
      %3303 = vmatprep.subr.mxu0 0.0
      %3304 = vmatpush1.msra.mxu0 0.0
      %3305 = vmatprep.subr.mxu0 0.0
      %3306 = vmatpush1.msra.mxu0 0.0
      %3307 = vmatprep.subr.mxu0 0.0
      %3308 = vmatpush1.msra.mxu0 0.0
      %3309 = vmatprep.subr.mxu0 0.0
      %3310 = vmatpush1.msra.mxu0 0.0
      %3311 = vmatprep.mubr.f32.mxu0 0.0
      %3312 = vmatmul.mubr.f32.gmra.mrb[0].mxu0 %v3242
      %v3313 = vpop.f32.mrb[0].mxu0
      %v3314 = vadd.f32 0.0, %v3313
      %v3315 = vpop.f32.mrb[0].mxu0
      %3316 = vmatprep.mubr.f32.mxu0 0.0
      %3317 = vmatmul.mubr.f32.gmra.mrb[0].mxu0 %v3245
      %v3318 = vpop.f32.mrb[0].mxu0
      %v3319 = vadd.f32 0.0, %v3318
      %v3320 = vpop.f32.mrb[0].mxu0
      %3321 = vdwg.mxu0
      %v3322 = vadd.f32 %v3226, %v3314
      %v3323 = vadd.f32 %v3227, %v3319
      %vm3324 = vcmp.gt.f32.partialorder %v3322, 0.0
      %vm3325 = vcmp.gt.f32.partialorder %v3323, 0.0
      %v3326 = vmul.f32 %v3322, 0.1
      %v3327 = vmul.f32 %v3323, 0.1
      %v3328 = vsel %vm3324, %v3322, %v3326
      %v3329 = vsel %vm3325, %v3323, %v3327
      %3330 = vst [vmem:[%s332] sm:$0xff] %v3328
      %3331 = vst [vmem:[%s332 + $0x8] sm:$0x1] %v3329
      %p3332 = scmp.lt.s32.totalorder %s20, 1
      %s3333 = scalar_select %p3332, %s20, 1
      %s3334 = smul.addr %s3333, 2
      %s3335 = smul.addr %s3334, 8
      %s3336 = scalar_lea.vmem %s9, %s3335
      // Predicated region
      $region57: #{discriminator_p_pallas.1} parent=55 // pred_check
        %p3337 = pneg %p232
      $region58: #{discriminator_p_pallas.1} parent=55 // pred_check_branch
        %3339 = sbr.rel (%p3337) target = $region60
      $region59: #{discriminator_p_pallas.1} parent=55 // pred_region
        _
      $region60: #{discriminator_p_pallas.1} parent=55 // pred_fallthru
        _
    $region56: #{discriminator_p_pallas.1} parent=5 // pred_fallthru
      _
    %p3340 = scmp.le.s32.totalorder 2, %s15
    // Predicated region
    $region61: #{discriminator_p_pallas.1} parent=5 // pred_check
      %p3341 = pneg %p3340
    $region62: #{discriminator_p_pallas.1} parent=5 // pred_check_branch
      %3343 = sbr.rel (%p3341) target = $region64
    $region63: #{discriminator_p_pallas.1} parent=5 // pred_region
      %s3344 = ssub.s32 %s15, 2
      // Predicated region
      $region65: #{discriminator_p_pallas.1} parent=63 // pred_check
        %p3345 = pneg %p238
      $region66: #{discriminator_p_pallas.1} parent=63 // pred_check_branch
        %3347 = sbr.rel (%p3345) target = $region68
      $region67: #{discriminator_p_pallas.1} parent=63 // pred_region
        %p3348 = scmp.lt.s32.totalorder %s21, 1
        %s3349 = scalar_select %p3348, %s21, 1
        %s3350 = smul.addr %s3349, 2
        %s3351 = smul.addr %s3350, 8
        %s3352 = scalar_lea.vmem %s9, %s3351
      $region68: #{discriminator_p_pallas.1} parent=63 // pred_fallthru
        _
    $region64: #{discriminator_p_pallas.1} parent=5 // pred_fallthru
      _
  $region6: #{discriminator_p_pallas.1} parent=0 // loop_footer
    %s19 = sadd.s32 1, %s15
  $region7: #{discriminator_p_pallas.1} parent=0 // loop_footer_branch
    %14 = sbr.rel target = $region3
  $region8: #{discriminator_p_pallas.1} parent=0 // loop_exit
    _

</llo_original>
